<compile_context>
chip_gen: v7x
topology: tpu7x:2x2x1
jax: 0.10.0
libtpu: 0.0.40
codegen_flags: <defaults>
</compile_context>

<pallas_src>
import functools

import jax
import jax.numpy as jnp
from jax import lax
from jax.experimental import pallas as pl
from jax.experimental.pallas import tpu as pltpu

EPS = 1e-5          # nn.InstanceNorm2d default eps
NEG_SLOPE = 0.01    # nn.LeakyReLU default negative_slope


# ----------------------------------------------------------------------------
# In-kernel helpers
# ----------------------------------------------------------------------------
def _instance_norm(y):
    """Single-pass InstanceNorm over axis 0 of an (M, C) f32 tile."""
    m = y.shape[0]
    inv_m = 1.0 / m
    s = jnp.sum(y, axis=0, keepdims=True)
    ss = jnp.sum(y * y, axis=0, keepdims=True)
    mean = s * inv_m
    var = jnp.maximum(ss * inv_m - mean * mean, 0.0)   # biased var, clamp >= 0
    return (y - mean) * lax.rsqrt(var + EPS)


def _leaky_relu(y):
    return jnp.where(y >= 0, y, NEG_SLOPE * y)


# ----------------------------------------------------------------------------
# Fused kernel: one grid step == one batch element
# ----------------------------------------------------------------------------
def _encoder_block_kernel(*refs, downsample, H, W, Cin, Ch):
    if downsample:
        (p00_ref, p01_ref, p10_ref, p11_ref,
         w1_ref, w2_ref, wd_ref, o_ref, h1pad_ref) = refs
        Ho, Wo = H // 2, W // 2
        phase = {(0, 0): p00_ref, (0, 1): p01_ref,
                 (1, 0): p10_ref, (1, 1): p11_ref}
    else:
        (xpad_ref, w1_ref, w2_ref, o_ref, h1pad_ref) = refs
        Ho, Wo = H, W
    M = Ho * Wo

    # ---- conv1: 3x3 (stride 2 if downsample else 1), pad 1 -----------------
    acc1 = jnp.zeros((M, Ch), jnp.float32)
    for ky in range(3):
        for kx in range(3):
            t = 3 * ky + kx
            if downsample:
                # xpad[2y+ky, 2x+kx]  ==  phase(ky%2, kx%2)[y + ky//2, x + kx//2]
                src = phase[(ky % 2, kx % 2)]
                dy, dx = ky // 2, kx // 2
                tap = src[dy:dy + Ho, dx:dx + Wo, :]
            else:
                tap = xpad_ref[ky:ky + Ho, kx:kx + Wo, :]
            tap2d = tap.reshape(M, Cin)                       # bf16
            acc1 = acc1 + jnp.dot(tap2d, w1_ref[t],
                                  preferred_element_type=jnp.float32)

    h1 = _leaky_relu(_instance_norm(acc1))                    # (M, Ch) f32

    # ---- zero-pad h1 into a VMEM scratch for conv2 (halo of 1) -------------
    h1pad_ref[...] = jnp.zeros_like(h1pad_ref)
    h1pad_ref[1:Ho + 1, 1:Wo + 1, :] = (
        h1.reshape(Ho, Wo, Ch).astype(h1pad_ref.dtype))

    # ---- conv2: 3x3, stride 1, pad 1 ----------------------------------------
    acc2 = jnp.zeros((M, Ch), jnp.float32)
    for ky in range(3):
        for kx in range(3):
            t = 3 * ky + kx
            tap2d = h1pad_ref[ky:ky + Ho, kx:kx + Wo, :].reshape(M, Ch)
            acc2 = acc2 + jnp.dot(tap2d, w2_ref[t],
                                  preferred_element_type=jnp.float32)
    y = _instance_norm(acc2)                                  # (M, Ch) f32

    # ---- identity branch ----------------------------------------------------
    if downsample:
        # 1x1 stride-2 conv reads x[2y, 2x] == xpad[2y+1, 2x+1] == phase(1,1)[y, x]
        id_tap = phase[(1, 1)][0:Ho, 0:Wo, :].reshape(M, Cin)
        ident = jnp.dot(id_tap, wd_ref[...],
                        preferred_element_type=jnp.float32)
        ident = _instance_norm(ident)
    else:
        # identity == x == xpad[1:H+1, 1:W+1]   (requires Cin == Ch)
        ident = xpad_ref[1:1 + H, 1:1 + W, :].reshape(M, Cin).astype(jnp.float32)

    y = _leaky_relu(y + ident)
    o_ref[...] = y.astype(o_ref.dtype)


# ----------------------------------------------------------------------------
# Wrapper (NCHW in / NCHW out, matching the PyTorch module)
# ----------------------------------------------------------------------------
def _flatten_weight(w_oihw):
    """(O, I, 3, 3) -> (9, I, O) bf16, tap index t = 3*ky + kx."""
    o, i, kh, kw = w_oihw.shape
    return jnp.transpose(w_oihw, (2, 3, 1, 0)).reshape(kh * kw, i, o).astype(
        jnp.bfloat16)


@functools.partial(jax.jit, static_argnames=("downsample",))
def encoder_residual_layer(x_nchw, w1_oihw, w2_oihw, wd_oihw, downsample):
    x = jnp.transpose(x_nchw, (0, 2, 3, 1))                   # NCHW -> NHWC
    N, H, W, Cin = x.shape
    Ch = w1_oihw.shape[0]

    w1 = _flatten_weight(w1_oihw)                             # (9, Cin, Ch)
    w2 = _flatten_weight(w2_oihw)                             # (9, Ch, Ch)

    # Halo pad (1 px) once in JAX; cast activations to bf16 to halve DMA.
    xpad = jnp.pad(x, ((0, 0), (1, 1), (1, 1), (0, 0))).astype(jnp.bfloat16)

    if downsample:
        assert H % 2 == 0 and W % 2 == 0, "downsample path assumes even H, W"
        Ho, Wo = H // 2, W // 2
        wd = jnp.transpose(wd_oihw, (2, 3, 1, 0)).reshape(Cin, Ch).astype(
            jnp.bfloat16)
        # Parity phases of the padded input: same total bytes as xpad.
        p00 = xpad[:, 0::2, 0::2, :]                          # (N, Ho+1, Wo+1, Cin)
        p01 = xpad[:, 0::2, 1::2, :]
        p10 = xpad[:, 1::2, 0::2, :]
        p11 = xpad[:, 1::2, 1::2, :]
        args = (p00, p01, p10, p11, w1, w2, wd)
        phase_spec = pl.BlockSpec((None, Ho + 1, Wo + 1, Cin),
                                  lambda b: (b, 0, 0, 0))
        in_specs = [phase_spec] * 4 + [
            pl.BlockSpec((9, Cin, Ch), lambda b: (0, 0, 0)),
            pl.BlockSpec((9, Ch, Ch), lambda b: (0, 0, 0)),
            pl.BlockSpec((Cin, Ch), lambda b: (0, 0)),
        ]
    else:
        assert Cin == Ch, "no-downsample path requires in_channels == hidden_channels"
        Ho, Wo = H, W
        args = (xpad, w1, w2)
        in_specs = [
            pl.BlockSpec((None, H + 2, W + 2, Cin), lambda b: (b, 0, 0, 0)),
            pl.BlockSpec((9, Cin, Ch), lambda b: (0, 0, 0)),
            pl.BlockSpec((9, Ch, Ch), lambda b: (0, 0, 0)),
        ]

    M = Ho * Wo
    kernel = functools.partial(_encoder_block_kernel, downsample=downsample,
                               H=H, W=W, Cin=Cin, Ch=Ch)

    out = pl.pallas_call(
        kernel,
        out_shape=jax.ShapeDtypeStruct((N, M, Ch), jnp.float32),
        grid=(N,),
        in_specs=in_specs,
        out_specs=pl.BlockSpec((None, M, Ch), lambda b: (b, 0, 0)),
        scratch_shapes=[pltpu.VMEM((Ho + 2, Wo + 2, Ch), jnp.bfloat16)],
        compiler_params=pltpu.CompilerParams(
            dimension_semantics=("parallel",)),
    )(*args)

    out_nhwc = out.reshape(N, Ho, Wo, Ch)
    return jnp.transpose(out_nhwc, (0, 3, 1, 2))              # NHWC -> NCHW


# ----------------------------------------------------------------------------
# Pure-JAX f32 reference (mirrors the PyTorch module)
# ----------------------------------------------------------------------------
def _ref_forward(x_nchw, w1, w2, wd, downsample):
    def conv(x, w, stride, pad):
        return lax.conv_general_dilated(
            x, w, (stride, stride), [(pad, pad), (pad, pad)],
            dimension_numbers=("NCHW", "OIHW", "NCHW"),
            precision=lax.Precision.HIGHEST)

    def inorm(x):
        mean = x.mean(axis=(2, 3), keepdims=True)
        var = ((x - mean) ** 2).mean(axis=(2, 3), keepdims=True)
        return (x - mean) * lax.rsqrt(var + EPS)

    def lrelu(x):
        return jnp.where(x >= 0, x, NEG_SLOPE * x)

    s1 = 2 if downsample else 1
    h = lrelu(inorm(conv(x_nchw, w1, s1, 1)))
    h = inorm(conv(h, w2, 1, 1))
    ident = inorm(conv(x_nchw, wd, 2, 0)) if downsample else x_nchw
    return lrelu(h + ident)


# ----------------------------------------------------------------------------
# Main
# ----------------------------------------------------------------------------
if __name__ == "__main__":
    key = jax.random.PRNGKey(0)

    def run_case(downsample, in_channels, hidden_channels, N=2, H=16, W=16):
        k = jax.random.fold_in(key, int(downsample))
        kx_, k1, k2, kd = jax.random.split(k, 4)
        x = jax.random.normal(kx_, (N, in_channels, H, W), jnp.float32)
        w1 = 0.1 * jax.random.normal(
            k1, (hidden_channels, in_channels, 3, 3), jnp.float32)
        w2 = 0.1 * jax.random.normal(
            k2, (hidden_channels, hidden_channels, 3, 3), jnp.float32)
        wd = 0.1 * jax.random.normal(
            kd, (hidden_channels, in_channels, 1, 1), jnp.float32)

        out = encoder_residual_layer(x, w1, w2, wd, downsample)
        out = jax.block_until_ready(out)

        ref = _ref_forward(x, w1, w2, wd, downsample)
        assert out.shape == ref.shape, (out.shape, ref.shape)
        max_err = float(jnp.max(jnp.abs(out - ref)))
        # bf16 matmul operands -> slightly looser tolerance than pure f32.
        assert bool(jnp.allclose(out, ref, atol=5e-2, rtol=5e-2)), (
            f"mismatch (downsample={downsample}), max err={max_err}")
        return out

    # downsample=True: in_channels != hidden_channels, spatial halved (16 -> 8)
    run_case(downsample=True, in_channels=4, hidden_channels=8)
    # downsample=False: residual requires in_channels == hidden_channels
    run_case(downsample=False, in_channels=4, hidden_channels=4)

    print("KERNEL_OK")
</pallas_src>

<mosaic_0001>
module attributes {stable_mosaic.version = 11 : i64} {
  func.func @_encoder_block_kernel(%arg0: i32, %arg1: memref<1x9x9x4xbf16, #tpu.memory_space<vmem>>, %arg2: memref<1x9x9x4xbf16, #tpu.memory_space<vmem>>, %arg3: memref<1x9x9x4xbf16, #tpu.memory_space<vmem>>, %arg4: memref<1x9x9x4xbf16, #tpu.memory_space<vmem>>, %arg5: memref<9x4x8xbf16, #tpu.memory_space<vmem>>, %arg6: memref<9x8x8xbf16, #tpu.memory_space<vmem>>, %arg7: memref<4x8xbf16, #tpu.memory_space<vmem>>, %arg8: memref<1x64x8xf32, #tpu.memory_space<vmem>>, %arg9: memref<10x10x8xbf16, #tpu.memory_space<vmem>>) attributes {dimension_semantics = [#tpu.dimension_semantics<parallel>], iteration_bounds = array<i64: 2>, scalar_prefetch = 0 : i64, scratch_operands = 1 : i64, tpu.core_type = #tpu.core_type<tc>, window_params = [{transform_indices = @transform_0, window_bounds = array<i64: 1, 9, 9, 4>}, {transform_indices = @transform_1, window_bounds = array<i64: 1, 9, 9, 4>}, {transform_indices = @transform_2, window_bounds = array<i64: 1, 9, 9, 4>}, {transform_indices = @transform_3, window_bounds = array<i64: 1, 9, 9, 4>}, {pipeline_mode = #tpu.pipeline_mode<synchronous>, transform_indices = @transform_4, window_bounds = array<i64: 9, 4, 8>}, {pipeline_mode = #tpu.pipeline_mode<synchronous>, transform_indices = @transform_5, window_bounds = array<i64: 9, 8, 8>}, {pipeline_mode = #tpu.pipeline_mode<synchronous>, transform_indices = @transform_6, window_bounds = array<i64: 4, 8>}, {transform_indices = @transform_7, window_bounds = array<i64: 1, 64, 8>}]} {
    %cst = arith.constant 0.000000e+00 : f32
    %0 = vector.broadcast %cst : f32 to vector<64x8xf32>
    %c0 = arith.constant 0 : index
    %c0_0 = arith.constant 0 : index
    %c0_1 = arith.constant 0 : index
    %c0_2 = arith.constant 0 : index
    %1 = vector.load %arg1[%c0, %c0_0, %c0_1, %c0_2] : memref<1x9x9x4xbf16, #tpu.memory_space<vmem>>, vector<1x8x8x4xbf16>
    %2 = vector.shape_cast %1 : vector<1x8x8x4xbf16> to vector<8x8x4xbf16>
    %3 = vector.shape_cast %2 : vector<8x8x4xbf16> to vector<64x4xbf16>
    %c0_3 = arith.constant 0 : index
    %c0_4 = arith.constant 0 : index
    %c0_5 = arith.constant 0 : index
    %4 = vector.load %arg5[%c0_3, %c0_4, %c0_5] : memref<9x4x8xbf16, #tpu.memory_space<vmem>>, vector<1x4x8xbf16>
    %5 = vector.shape_cast %4 : vector<1x4x8xbf16> to vector<4x8xbf16>
    %cst_6 = arith.constant dense<0.000000e+00> : vector<64x8xf32>
    %6 = tpu.matmul %3, %5, %cst_6 {dimension_numbers = #tpu.dot_dimension_numbers<[1], [0], [0], [1], [0, 0, 1, 1], [], []>} : vector<64x4xbf16>, vector<4x8xbf16>, vector<64x8xf32> -> vector<64x8xf32>
    %7 = arith.addf %0, %6 : vector<64x8xf32>
    %c0_7 = arith.constant 0 : index
    %c0_8 = arith.constant 0 : index
    %c0_9 = arith.constant 0 : index
    %c0_10 = arith.constant 0 : index
    %8 = vector.load %arg2[%c0_7, %c0_8, %c0_9, %c0_10] : memref<1x9x9x4xbf16, #tpu.memory_space<vmem>>, vector<1x8x8x4xbf16>
    %9 = vector.shape_cast %8 : vector<1x8x8x4xbf16> to vector<8x8x4xbf16>
    %10 = vector.shape_cast %9 : vector<8x8x4xbf16> to vector<64x4xbf16>
    %c1 = arith.constant 1 : index
    %c0_11 = arith.constant 0 : index
    %c0_12 = arith.constant 0 : index
    %11 = vector.load %arg5[%c1, %c0_11, %c0_12] : memref<9x4x8xbf16, #tpu.memory_space<vmem>>, vector<1x4x8xbf16>
    %12 = vector.shape_cast %11 : vector<1x4x8xbf16> to vector<4x8xbf16>
    %cst_13 = arith.constant dense<0.000000e+00> : vector<64x8xf32>
    %13 = tpu.matmul %10, %12, %cst_13 {dimension_numbers = #tpu.dot_dimension_numbers<[1], [0], [0], [1], [0, 0, 1, 1], [], []>} : vector<64x4xbf16>, vector<4x8xbf16>, vector<64x8xf32> -> vector<64x8xf32>
    %14 = arith.addf %7, %13 : vector<64x8xf32>
    %c0_14 = arith.constant 0 : index
    %c0_15 = arith.constant 0 : index
    %c1_16 = arith.constant 1 : index
    %c0_17 = arith.constant 0 : index
    %15 = vector.load %arg1[%c0_14, %c0_15, %c1_16, %c0_17] : memref<1x9x9x4xbf16, #tpu.memory_space<vmem>>, vector<1x8x8x4xbf16>
    %16 = vector.shape_cast %15 : vector<1x8x8x4xbf16> to vector<8x8x4xbf16>
    %17 = vector.shape_cast %16 : vector<8x8x4xbf16> to vector<64x4xbf16>
    %c2 = arith.constant 2 : index
    %c0_18 = arith.constant 0 : index
    %c0_19 = arith.constant 0 : index
    %18 = vector.load %arg5[%c2, %c0_18, %c0_19] : memref<9x4x8xbf16, #tpu.memory_space<vmem>>, vector<1x4x8xbf16>
    %19 = vector.shape_cast %18 : vector<1x4x8xbf16> to vector<4x8xbf16>
    %cst_20 = arith.constant dense<0.000000e+00> : vector<64x8xf32>
    %20 = tpu.matmul %17, %19, %cst_20 {dimension_numbers = #tpu.dot_dimension_numbers<[1], [0], [0], [1], [0, 0, 1, 1], [], []>} : vector<64x4xbf16>, vector<4x8xbf16>, vector<64x8xf32> -> vector<64x8xf32>
    %21 = arith.addf %14, %20 : vector<64x8xf32>
    %c0_21 = arith.constant 0 : index
    %c0_22 = arith.constant 0 : index
    %c0_23 = arith.constant 0 : index
    %c0_24 = arith.constant 0 : index
    %22 = vector.load %arg3[%c0_21, %c0_22, %c0_23, %c0_24] : memref<1x9x9x4xbf16, #tpu.memory_space<vmem>>, vector<1x8x8x4xbf16>
    %23 = vector.shape_cast %22 : vector<1x8x8x4xbf16> to vector<8x8x4xbf16>
    %24 = vector.shape_cast %23 : vector<8x8x4xbf16> to vector<64x4xbf16>
    %c3 = arith.constant 3 : index
    %c0_25 = arith.constant 0 : index
    %c0_26 = arith.constant 0 : index
    %25 = vector.load %arg5[%c3, %c0_25, %c0_26] : memref<9x4x8xbf16, #tpu.memory_space<vmem>>, vector<1x4x8xbf16>
    %26 = vector.shape_cast %25 : vector<1x4x8xbf16> to vector<4x8xbf16>
    %cst_27 = arith.constant dense<0.000000e+00> : vector<64x8xf32>
    %27 = tpu.matmul %24, %26, %cst_27 {dimension_numbers = #tpu.dot_dimension_numbers<[1], [0], [0], [1], [0, 0, 1, 1], [], []>} : vector<64x4xbf16>, vector<4x8xbf16>, vector<64x8xf32> -> vector<64x8xf32>
    %28 = arith.addf %21, %27 : vector<64x8xf32>
    %c0_28 = arith.constant 0 : index
    %c0_29 = arith.constant 0 : index
    %c0_30 = arith.constant 0 : index
    %c0_31 = arith.constant 0 : index
    %29 = vector.load %arg4[%c0_28, %c0_29, %c0_30, %c0_31] : memref<1x9x9x4xbf16, #tpu.memory_space<vmem>>, vector<1x8x8x4xbf16>
    %30 = vector.shape_cast %29 : vector<1x8x8x4xbf16> to vector<8x8x4xbf16>
    %31 = vector.shape_cast %30 : vector<8x8x4xbf16> to vector<64x4xbf16>
    %c4 = arith.constant 4 : index
    %c0_32 = arith.constant 0 : index
    %c0_33 = arith.constant 0 : index
    %32 = vector.load %arg5[%c4, %c0_32, %c0_33] : memref<9x4x8xbf16, #tpu.memory_space<vmem>>, vector<1x4x8xbf16>
    %33 = vector.shape_cast %32 : vector<1x4x8xbf16> to vector<4x8xbf16>
    %cst_34 = arith.constant dense<0.000000e+00> : vector<64x8xf32>
    %34 = tpu.matmul %31, %33, %cst_34 {dimension_numbers = #tpu.dot_dimension_numbers<[1], [0], [0], [1], [0, 0, 1, 1], [], []>} : vector<64x4xbf16>, vector<4x8xbf16>, vector<64x8xf32> -> vector<64x8xf32>
    %35 = arith.addf %28, %34 : vector<64x8xf32>
    %c0_35 = arith.constant 0 : index
    %c0_36 = arith.constant 0 : index
    %c1_37 = arith.constant 1 : index
    %c0_38 = arith.constant 0 : index
    %36 = vector.load %arg3[%c0_35, %c0_36, %c1_37, %c0_38] : memref<1x9x9x4xbf16, #tpu.memory_space<vmem>>, vector<1x8x8x4xbf16>
    %37 = vector.shape_cast %36 : vector<1x8x8x4xbf16> to vector<8x8x4xbf16>
    %38 = vector.shape_cast %37 : vector<8x8x4xbf16> to vector<64x4xbf16>
    %c5 = arith.constant 5 : index
    %c0_39 = arith.constant 0 : index
    %c0_40 = arith.constant 0 : index
    %39 = vector.load %arg5[%c5, %c0_39, %c0_40] : memref<9x4x8xbf16, #tpu.memory_space<vmem>>, vector<1x4x8xbf16>
    %40 = vector.shape_cast %39 : vector<1x4x8xbf16> to vector<4x8xbf16>
    %cst_41 = arith.constant dense<0.000000e+00> : vector<64x8xf32>
    %41 = tpu.matmul %38, %40, %cst_41 {dimension_numbers = #tpu.dot_dimension_numbers<[1], [0], [0], [1], [0, 0, 1, 1], [], []>} : vector<64x4xbf16>, vector<4x8xbf16>, vector<64x8xf32> -> vector<64x8xf32>
    %42 = arith.addf %35, %41 : vector<64x8xf32>
    %c0_42 = arith.constant 0 : index
    %c1_43 = arith.constant 1 : index
    %c0_44 = arith.constant 0 : index
    %c0_45 = arith.constant 0 : index
    %43 = vector.load %arg1[%c0_42, %c1_43, %c0_44, %c0_45] : memref<1x9x9x4xbf16, #tpu.memory_space<vmem>>, vector<1x8x8x4xbf16>
    %44 = vector.shape_cast %43 : vector<1x8x8x4xbf16> to vector<8x8x4xbf16>
    %45 = vector.shape_cast %44 : vector<8x8x4xbf16> to vector<64x4xbf16>
    %c6 = arith.constant 6 : index
    %c0_46 = arith.constant 0 : index
    %c0_47 = arith.constant 0 : index
    %46 = vector.load %arg5[%c6, %c0_46, %c0_47] : memref<9x4x8xbf16, #tpu.memory_space<vmem>>, vector<1x4x8xbf16>
    %47 = vector.shape_cast %46 : vector<1x4x8xbf16> to vector<4x8xbf16>
    %cst_48 = arith.constant dense<0.000000e+00> : vector<64x8xf32>
    %48 = tpu.matmul %45, %47, %cst_48 {dimension_numbers = #tpu.dot_dimension_numbers<[1], [0], [0], [1], [0, 0, 1, 1], [], []>} : vector<64x4xbf16>, vector<4x8xbf16>, vector<64x8xf32> -> vector<64x8xf32>
    %49 = arith.addf %42, %48 : vector<64x8xf32>
    %c0_49 = arith.constant 0 : index
    %c1_50 = arith.constant 1 : index
    %c0_51 = arith.constant 0 : index
    %c0_52 = arith.constant 0 : index
    %50 = vector.load %arg2[%c0_49, %c1_50, %c0_51, %c0_52] : memref<1x9x9x4xbf16, #tpu.memory_space<vmem>>, vector<1x8x8x4xbf16>
    %51 = vector.shape_cast %50 : vector<1x8x8x4xbf16> to vector<8x8x4xbf16>
    %52 = vector.shape_cast %51 : vector<8x8x4xbf16> to vector<64x4xbf16>
    %c7 = arith.constant 7 : index
    %c0_53 = arith.constant 0 : index
    %c0_54 = arith.constant 0 : index
    %53 = vector.load %arg5[%c7, %c0_53, %c0_54] : memref<9x4x8xbf16, #tpu.memory_space<vmem>>, vector<1x4x8xbf16>
    %54 = vector.shape_cast %53 : vector<1x4x8xbf16> to vector<4x8xbf16>
    %cst_55 = arith.constant dense<0.000000e+00> : vector<64x8xf32>
    %55 = tpu.matmul %52, %54, %cst_55 {dimension_numbers = #tpu.dot_dimension_numbers<[1], [0], [0], [1], [0, 0, 1, 1], [], []>} : vector<64x4xbf16>, vector<4x8xbf16>, vector<64x8xf32> -> vector<64x8xf32>
    %56 = arith.addf %49, %55 : vector<64x8xf32>
    %c0_56 = arith.constant 0 : index
    %c1_57 = arith.constant 1 : index
    %c1_58 = arith.constant 1 : index
    %c0_59 = arith.constant 0 : index
    %57 = vector.load %arg1[%c0_56, %c1_57, %c1_58, %c0_59] : memref<1x9x9x4xbf16, #tpu.memory_space<vmem>>, vector<1x8x8x4xbf16>
    %58 = vector.shape_cast %57 : vector<1x8x8x4xbf16> to vector<8x8x4xbf16>
    %59 = vector.shape_cast %58 : vector<8x8x4xbf16> to vector<64x4xbf16>
    %c8 = arith.constant 8 : index
    %c0_60 = arith.constant 0 : index
    %c0_61 = arith.constant 0 : index
    %60 = vector.load %arg5[%c8, %c0_60, %c0_61] : memref<9x4x8xbf16, #tpu.memory_space<vmem>>, vector<1x4x8xbf16>
    %61 = vector.shape_cast %60 : vector<1x4x8xbf16> to vector<4x8xbf16>
    %cst_62 = arith.constant dense<0.000000e+00> : vector<64x8xf32>
    %62 = tpu.matmul %59, %61, %cst_62 {dimension_numbers = #tpu.dot_dimension_numbers<[1], [0], [0], [1], [0, 0, 1, 1], [], []>} : vector<64x4xbf16>, vector<4x8xbf16>, vector<64x8xf32> -> vector<64x8xf32>
    %63 = arith.addf %56, %62 : vector<64x8xf32>
    %cst_63 = arith.constant dense<0.000000e+00> : vector<8xf32>
    %64 = vector.multi_reduction <add>, %63, %cst_63 [0] : vector<64x8xf32> to vector<8xf32>
    %65 = vector.shape_cast %64 : vector<8xf32> to vector<1x8xf32>
    %66 = arith.mulf %63, %63 : vector<64x8xf32>
    %cst_64 = arith.constant dense<0.000000e+00> : vector<8xf32>
    %67 = vector.multi_reduction <add>, %66, %cst_64 [0] : vector<64x8xf32> to vector<8xf32>
    %68 = vector.shape_cast %67 : vector<8xf32> to vector<1x8xf32>
    %cst_65 = arith.constant 1.562500e-02 : f32
    %69 = vector.broadcast %cst_65 : f32 to vector<1x8xf32>
    %70 = arith.mulf %65, %69 : vector<1x8xf32>
    %cst_66 = arith.constant 1.562500e-02 : f32
    %71 = vector.broadcast %cst_66 : f32 to vector<1x8xf32>
    %72 = arith.mulf %68, %71 : vector<1x8xf32>
    %73 = arith.mulf %70, %70 : vector<1x8xf32>
    %74 = arith.subf %72, %73 : vector<1x8xf32>
    %cst_67 = arith.constant 0.000000e+00 : f32
    %75 = vector.broadcast %cst_67 : f32 to vector<1x8xf32>
    %76 = arith.maximumf %74, %75 : vector<1x8xf32>
    %77 = vector.broadcast %70 : vector<1x8xf32> to vector<64x8xf32>
    %78 = arith.subf %63, %77 : vector<64x8xf32>
    %cst_68 = arith.constant 9.99999974E-6 : f32
    %79 = vector.broadcast %cst_68 : f32 to vector<1x8xf32>
    %80 = arith.addf %76, %79 : vector<1x8xf32>
    %81 = math.rsqrt %80 : vector<1x8xf32>
    %82 = vector.broadcast %81 : vector<1x8xf32> to vector<64x8xf32>
    %83 = arith.mulf %78, %82 : vector<64x8xf32>
    %cst_69 = arith.constant 0.000000e+00 : f32
    %84 = vector.broadcast %cst_69 : f32 to vector<64x8xf32>
    %85 = arith.cmpf oge, %83, %84 : vector<64x8xf32>
    %cst_70 = arith.constant 0.00999999977 : f32
    %86 = vector.broadcast %cst_70 : f32 to vector<64x8xf32>
    %87 = arith.mulf %86, %83 : vector<64x8xf32>
    %88 = arith.select %85, %83, %87 : vector<64x8xi1>, vector<64x8xf32>
    %cst_71 = arith.constant 0.000000e+00 : bf16
    %89 = vector.broadcast %cst_71 : bf16 to vector<10x10x8xbf16>
    %c0_72 = arith.constant 0 : index
    %c0_73 = arith.constant 0 : index
    %c0_74 = arith.constant 0 : index
    %90 = vector.load %arg9[%c0_72, %c0_73, %c0_74] : memref<10x10x8xbf16, #tpu.memory_space<vmem>>, vector<10x10x8xbf16>
    tpu.vector_store %arg9[%c0_72, %c0_73, %c0_74], %89 {strides = array<i32>} : memref<10x10x8xbf16, #tpu.memory_space<vmem>>, vector<10x10x8xbf16>,
    %91 = vector.shape_cast %88 : vector<64x8xf32> to vector<8x8x8xf32>
    %92 = arith.truncf %91 : vector<8x8x8xf32> to vector<8x8x8xbf16>
    %c1_75 = arith.constant 1 : index
    %c1_76 = arith.constant 1 : index
    %c0_77 = arith.constant 0 : index
    %93 = vector.load %arg9[%c1_75, %c1_76, %c0_77] : memref<10x10x8xbf16, #tpu.memory_space<vmem>>, vector<8x8x8xbf16>
    tpu.vector_store %arg9[%c1_75, %c1_76, %c0_77], %92 {strides = array<i32>} : memref<10x10x8xbf16, #tpu.memory_space<vmem>>, vector<8x8x8xbf16>,
    %cst_78 = arith.constant 0.000000e+00 : f32
    %94 = vector.broadcast %cst_78 : f32 to vector<64x8xf32>
    %c0_79 = arith.constant 0 : index
    %c0_80 = arith.constant 0 : index
    %c0_81 = arith.constant 0 : index
    %95 = vector.load %arg9[%c0_79, %c0_80, %c0_81] : memref<10x10x8xbf16, #tpu.memory_space<vmem>>, vector<8x8x8xbf16>
    %96 = vector.shape_cast %95 : vector<8x8x8xbf16> to vector<64x8xbf16>
    %c0_82 = arith.constant 0 : index
    %c0_83 = arith.constant 0 : index
    %c0_84 = arith.constant 0 : index
    %97 = vector.load %arg6[%c0_82, %c0_83, %c0_84] : memref<9x8x8xbf16, #tpu.memory_space<vmem>>, vector<1x8x8xbf16>
    %98 = vector.shape_cast %97 : vector<1x8x8xbf16> to vector<8x8xbf16>
    %cst_85 = arith.constant dense<0.000000e+00> : vector<64x8xf32>
    %99 = tpu.matmul %96, %98, %cst_85 {dimension_numbers = #tpu.dot_dimension_numbers<[1], [0], [0], [1], [0, 0, 1, 1], [], []>} : vector<64x8xbf16>, vector<8x8xbf16>, vector<64x8xf32> -> vector<64x8xf32>
    %100 = arith.addf %94, %99 : vector<64x8xf32>
    %c0_86 = arith.constant 0 : index
    %c1_87 = arith.constant 1 : index
    %c0_88 = arith.constant 0 : index
    %101 = vector.load %arg9[%c0_86, %c1_87, %c0_88] : memref<10x10x8xbf16, #tpu.memory_space<vmem>>, vector<8x8x8xbf16>
    %102 = vector.shape_cast %101 : vector<8x8x8xbf16> to vector<64x8xbf16>
    %c1_89 = arith.constant 1 : index
    %c0_90 = arith.constant 0 : index
    %c0_91 = arith.constant 0 : index
    %103 = vector.load %arg6[%c1_89, %c0_90, %c0_91] : memref<9x8x8xbf16, #tpu.memory_space<vmem>>, vector<1x8x8xbf16>
    %104 = vector.shape_cast %103 : vector<1x8x8xbf16> to vector<8x8xbf16>
    %cst_92 = arith.constant dense<0.000000e+00> : vector<64x8xf32>
    %105 = tpu.matmul %102, %104, %cst_92 {dimension_numbers = #tpu.dot_dimension_numbers<[1], [0], [0], [1], [0, 0, 1, 1], [], []>} : vector<64x8xbf16>, vector<8x8xbf16>, vector<64x8xf32> -> vector<64x8xf32>
    %106 = arith.addf %100, %105 : vector<64x8xf32>
    %c0_93 = arith.constant 0 : index
    %c2_94 = arith.constant 2 : index
    %c0_95 = arith.constant 0 : index
    %107 = vector.load %arg9[%c0_93, %c2_94, %c0_95] : memref<10x10x8xbf16, #tpu.memory_space<vmem>>, vector<8x8x8xbf16>
    %108 = vector.shape_cast %107 : vector<8x8x8xbf16> to vector<64x8xbf16>
    %c2_96 = arith.constant 2 : index
    %c0_97 = arith.constant 0 : index
    %c0_98 = arith.constant 0 : index
    %109 = vector.load %arg6[%c2_96, %c0_97, %c0_98] : memref<9x8x8xbf16, #tpu.memory_space<vmem>>, vector<1x8x8xbf16>
    %110 = vector.shape_cast %109 : vector<1x8x8xbf16> to vector<8x8xbf16>
    %cst_99 = arith.constant dense<0.000000e+00> : vector<64x8xf32>
    %111 = tpu.matmul %108, %110, %cst_99 {dimension_numbers = #tpu.dot_dimension_numbers<[1], [0], [0], [1], [0, 0, 1, 1], [], []>} : vector<64x8xbf16>, vector<8x8xbf16>, vector<64x8xf32> -> vector<64x8xf32>
    %112 = arith.addf %106, %111 : vector<64x8xf32>
    %c1_100 = arith.constant 1 : index
    %c0_101 = arith.constant 0 : index
    %c0_102 = arith.constant 0 : index
    %113 = vector.load %arg9[%c1_100, %c0_101, %c0_102] : memref<10x10x8xbf16, #tpu.memory_space<vmem>>, vector<8x8x8xbf16>
    %114 = vector.shape_cast %113 : vector<8x8x8xbf16> to vector<64x8xbf16>
    %c3_103 = arith.constant 3 : index
    %c0_104 = arith.constant 0 : index
    %c0_105 = arith.constant 0 : index
    %115 = vector.load %arg6[%c3_103, %c0_104, %c0_105] : memref<9x8x8xbf16, #tpu.memory_space<vmem>>, vector<1x8x8xbf16>
    %116 = vector.shape_cast %115 : vector<1x8x8xbf16> to vector<8x8xbf16>
    %cst_106 = arith.constant dense<0.000000e+00> : vector<64x8xf32>
    %117 = tpu.matmul %114, %116, %cst_106 {dimension_numbers = #tpu.dot_dimension_numbers<[1], [0], [0], [1], [0, 0, 1, 1], [], []>} : vector<64x8xbf16>, vector<8x8xbf16>, vector<64x8xf32> -> vector<64x8xf32>
    %118 = arith.addf %112, %117 : vector<64x8xf32>
    %c1_107 = arith.constant 1 : index
    %c1_108 = arith.constant 1 : index
    %c0_109 = arith.constant 0 : index
    %119 = vector.load %arg9[%c1_107, %c1_108, %c0_109] : memref<10x10x8xbf16, #tpu.memory_space<vmem>>, vector<8x8x8xbf16>
    %120 = vector.shape_cast %119 : vector<8x8x8xbf16> to vector<64x8xbf16>
    %c4_110 = arith.constant 4 : index
    %c0_111 = arith.constant 0 : index
    %c0_112 = arith.constant 0 : index
    %121 = vector.load %arg6[%c4_110, %c0_111, %c0_112] : memref<9x8x8xbf16, #tpu.memory_space<vmem>>, vector<1x8x8xbf16>
    %122 = vector.shape_cast %121 : vector<1x8x8xbf16> to vector<8x8xbf16>
    %cst_113 = arith.constant dense<0.000000e+00> : vector<64x8xf32>
    %123 = tpu.matmul %120, %122, %cst_113 {dimension_numbers = #tpu.dot_dimension_numbers<[1], [0], [0], [1], [0, 0, 1, 1], [], []>} : vector<64x8xbf16>, vector<8x8xbf16>, vector<64x8xf32> -> vector<64x8xf32>
    %124 = arith.addf %118, %123 : vector<64x8xf32>
    %c1_114 = arith.constant 1 : index
    %c2_115 = arith.constant 2 : index
    %c0_116 = arith.constant 0 : index
    %125 = vector.load %arg9[%c1_114, %c2_115, %c0_116] : memref<10x10x8xbf16, #tpu.memory_space<vmem>>, vector<8x8x8xbf16>
    %126 = vector.shape_cast %125 : vector<8x8x8xbf16> to vector<64x8xbf16>
    %c5_117 = arith.constant 5 : index
    %c0_118 = arith.constant 0 : index
    %c0_119 = arith.constant 0 : index
    %127 = vector.load %arg6[%c5_117, %c0_118, %c0_119] : memref<9x8x8xbf16, #tpu.memory_space<vmem>>, vector<1x8x8xbf16>
    %128 = vector.shape_cast %127 : vector<1x8x8xbf16> to vector<8x8xbf16>
    %cst_120 = arith.constant dense<0.000000e+00> : vector<64x8xf32>
    %129 = tpu.matmul %126, %128, %cst_120 {dimension_numbers = #tpu.dot_dimension_numbers<[1], [0], [0], [1], [0, 0, 1, 1], [], []>} : vector<64x8xbf16>, vector<8x8xbf16>, vector<64x8xf32> -> vector<64x8xf32>
    %130 = arith.addf %124, %129 : vector<64x8xf32>
    %c2_121 = arith.constant 2 : index
    %c0_122 = arith.constant 0 : index
    %c0_123 = arith.constant 0 : index
    %131 = vector.load %arg9[%c2_121, %c0_122, %c0_123] : memref<10x10x8xbf16, #tpu.memory_space<vmem>>, vector<8x8x8xbf16>
    %132 = vector.shape_cast %131 : vector<8x8x8xbf16> to vector<64x8xbf16>
    %c6_124 = arith.constant 6 : index
    %c0_125 = arith.constant 0 : index
    %c0_126 = arith.constant 0 : index
    %133 = vector.load %arg6[%c6_124, %c0_125, %c0_126] : memref<9x8x8xbf16, #tpu.memory_space<vmem>>, vector<1x8x8xbf16>
    %134 = vector.shape_cast %133 : vector<1x8x8xbf16> to vector<8x8xbf16>
    %cst_127 = arith.constant dense<0.000000e+00> : vector<64x8xf32>
    %135 = tpu.matmul %132, %134, %cst_127 {dimension_numbers = #tpu.dot_dimension_numbers<[1], [0], [0], [1], [0, 0, 1, 1], [], []>} : vector<64x8xbf16>, vector<8x8xbf16>, vector<64x8xf32> -> vector<64x8xf32>
    %136 = arith.addf %130, %135 : vector<64x8xf32>
    %c2_128 = arith.constant 2 : index
    %c1_129 = arith.constant 1 : index
    %c0_130 = arith.constant 0 : index
    %137 = vector.load %arg9[%c2_128, %c1_129, %c0_130] : memref<10x10x8xbf16, #tpu.memory_space<vmem>>, vector<8x8x8xbf16>
    %138 = vector.shape_cast %137 : vector<8x8x8xbf16> to vector<64x8xbf16>
    %c7_131 = arith.constant 7 : index
    %c0_132 = arith.constant 0 : index
    %c0_133 = arith.constant 0 : index
    %139 = vector.load %arg6[%c7_131, %c0_132, %c0_133] : memref<9x8x8xbf16, #tpu.memory_space<vmem>>, vector<1x8x8xbf16>
    %140 = vector.shape_cast %139 : vector<1x8x8xbf16> to vector<8x8xbf16>
    %cst_134 = arith.constant dense<0.000000e+00> : vector<64x8xf32>
    %141 = tpu.matmul %138, %140, %cst_134 {dimension_numbers = #tpu.dot_dimension_numbers<[1], [0], [0], [1], [0, 0, 1, 1], [], []>} : vector<64x8xbf16>, vector<8x8xbf16>, vector<64x8xf32> -> vector<64x8xf32>
    %142 = arith.addf %136, %141 : vector<64x8xf32>
    %c2_135 = arith.constant 2 : index
    %c2_136 = arith.constant 2 : index
    %c0_137 = arith.constant 0 : index
    %143 = vector.load %arg9[%c2_135, %c2_136, %c0_137] : memref<10x10x8xbf16, #tpu.memory_space<vmem>>, vector<8x8x8xbf16>
    %144 = vector.shape_cast %143 : vector<8x8x8xbf16> to vector<64x8xbf16>
    %c8_138 = arith.constant 8 : index
    %c0_139 = arith.constant 0 : index
    %c0_140 = arith.constant 0 : index
    %145 = vector.load %arg6[%c8_138, %c0_139, %c0_140] : memref<9x8x8xbf16, #tpu.memory_space<vmem>>, vector<1x8x8xbf16>
    %146 = vector.shape_cast %145 : vector<1x8x8xbf16> to vector<8x8xbf16>
    %cst_141 = arith.constant dense<0.000000e+00> : vector<64x8xf32>
    %147 = tpu.matmul %144, %146, %cst_141 {dimension_numbers = #tpu.dot_dimension_numbers<[1], [0], [0], [1], [0, 0, 1, 1], [], []>} : vector<64x8xbf16>, vector<8x8xbf16>, vector<64x8xf32> -> vector<64x8xf32>
    %148 = arith.addf %142, %147 : vector<64x8xf32>
    %cst_142 = arith.constant dense<0.000000e+00> : vector<8xf32>
    %149 = vector.multi_reduction <add>, %148, %cst_142 [0] : vector<64x8xf32> to vector<8xf32>
    %150 = vector.shape_cast %149 : vector<8xf32> to vector<1x8xf32>
    %151 = arith.mulf %148, %148 : vector<64x8xf32>
    %cst_143 = arith.constant dense<0.000000e+00> : vector<8xf32>
    %152 = vector.multi_reduction <add>, %151, %cst_143 [0] : vector<64x8xf32> to vector<8xf32>
    %153 = vector.shape_cast %152 : vector<8xf32> to vector<1x8xf32>
    %cst_144 = arith.constant 1.562500e-02 : f32
    %154 = vector.broadcast %cst_144 : f32 to vector<1x8xf32>
    %155 = arith.mulf %150, %154 : vector<1x8xf32>
    %cst_145 = arith.constant 1.562500e-02 : f32
    %156 = vector.broadcast %cst_145 : f32 to vector<1x8xf32>
    %157 = arith.mulf %153, %156 : vector<1x8xf32>
    %158 = arith.mulf %155, %155 : vector<1x8xf32>
    %159 = arith.subf %157, %158 : vector<1x8xf32>
    %cst_146 = arith.constant 0.000000e+00 : f32
    %160 = vector.broadcast %cst_146 : f32 to vector<1x8xf32>
    %161 = arith.maximumf %159, %160 : vector<1x8xf32>
    %162 = vector.broadcast %155 : vector<1x8xf32> to vector<64x8xf32>
    %163 = arith.subf %148, %162 : vector<64x8xf32>
    %cst_147 = arith.constant 9.99999974E-6 : f32
    %164 = vector.broadcast %cst_147 : f32 to vector<1x8xf32>
    %165 = arith.addf %161, %164 : vector<1x8xf32>
    %166 = math.rsqrt %165 : vector<1x8xf32>
    %167 = vector.broadcast %166 : vector<1x8xf32> to vector<64x8xf32>
    %168 = arith.mulf %163, %167 : vector<64x8xf32>
    %c0_148 = arith.constant 0 : index
    %c0_149 = arith.constant 0 : index
    %c0_150 = arith.constant 0 : index
    %c0_151 = arith.constant 0 : index
    %169 = vector.load %arg4[%c0_148, %c0_149, %c0_150, %c0_151] : memref<1x9x9x4xbf16, #tpu.memory_space<vmem>>, vector<1x8x8x4xbf16>
    %170 = vector.shape_cast %169 : vector<1x8x8x4xbf16> to vector<8x8x4xbf16>
    %171 = vector.shape_cast %170 : vector<8x8x4xbf16> to vector<64x4xbf16>
    %c0_152 = arith.constant 0 : index
    %c0_153 = arith.constant 0 : index
    %172 = vector.load %arg7[%c0_152, %c0_153] : memref<4x8xbf16, #tpu.memory_space<vmem>>, vector<4x8xbf16>
    %cst_154 = arith.constant dense<0.000000e+00> : vector<64x8xf32>
    %173 = tpu.matmul %171, %172, %cst_154 {dimension_numbers = #tpu.dot_dimension_numbers<[1], [0], [0], [1], [0, 0, 1, 1], [], []>} : vector<64x4xbf16>, vector<4x8xbf16>, vector<64x8xf32> -> vector<64x8xf32>
    %cst_155 = arith.constant dense<0.000000e+00> : vector<8xf32>
    %174 = vector.multi_reduction <add>, %173, %cst_155 [0] : vector<64x8xf32> to vector<8xf32>
    %175 = vector.shape_cast %174 : vector<8xf32> to vector<1x8xf32>
    %176 = arith.mulf %173, %173 : vector<64x8xf32>
    %cst_156 = arith.constant dense<0.000000e+00> : vector<8xf32>
    %177 = vector.multi_reduction <add>, %176, %cst_156 [0] : vector<64x8xf32> to vector<8xf32>
    %178 = vector.shape_cast %177 : vector<8xf32> to vector<1x8xf32>
    %cst_157 = arith.constant 1.562500e-02 : f32
    %179 = vector.broadcast %cst_157 : f32 to vector<1x8xf32>
    %180 = arith.mulf %175, %179 : vector<1x8xf32>
    %cst_158 = arith.constant 1.562500e-02 : f32
    %181 = vector.broadcast %cst_158 : f32 to vector<1x8xf32>
    %182 = arith.mulf %178, %181 : vector<1x8xf32>
    %183 = arith.mulf %180, %180 : vector<1x8xf32>
    %184 = arith.subf %182, %183 : vector<1x8xf32>
    %cst_159 = arith.constant 0.000000e+00 : f32
    %185 = vector.broadcast %cst_159 : f32 to vector<1x8xf32>
    %186 = arith.maximumf %184, %185 : vector<1x8xf32>
    %187 = vector.broadcast %180 : vector<1x8xf32> to vector<64x8xf32>
    %188 = arith.subf %173, %187 : vector<64x8xf32>
    %cst_160 = arith.constant 9.99999974E-6 : f32
    %189 = vector.broadcast %cst_160 : f32 to vector<1x8xf32>
    %190 = arith.addf %186, %189 : vector<1x8xf32>
    %191 = math.rsqrt %190 : vector<1x8xf32>
    %192 = vector.broadcast %191 : vector<1x8xf32> to vector<64x8xf32>
    %193 = arith.mulf %188, %192 : vector<64x8xf32>
    %194 = arith.addf %168, %193 : vector<64x8xf32>
    %cst_161 = arith.constant 0.000000e+00 : f32
    %195 = vector.broadcast %cst_161 : f32 to vector<64x8xf32>
    %196 = arith.cmpf oge, %194, %195 : vector<64x8xf32>
    %cst_162 = arith.constant 0.00999999977 : f32
    %197 = vector.broadcast %cst_162 : f32 to vector<64x8xf32>
    %198 = arith.mulf %197, %194 : vector<64x8xf32>
    %199 = arith.select %196, %194, %198 : vector<64x8xi1>, vector<64x8xf32>
    %c0_163 = arith.constant 0 : index
    %c0_164 = arith.constant 0 : index
    %c0_165 = arith.constant 0 : index
    %200 = vector.load %arg8[%c0_163, %c0_164, %c0_165] : memref<1x64x8xf32, #tpu.memory_space<vmem>>, vector<1x64x8xf32>
    %201 = vector.shape_cast %200 : vector<1x64x8xf32> to vector<64x8xf32>
    %202 = vector.shape_cast %199 : vector<64x8xf32> to vector<1x64x8xf32>
    tpu.vector_store %arg8[%c0_163, %c0_164, %c0_165], %202 {strides = array<i32>} : memref<1x64x8xf32, #tpu.memory_space<vmem>>, vector<1x64x8xf32>,
    return
  }
  func.func @transform_0(%arg0: i32) -> (i32, i32, i32, i32) {
    %c0_i32 = arith.constant 0 : i32
    %c0_i32_0 = arith.constant 0 : i32
    %c0_i32_1 = arith.constant 0 : i32
    %c0_i32_2 = arith.constant 0 : i32
    return %arg0, %c0_i32, %c0_i32_0, %c0_i32_1 : i32, i32, i32, i32
  }
  func.func @transform_1(%arg0: i32) -> (i32, i32, i32, i32) {
    %c0_i32 = arith.constant 0 : i32
    %c0_i32_0 = arith.constant 0 : i32
    %c0_i32_1 = arith.constant 0 : i32
    %c0_i32_2 = arith.constant 0 : i32
    return %arg0, %c0_i32, %c0_i32_0, %c0_i32_1 : i32, i32, i32, i32
  }
  func.func @transform_2(%arg0: i32) -> (i32, i32, i32, i32) {
    %c0_i32 = arith.constant 0 : i32
    %c0_i32_0 = arith.constant 0 : i32
    %c0_i32_1 = arith.constant 0 : i32
    %c0_i32_2 = arith.constant 0 : i32
    return %arg0, %c0_i32, %c0_i32_0, %c0_i32_1 : i32, i32, i32, i32
  }
  func.func @transform_3(%arg0: i32) -> (i32, i32, i32, i32) {
    %c0_i32 = arith.constant 0 : i32
    %c0_i32_0 = arith.constant 0 : i32
    %c0_i32_1 = arith.constant 0 : i32
    %c0_i32_2 = arith.constant 0 : i32
    return %arg0, %c0_i32, %c0_i32_0, %c0_i32_1 : i32, i32, i32, i32
  }
  func.func @transform_4(%arg0: i32) -> (i32, i32, i32) {
    %c0_i32 = arith.constant 0 : i32
    %c0_i32_0 = arith.constant 0 : i32
    %c0_i32_1 = arith.constant 0 : i32
    %c0_i32_2 = arith.constant 0 : i32
    return %c0_i32, %c0_i32_0, %c0_i32_1 : i32, i32, i32
  }
  func.func @transform_5(%arg0: i32) -> (i32, i32, i32) {
    %c0_i32 = arith.constant 0 : i32
    %c0_i32_0 = arith.constant 0 : i32
    %c0_i32_1 = arith.constant 0 : i32
    %c0_i32_2 = arith.constant 0 : i32
    return %c0_i32, %c0_i32_0, %c0_i32_1 : i32, i32, i32
  }
  func.func @transform_6(%arg0: i32) -> (i32, i32) {
    %c0_i32 = arith.constant 0 : i32
    %c0_i32_0 = arith.constant 0 : i32
    %c0_i32_1 = arith.constant 0 : i32
    return %c0_i32, %c0_i32_0 : i32, i32
  }
  func.func @transform_7(%arg0: i32) -> (i32, i32, i32) {
    %c0_i32 = arith.constant 0 : i32
    %c0_i32_0 = arith.constant 0 : i32
    %c0_i32_1 = arith.constant 0 : i32
    return %arg0, %c0_i32, %c0_i32_0 : i32, i32, i32
  }
}

</mosaic_0001>

<llo_original>
// kernel: encoder_residual_layer.1
$region0: #{encoder_residual_layer.1}
  #allocation0 [shape = 'u32[]', space=smem, size = 0x4, offset = 0x4, fixed_abs, tag = 'smem constant byte address 0x4 - core index']
  #allocation1 [shape = 'u32[144,128]{1,0:T(1,128)}', space=vmem, size = 0x12000, scoped, tag = 'internal scratch']
  #allocation2 [shape = 'bf16[10,10,8]{2,1,0:T(8,128)(2,1)}', space=vmem, size = 0xa000, scoped, tag = 'scratch operand']
  %s0 = inlined_call_operand.vmem [shape: bf16[2,9,9,4], index: 0, kind: input, shape index: {}]
  %s1 = inlined_call_operand.vmem [shape: bf16[2,9,9,4], index: 1, kind: input, shape index: {}]
  %s2 = inlined_call_operand.vmem [shape: bf16[2,9,9,4], index: 2, kind: input, shape index: {}]
  %s3 = inlined_call_operand.vmem [shape: bf16[2,9,9,4], index: 3, kind: input, shape index: {}]
  %s4 = inlined_call_operand.vmem [shape: bf16[9,4,8], index: 4, kind: input, shape index: {}]
  %s5 = inlined_call_operand.vmem [shape: bf16[9,8,8], index: 5, kind: input, shape index: {}]
  %s6 = inlined_call_operand.vmem [shape: bf16[4,8], index: 6, kind: input, shape index: {}]
  %s7 = inlined_call_operand.vmem [shape: f32[2,64,8], index: 7, kind: output, shape index: {}]
  %s8 = sld [smem:[#allocation0]]
  $region61: #{encoder_residual_layer.1} parent=0
    _
  %s10 = ssub.s32 1, %s8
  %s11 = scalar_select 0, %s10, %s8
  loop: start=0, step=1, limit=4
  $region2: #{encoder_residual_layer.1} parent=0 // loop_pre_header
    _
  $region3: #{encoder_residual_layer.1} parent=0 // loop_header
    %s13 = sphi 0, %s17
    %p14 = scmp.ge.s32.totalorder %s13, 4
    %s23 = sphi 0, %s25
    %s26 = sphi 0, %s23
    %s27 = sphi 0, %s26
    %s43 = sphi 0, %s27
    %s49 = sphi 0, %s51
    %s52 = sphi 0, %s49
    %s53 = sphi 0, %s52
    %s69 = sphi 0, %s53
    %s75 = sphi 0, %s77
    %s78 = sphi 0, %s75
    %s79 = sphi 0, %s78
    %s95 = sphi 0, %s79
    %s101 = sphi 0, %s103
    %s104 = sphi 0, %s101
    %s105 = sphi 0, %s104
    %s121 = sphi 0, %s105
    %s125 = sphi 0, %s125
    %s127 = sphi 0, %s125
    %s128 = sphi 0, %s127
    %s142 = sphi 0, %s128
    %s146 = sphi 0, %s146
    %s148 = sphi 0, %s146
    %s149 = sphi 0, %s148
    %s163 = sphi 0, %s149
    %s167 = sphi 0, %s167
    %s169 = sphi 0, %s167
    %s170 = sphi 0, %s169
    %s184 = sphi 0, %s170
    %s190 = sphi 0, %s192
    %s193 = sphi 0, %s190
    %s194 = sphi 0, %s193
    %s210 = sphi 0, %s194
  $region4: #{encoder_residual_layer.1} parent=0 // loop_header_branch
    %16 = sbr.rel (%p14) target = $region8
  $region5: #{encoder_residual_layer.1} parent=0 // loop_body
    %s18 = ssub.s32 %s13, 1
    %s19 = ssub.s32 %s13, 2
    %s20 = sadd.s32 %s13, 1
    %s21 = ssub.s32 %s13, %s20
    %p22 = scmp.eq.s32.totalorder %s21, 0
    %s24 = sadd.s32 %s23, 1
    %s25 = scalar_select %p22, %s23, %s24
    %p28 = pneg %p22
    %p29 = scmp.eq.s32.totalorder %s13, 1
    %p30 = por %p28, %p29
    %p31 = scmp.ne.s32.totalorder %s23, %s26
    %p32 = scmp.eq.s32.totalorder %s13, 0
    %p33 = por %p31, %p32
    %p34 = scmp.ne.s32.totalorder %s23, %s26
    %p35 = scmp.eq.s32.totalorder %s18, 1
    %p36 = por %p34, %p35
    %p37 = scmp.ne.s32.totalorder %s26, %s27
    %p38 = scmp.eq.s32.totalorder %s18, 0
    %p39 = por %p37, %p38
    %p40 = scmp.ne.s32.totalorder %s26, %s27
    %p41 = scmp.eq.s32.totalorder %s19, 1
    %p42 = por %p40, %p41
    %p44 = scmp.ne.s32.totalorder %s27, %s43
    %p45 = scmp.eq.s32.totalorder %s19, 0
    %p46 = por %p44, %p45
    %s47 = ssub.s32 %s13, %s20
    %p48 = scmp.eq.s32.totalorder %s47, 0
    %s50 = sadd.s32 %s49, 1
    %s51 = scalar_select %p48, %s49, %s50
    %p54 = pneg %p48
    %p55 = scmp.eq.s32.totalorder %s13, 1
    %p56 = por %p54, %p55
    %p57 = scmp.ne.s32.totalorder %s49, %s52
    %p58 = scmp.eq.s32.totalorder %s13, 0
    %p59 = por %p57, %p58
    %p60 = scmp.ne.s32.totalorder %s49, %s52
    %p61 = scmp.eq.s32.totalorder %s18, 1
    %p62 = por %p60, %p61
    %p63 = scmp.ne.s32.totalorder %s52, %s53
    %p64 = scmp.eq.s32.totalorder %s18, 0
    %p65 = por %p63, %p64
    %p66 = scmp.ne.s32.totalorder %s52, %s53
    %p67 = scmp.eq.s32.totalorder %s19, 1
    %p68 = por %p66, %p67
    %p70 = scmp.ne.s32.totalorder %s53, %s69
    %p71 = scmp.eq.s32.totalorder %s19, 0
    %p72 = por %p70, %p71
    %s73 = ssub.s32 %s13, %s20
    %p74 = scmp.eq.s32.totalorder %s73, 0
    %s76 = sadd.s32 %s75, 1
    %s77 = scalar_select %p74, %s75, %s76
    %p80 = pneg %p74
    %p81 = scmp.eq.s32.totalorder %s13, 1
    %p82 = por %p80, %p81
    %p83 = scmp.ne.s32.totalorder %s75, %s78
    %p84 = scmp.eq.s32.totalorder %s13, 0
    %p85 = por %p83, %p84
    %p86 = scmp.ne.s32.totalorder %s75, %s78
    %p87 = scmp.eq.s32.totalorder %s18, 1
    %p88 = por %p86, %p87
    %p89 = scmp.ne.s32.totalorder %s78, %s79
    %p90 = scmp.eq.s32.totalorder %s18, 0
    %p91 = por %p89, %p90
    %p92 = scmp.ne.s32.totalorder %s78, %s79
    %p93 = scmp.eq.s32.totalorder %s19, 1
    %p94 = por %p92, %p93
    %p96 = scmp.ne.s32.totalorder %s79, %s95
    %p97 = scmp.eq.s32.totalorder %s19, 0
    %p98 = por %p96, %p97
    %s99 = ssub.s32 %s13, %s20
    %p100 = scmp.eq.s32.totalorder %s99, 0
    %s102 = sadd.s32 %s101, 1
    %s103 = scalar_select %p100, %s101, %s102
    %p106 = pneg %p100
    %p107 = scmp.eq.s32.totalorder %s13, 1
    %p108 = por %p106, %p107
    %p109 = scmp.ne.s32.totalorder %s101, %s104
    %p110 = scmp.eq.s32.totalorder %s13, 0
    %p111 = por %p109, %p110
    %p112 = scmp.ne.s32.totalorder %s101, %s104
    %p113 = scmp.eq.s32.totalorder %s18, 1
    %p114 = por %p112, %p113
    %p115 = scmp.ne.s32.totalorder %s104, %s105
    %p116 = scmp.eq.s32.totalorder %s18, 0
    %p117 = por %p115, %p116
    %p118 = scmp.ne.s32.totalorder %s104, %s105
    %p119 = scmp.eq.s32.totalorder %s19, 1
    %p120 = por %p118, %p119
    %p122 = scmp.ne.s32.totalorder %s105, %s121
    %p123 = scmp.eq.s32.totalorder %s19, 0
    %p124 = por %p122, %p123
    %s126 = sadd.s32 %s125, 1
    %p129 = scmp.eq.s32.totalorder %s13, 1
    %p130 = scmp.ne.s32.totalorder %s125, %s127
    %p131 = scmp.eq.s32.totalorder %s13, 0
    %p132 = por %p130, %p131
    %p133 = scmp.ne.s32.totalorder %s125, %s127
    %p134 = scmp.eq.s32.totalorder %s18, 1
    %p135 = por %p133, %p134
    %p136 = scmp.ne.s32.totalorder %s127, %s128
    %p137 = scmp.eq.s32.totalorder %s18, 0
    %p138 = por %p136, %p137
    %p139 = scmp.ne.s32.totalorder %s127, %s128
    %p140 = scmp.eq.s32.totalorder %s19, 1
    %p141 = por %p139, %p140
    %p143 = scmp.ne.s32.totalorder %s128, %s142
    %p144 = scmp.eq.s32.totalorder %s19, 0
    %p145 = por %p143, %p144
    %s147 = sadd.s32 %s146, 1
    %p150 = scmp.eq.s32.totalorder %s13, 1
    %p151 = scmp.ne.s32.totalorder %s146, %s148
    %p152 = scmp.eq.s32.totalorder %s13, 0
    %p153 = por %p151, %p152
    %p154 = scmp.ne.s32.totalorder %s146, %s148
    %p155 = scmp.eq.s32.totalorder %s18, 1
    %p156 = por %p154, %p155
    %p157 = scmp.ne.s32.totalorder %s148, %s149
    %p158 = scmp.eq.s32.totalorder %s18, 0
    %p159 = por %p157, %p158
    %p160 = scmp.ne.s32.totalorder %s148, %s149
    %p161 = scmp.eq.s32.totalorder %s19, 1
    %p162 = por %p160, %p161
    %p164 = scmp.ne.s32.totalorder %s149, %s163
    %p165 = scmp.eq.s32.totalorder %s19, 0
    %p166 = por %p164, %p165
    %s168 = sadd.s32 %s167, 1
    %p171 = scmp.eq.s32.totalorder %s13, 1
    %p172 = scmp.ne.s32.totalorder %s167, %s169
    %p173 = scmp.eq.s32.totalorder %s13, 0
    %p174 = por %p172, %p173
    %p175 = scmp.ne.s32.totalorder %s167, %s169
    %p176 = scmp.eq.s32.totalorder %s18, 1
    %p177 = por %p175, %p176
    %p178 = scmp.ne.s32.totalorder %s169, %s170
    %p179 = scmp.eq.s32.totalorder %s18, 0
    %p180 = por %p178, %p179
    %p181 = scmp.ne.s32.totalorder %s169, %s170
    %p182 = scmp.eq.s32.totalorder %s19, 1
    %p183 = por %p181, %p182
    %p185 = scmp.ne.s32.totalorder %s170, %s184
    %p186 = scmp.eq.s32.totalorder %s19, 0
    %p187 = por %p185, %p186
    %s188 = ssub.s32 %s13, %s20
    %p189 = scmp.eq.s32.totalorder %s188, 0
    %s191 = sadd.s32 %s190, 1
    %s192 = scalar_select %p189, %s190, %s191
    %p195 = pneg %p189
    %p196 = scmp.eq.s32.totalorder %s13, 1
    %p197 = por %p195, %p196
    %p198 = scmp.ne.s32.totalorder %s190, %s193
    %p199 = scmp.eq.s32.totalorder %s13, 0
    %p200 = por %p198, %p199
    %p201 = scmp.ne.s32.totalorder %s190, %s193
    %p202 = scmp.eq.s32.totalorder %s18, 1
    %p203 = por %p201, %p202
    %p204 = scmp.ne.s32.totalorder %s193, %s194
    %p205 = scmp.eq.s32.totalorder %s18, 0
    %p206 = por %p204, %p205
    %p207 = scmp.ne.s32.totalorder %s193, %s194
    %p208 = scmp.eq.s32.totalorder %s19, 1
    %p209 = por %p207, %p208
    %p211 = scmp.ne.s32.totalorder %s194, %s210
    %p212 = scmp.eq.s32.totalorder %s19, 0
    %p213 = por %p211, %p212
    %p214 = scmp.le.s32.totalorder 1, %s13
    %p215 = scmp.lt.s32.totalorder %s13, 3
    %p216 = pnand %p214, %p215
    %p217 = pneg %p216
    // Predicated region
    $region9: #{encoder_residual_layer.1} parent=5 // pred_check
      _
    $region10: #{encoder_residual_layer.1} parent=5 // pred_check_branch
      %219 = sbr.rel (%p216) target = $region12
    $region11: #{encoder_residual_layer.1} parent=5 // pred_region
      %s220 = ssub.s32 %s13, 1
      // Predicated region
      $region13: #{encoder_residual_layer.1} parent=11 // pred_check
        %p221 = pneg %p138
      $region14: #{encoder_residual_layer.1} parent=11 // pred_check_branch
        %223 = sbr.rel (%p221) target = $region16
      $region15: #{encoder_residual_layer.1} parent=11 // pred_region
        _
      $region16: #{encoder_residual_layer.1} parent=11 // pred_fallthru
        _
      // Predicated region
      $region17: #{encoder_residual_layer.1} parent=11 // pred_check
        %p224 = pneg %p159
      $region18: #{encoder_residual_layer.1} parent=11 // pred_check_branch
        %226 = sbr.rel (%p224) target = $region20
      $region19: #{encoder_residual_layer.1} parent=11 // pred_region
        _
      $region20: #{encoder_residual_layer.1} parent=11 // pred_fallthru
        _
      // Predicated region
      $region21: #{encoder_residual_layer.1} parent=11 // pred_check
        %p227 = pneg %p180
      $region22: #{encoder_residual_layer.1} parent=11 // pred_check_branch
        %229 = sbr.rel (%p227) target = $region24
      $region23: #{encoder_residual_layer.1} parent=11 // pred_region
        _
      $region24: #{encoder_residual_layer.1} parent=11 // pred_fallthru
        _
    $region12: #{encoder_residual_layer.1} parent=5 // pred_fallthru
      _
    %p230 = scmp.lt.s32.totalorder %s13, 2
    // Predicated region
    $region25: #{encoder_residual_layer.1} parent=5 // pred_check
      %p231 = pneg %p230
    $region26: #{encoder_residual_layer.1} parent=5 // pred_check_branch
      %233 = sbr.rel (%p231) target = $region28
    $region27: #{encoder_residual_layer.1} parent=5 // pred_region
      // Predicated region
      $region29: #{encoder_residual_layer.1} parent=27 // pred_check
        %p234 = pneg %p33
      $region30: #{encoder_residual_layer.1} parent=27 // pred_check_branch
        %236 = sbr.rel (%p234) target = $region32
      $region31: #{encoder_residual_layer.1} parent=27 // pred_region
        %p237 = scmp.lt.s32.totalorder %s13, 1
        %s238 = scalar_select %p237, %s13, 1
        %s239 = smul.addr %s238, 18
        %s240 = smul.addr %s239, 4
        %s241 = scalar_lea.vmem %s0, %s240
      $region32: #{encoder_residual_layer.1} parent=27 // pred_fallthru
        _
      // Predicated region
      $region33: #{encoder_residual_layer.1} parent=27 // pred_check
        %p242 = pneg %p59
      $region34: #{encoder_residual_layer.1} parent=27 // pred_check_branch
        %244 = sbr.rel (%p242) target = $region36
      $region35: #{encoder_residual_layer.1} parent=27 // pred_region
        %p245 = scmp.lt.s32.totalorder %s13, 1
        %s246 = scalar_select %p245, %s13, 1
        %s247 = smul.addr %s246, 18
        %s248 = smul.addr %s247, 4
        %s249 = scalar_lea.vmem %s1, %s248
      $region36: #{encoder_residual_layer.1} parent=27 // pred_fallthru
        _
      // Predicated region
      $region37: #{encoder_residual_layer.1} parent=27 // pred_check
        %p250 = pneg %p85
      $region38: #{encoder_residual_layer.1} parent=27 // pred_check_branch
        %252 = sbr.rel (%p250) target = $region40
      $region39: #{encoder_residual_layer.1} parent=27 // pred_region
        %p253 = scmp.lt.s32.totalorder %s13, 1
        %s254 = scalar_select %p253, %s13, 1
        %s255 = smul.addr %s254, 18
        %s256 = smul.addr %s255, 4
        %s257 = scalar_lea.vmem %s2, %s256
      $region40: #{encoder_residual_layer.1} parent=27 // pred_fallthru
        _
      // Predicated region
      $region41: #{encoder_residual_layer.1} parent=27 // pred_check
        %p258 = pneg %p111
      $region42: #{encoder_residual_layer.1} parent=27 // pred_check_branch
        %260 = sbr.rel (%p258) target = $region44
      $region43: #{encoder_residual_layer.1} parent=27 // pred_region
        %p261 = scmp.lt.s32.totalorder %s13, 1
        %s262 = scalar_select %p261, %s13, 1
        %s263 = smul.addr %s262, 18
        %s264 = smul.addr %s263, 4
        %s265 = scalar_lea.vmem %s3, %s264
      $region44: #{encoder_residual_layer.1} parent=27 // pred_fallthru
        _
    $region28: #{encoder_residual_layer.1} parent=5 // pred_fallthru
      _
    %p266 = scmp.le.s32.totalorder 1, %s13
    %p267 = scmp.lt.s32.totalorder %s13, 3
    %p268 = pnand %p266, %p267
    %p269 = pneg %p268
    // Predicated region
    $region45: #{encoder_residual_layer.1} parent=5 // pred_check
      _
    $region46: #{encoder_residual_layer.1} parent=5 // pred_check_branch
      %271 = sbr.rel (%p268) target = $region48
    $region47: #{encoder_residual_layer.1} parent=5 // pred_region
      %s272 = ssub.s32 %s13, 1
      %p273 = scmp.lt.s32.totalorder %s18, 1
      %s274 = scalar_select %p273, %s18, 1
      %s275 = smul.addr %s274, 18
      %s276 = smul.addr %s275, 4
      %s277 = scalar_lea.vmem %s0, %s276
      %p278 = pneg %p39
      %p279 = pneg %p36
      %p280 = scmp.lt.s32.totalorder %s18, 1
      %s281 = scalar_select %p280, %s18, 1
      %s282 = smul.addr %s281, 18
      %s283 = smul.addr %s282, 4
      %s284 = scalar_lea.vmem %s1, %s283
      %p285 = pneg %p65
      %p286 = pneg %p62
      %p287 = scmp.lt.s32.totalorder %s18, 1
      %s288 = scalar_select %p287, %s18, 1
      %s289 = smul.addr %s288, 18
      %s290 = smul.addr %s289, 4
      %s291 = scalar_lea.vmem %s2, %s290
      %p292 = pneg %p91
      %p293 = pneg %p88
      %p294 = scmp.lt.s32.totalorder %s18, 1
      %s295 = scalar_select %p294, %s18, 1
      %s296 = smul.addr %s295, 18
      %s297 = smul.addr %s296, 4
      %s298 = scalar_lea.vmem %s3, %s297
      %p299 = pneg %p117
      %p300 = pneg %p114
      %p301 = pneg %p138
      %p302 = pneg %p135
      %p303 = pneg %p159
      %p304 = pneg %p156
      %p305 = pneg %p180
      %p306 = pneg %p177
      %p307 = pneg %p206
      %p308 = pneg %p203
      %p309 = scmp.lt.s32.totalorder %s18, 1
      %s310 = scalar_select %p309, %s18, 1
      %s311 = smul.addr %s310, 8
      %s312 = smul.addr %s311, 8
      %s313 = scalar_lea.vmem %s7, %s312
      %p314 = scmp.lt.s32.totalorder %s18, 1
      %s315 = scalar_select %p314, %s18, 1
      %s316 = smul.addr %s315, 18
      %s317 = smul.addr %s316, 4
      %s318 = scalar_lea.vmem %s0, %s317
      %p319 = scmp.lt.s32.totalorder %s18, 1
      %s320 = scalar_select %p319, %s18, 1
      %s321 = smul.addr %s320, 18
      %s322 = smul.addr %s321, 4
      %s323 = scalar_lea.vmem %s1, %s322
      %p324 = scmp.lt.s32.totalorder %s18, 1
      %s325 = scalar_select %p324, %s18, 1
      %s326 = smul.addr %s325, 18
      %s327 = smul.addr %s326, 4
      %s328 = scalar_lea.vmem %s2, %s327
      %p329 = scmp.lt.s32.totalorder %s18, 1
      %s330 = scalar_select %p329, %s18, 1
      %s331 = smul.addr %s330, 18
      %s332 = smul.addr %s331, 4
      %s333 = scalar_lea.vmem %s3, %s332
      %p334 = scmp.lt.s32.totalorder %s18, 1
      %s335 = scalar_select %p334, %s18, 1
      %s336 = smul.addr %s335, 8
      %s337 = smul.addr %s336, 8
      %s338 = scalar_lea.vmem %s7, %s337
      %v340 = vld [vmem:[%s318] sm:$0xf]
      %v341 = vld [vmem:[%s318 + $0x8] sm:$0xf]
      %v342 = vld [vmem:[%s318 + $0x10] sm:$0xf]
      %v343 = vld [vmem:[%s318 + $0x18] sm:$0xf]
      %v344 = vld [vmem:[%s318 + $0x20] sm:$0xf]
      %v345 = vld [vmem:[%s318 + $0x28] sm:$0xf]
      %v346 = vld [vmem:[%s318 + $0x30] sm:$0xf]
      %v347 = vld [vmem:[%s318 + $0x38] sm:$0xf]
      %v348 = vld [vmem:[%s4] sm:$0x3]
      %v349 = vld [vmem:[%s323] sm:$0xf]
      %v350 = vld [vmem:[%s323 + $0x8] sm:$0xf]
      %v351 = vld [vmem:[%s323 + $0x10] sm:$0xf]
      %v352 = vld [vmem:[%s323 + $0x18] sm:$0xf]
      %v353 = vld [vmem:[%s323 + $0x20] sm:$0xf]
      %v354 = vld [vmem:[%s323 + $0x28] sm:$0xf]
      %v355 = vld [vmem:[%s323 + $0x30] sm:$0xf]
      %v356 = vld [vmem:[%s323 + $0x38] sm:$0xf]
      %s357 = scalar_lea.vmem %s4, 2
      %v358 = vld [vmem:[%s357] sm:$0x3]
      %v367 = vunpack.c.l.b16 %v349
      %v368 = vunpack.c.l.b16 %v350
      %v369 = vunpack.c.l.b16 %v351
      %v370 = vunpack.c.l.b16 %v352
      %v371 = vunpack.c.l.b16 %v353
      %v372 = vunpack.c.l.b16 %v354
      %v373 = vunpack.c.l.b16 %v355
      %v374 = vunpack.c.l.b16 %v356
      %v375 = vpack.c.b16 %v368, %v367
      %v376 = vpack.c.b16 %v370, %v369
      %v377 = vpack.c.b16 %v372, %v371
      %v378 = vpack.c.b16 %v374, %v373
      %vm379 = vcmask 31744
      %v381 = vsel %vm379, %v375, 0
      %v384 = vsel %vm379, %v376, 0
      %v387 = vsel %vm379, %v377, 0
      %v390 = vsel %vm379, %v378, 0
      %vm392 = vcmask 1041408
      %v394 = vsel %vm392, %v358, 0
      %396 = vmatprep.subr.bf16.mxu0 0
      %397 = vmatpush1.bf16.msra.mxu0 %v394
      %398 = vmatprep.subr.bf16.mxu0 0
      %399 = vmatpush1.bf16.msra.mxu0 0
      %400 = vmatprep.subr.bf16.mxu0 0
      %401 = vmatpush1.bf16.msra.mxu0 0
      %402 = vmatprep.subr.bf16.mxu0 0
      %403 = vmatpush1.bf16.msra.mxu0 0
      %404 = vmatprep.subr.bf16.mxu0 0
      %405 = vmatpush1.bf16.msra.mxu0 0
      %406 = vmatprep.subr.bf16.mxu0 0
      %407 = vmatpush1.bf16.msra.mxu0 0
      %408 = vmatprep.subr.bf16.mxu0 0
      %409 = vmatpush1.bf16.msra.mxu0 0
      %410 = vmatprep.subr.bf16.mxu0 0
      %411 = vmatpush1.bf16.msra.mxu0 0
      %412 = vmatprep.subr.bf16.mxu0 0
      %413 = vmatpush1.bf16.msra.mxu0 0
      %414 = vmatprep.subr.bf16.mxu0 0
      %415 = vmatpush1.bf16.msra.mxu0 0
      %416 = vmatprep.subr.bf16.mxu0 0
      %417 = vmatpush1.bf16.msra.mxu0 0
      %418 = vmatprep.subr.bf16.mxu0 0
      %419 = vmatpush1.bf16.msra.mxu0 0
      %420 = vmatprep.subr.bf16.mxu0 0
      %421 = vmatpush1.bf16.msra.mxu0 0
      %422 = vmatprep.subr.bf16.mxu0 0
      %423 = vmatpush1.bf16.msra.mxu0 0
      %424 = vmatprep.subr.bf16.mxu0 0
      %425 = vmatpush1.bf16.msra.mxu0 0
      %426 = vmatprep.subr.bf16.mxu0 0
      %427 = vmatpush1.bf16.msra.mxu0 0
      %428 = vmatprep.mubr.bf16.mxu0 0
      %429 = vmatmul.mubr.bf16.gmra.mrb[0].mxu0 %v381
      %v430 = vpop.f32.mrb[0].mxu0
      %v431 = vadd.f32 0.0, %v430
      %v432 = vpop.f32.mrb[0].mxu0
      %v433 = vpop.f32.mrb[0].mxu0
      %v434 = vadd.f32 0.0, %v433
      %v435 = vpop.f32.mrb[0].mxu0
      %436 = vmatprep.mubr.bf16.mxu0 0
      %437 = vmatmul.mubr.bf16.gmra.mrb[0].mxu0 %v384
      %v438 = vpop.f32.mrb[0].mxu0
      %v439 = vadd.f32 0.0, %v438
      %v440 = vpop.f32.mrb[0].mxu0
      %v441 = vpop.f32.mrb[0].mxu0
      %v442 = vadd.f32 0.0, %v441
      %v443 = vpop.f32.mrb[0].mxu0
      %444 = vmatprep.mubr.bf16.mxu0 0
      %445 = vmatmul.mubr.bf16.gmra.mrb[0].mxu0 %v387
      %v446 = vpop.f32.mrb[0].mxu0
      %v447 = vadd.f32 0.0, %v446
      %v448 = vpop.f32.mrb[0].mxu0
      %v449 = vpop.f32.mrb[0].mxu0
      %v450 = vadd.f32 0.0, %v449
      %v451 = vpop.f32.mrb[0].mxu0
      %452 = vmatprep.mubr.bf16.mxu0 0
      %453 = vmatmul.mubr.bf16.gmra.mrb[0].mxu0 %v390
      %v454 = vpop.f32.mrb[0].mxu0
      %v455 = vadd.f32 0.0, %v454
      %v456 = vpop.f32.mrb[0].mxu0
      %v457 = vpop.f32.mrb[0].mxu0
      %v458 = vadd.f32 0.0, %v457
      %v459 = vpop.f32.mrb[0].mxu0
      %460 = vdwg.mxu0
      %v469 = vunpack.c.l.b16 %v340
      %v470 = vunpack.c.l.b16 %v341
      %v471 = vunpack.c.l.b16 %v342
      %v472 = vunpack.c.l.b16 %v343
      %v473 = vunpack.c.l.b16 %v344
      %v474 = vunpack.c.l.b16 %v345
      %v475 = vunpack.c.l.b16 %v346
      %v476 = vunpack.c.l.b16 %v347
      %v477 = vpack.c.b16 %v470, %v469
      %v478 = vpack.c.b16 %v472, %v471
      %v479 = vpack.c.b16 %v474, %v473
      %v480 = vpack.c.b16 %v476, %v475
      %v482 = vsel %vm379, %v477, 0
      %v485 = vsel %vm379, %v478, 0
      %v488 = vsel %vm379, %v479, 0
      %v491 = vsel %vm379, %v480, 0
      %v494 = vsel %vm392, %v348, 0
      %496 = vmatprep.subr.bf16.mxu0 0
      %497 = vmatpush1.bf16.msra.mxu0 %v494
      %498 = vmatprep.subr.bf16.mxu0 0
      %499 = vmatpush1.bf16.msra.mxu0 0
      %500 = vmatprep.subr.bf16.mxu0 0
      %501 = vmatpush1.bf16.msra.mxu0 0
      %502 = vmatprep.subr.bf16.mxu0 0
      %503 = vmatpush1.bf16.msra.mxu0 0
      %504 = vmatprep.subr.bf16.mxu0 0
      %505 = vmatpush1.bf16.msra.mxu0 0
      %506 = vmatprep.subr.bf16.mxu0 0
      %507 = vmatpush1.bf16.msra.mxu0 0
      %508 = vmatprep.subr.bf16.mxu0 0
      %509 = vmatpush1.bf16.msra.mxu0 0
      %510 = vmatprep.subr.bf16.mxu0 0
      %511 = vmatpush1.bf16.msra.mxu0 0
      %512 = vmatprep.subr.bf16.mxu0 0
      %513 = vmatpush1.bf16.msra.mxu0 0
      %514 = vmatprep.subr.bf16.mxu0 0
      %515 = vmatpush1.bf16.msra.mxu0 0
      %516 = vmatprep.subr.bf16.mxu0 0
      %517 = vmatpush1.bf16.msra.mxu0 0
      %518 = vmatprep.subr.bf16.mxu0 0
      %519 = vmatpush1.bf16.msra.mxu0 0
      %520 = vmatprep.subr.bf16.mxu0 0
      %521 = vmatpush1.bf16.msra.mxu0 0
      %522 = vmatprep.subr.bf16.mxu0 0
      %523 = vmatpush1.bf16.msra.mxu0 0
      %524 = vmatprep.subr.bf16.mxu0 0
      %525 = vmatpush1.bf16.msra.mxu0 0
      %526 = vmatprep.subr.bf16.mxu0 0
      %527 = vmatpush1.bf16.msra.mxu0 0
      %528 = vmatprep.mubr.bf16.mxu0 0
      %529 = vmatmul.mubr.bf16.gmra.mrb[0].mxu0 %v482
      %v530 = vpop.f32.mrb[0].mxu0
      %v531 = vadd.f32 %v431, %v530
      %v532 = vpop.f32.mrb[0].mxu0
      %v533 = vpop.f32.mrb[0].mxu0
      %v534 = vadd.f32 %v434, %v533
      %v535 = vpop.f32.mrb[0].mxu0
      %536 = vmatprep.mubr.bf16.mxu0 0
      %537 = vmatmul.mubr.bf16.gmra.mrb[0].mxu0 %v485
      %v538 = vpop.f32.mrb[0].mxu0
      %v539 = vadd.f32 %v439, %v538
      %v540 = vpop.f32.mrb[0].mxu0
      %v541 = vpop.f32.mrb[0].mxu0
      %v542 = vadd.f32 %v442, %v541
      %v543 = vpop.f32.mrb[0].mxu0
      %544 = vmatprep.mubr.bf16.mxu0 0
      %545 = vmatmul.mubr.bf16.gmra.mrb[0].mxu0 %v488
      %v546 = vpop.f32.mrb[0].mxu0
      %v547 = vadd.f32 %v447, %v546
      %v548 = vpop.f32.mrb[0].mxu0
      %v549 = vpop.f32.mrb[0].mxu0
      %v550 = vadd.f32 %v450, %v549
      %v551 = vpop.f32.mrb[0].mxu0
      %552 = vmatprep.mubr.bf16.mxu0 0
      %553 = vmatmul.mubr.bf16.gmra.mrb[0].mxu0 %v491
      %v554 = vpop.f32.mrb[0].mxu0
      %v555 = vadd.f32 %v455, %v554
      %v556 = vpop.f32.mrb[0].mxu0
      %v557 = vpop.f32.mrb[0].mxu0
      %v558 = vadd.f32 %v458, %v557
      %v559 = vpop.f32.mrb[0].mxu0
      %560 = vdwg.mxu0
      %v561 = vld [vmem:[%s318] sm:$0xf]
      %v562 = vld [vmem:[%s318 + $0x4] sm:$0x1]
      %v563 = vld [vmem:[%s318 + $0x8] sm:$0xf]
      %v564 = vld [vmem:[%s318 + $0xc] sm:$0x1]
      %v565 = vld [vmem:[%s318 + $0x10] sm:$0xf]
      %v566 = vld [vmem:[%s318 + $0x14] sm:$0x1]
      %v567 = vld [vmem:[%s318 + $0x18] sm:$0xf]
      %v568 = vld [vmem:[%s318 + $0x1c] sm:$0x1]
      %v569 = vld [vmem:[%s318 + $0x20] sm:$0xf]
      %v570 = vld [vmem:[%s318 + $0x24] sm:$0x1]
      %v571 = vld [vmem:[%s318 + $0x28] sm:$0xf]
      %v572 = vld [vmem:[%s318 + $0x2c] sm:$0x1]
      %v573 = vld [vmem:[%s318 + $0x30] sm:$0xf]
      %v574 = vld [vmem:[%s318 + $0x34] sm:$0x1]
      %v575 = vld [vmem:[%s318 + $0x38] sm:$0xf]
      %v576 = vld [vmem:[%s318 + $0x3c] sm:$0x1]
      %vm577 = vsmask.f32 3328
      %vm578 = vsmask.f32 7440
      %vm579 = vmor %vm577, %vm578
      %v581 = vshrl.u32 %v561, 16
      %v583 = vrot.slane %v581, 4
      %v584 = vshll.u32 %v561, 16
      %v586 = vrot.slane %v584, 5
      %v587 = vor.u32 %v583, %v586
      %v588 = vrot.slane %v587, 4
      %v590 = vshll.u32 %v562, 16
      %v592 = vrot.slane %v590, 5
      %v593 = vsel %vm579, %v588, %v592
      %v595 = vshrl.u32 %v563, 16
      %v597 = vrot.slane %v595, 4
      %v598 = vshll.u32 %v563, 16
      %v600 = vrot.slane %v598, 5
      %v601 = vor.u32 %v597, %v600
      %v602 = vrot.slane %v601, 4
      %v604 = vshll.u32 %v564, 16
      %v606 = vrot.slane %v604, 5
      %v607 = vsel %vm579, %v602, %v606
      %v609 = vshrl.u32 %v565, 16
      %v611 = vrot.slane %v609, 4
      %v612 = vshll.u32 %v565, 16
      %v614 = vrot.slane %v612, 5
      %v615 = vor.u32 %v611, %v614
      %v616 = vrot.slane %v615, 4
      %v618 = vshll.u32 %v566, 16
      %v620 = vrot.slane %v618, 5
      %v621 = vsel %vm579, %v616, %v620
      %v623 = vshrl.u32 %v567, 16
      %v625 = vrot.slane %v623, 4
      %v626 = vshll.u32 %v567, 16
      %v628 = vrot.slane %v626, 5
      %v629 = vor.u32 %v625, %v628
      %v630 = vrot.slane %v629, 4
      %v632 = vshll.u32 %v568, 16
      %v634 = vrot.slane %v632, 5
      %v635 = vsel %vm579, %v630, %v634
      %v637 = vshrl.u32 %v569, 16
      %v639 = vrot.slane %v637, 4
      %v640 = vshll.u32 %v569, 16
      %v642 = vrot.slane %v640, 5
      %v643 = vor.u32 %v639, %v642
      %v644 = vrot.slane %v643, 4
      %v646 = vshll.u32 %v570, 16
      %v648 = vrot.slane %v646, 5
      %v649 = vsel %vm579, %v644, %v648
      %v651 = vshrl.u32 %v571, 16
      %v653 = vrot.slane %v651, 4
      %v654 = vshll.u32 %v571, 16
      %v656 = vrot.slane %v654, 5
      %v657 = vor.u32 %v653, %v656
      %v658 = vrot.slane %v657, 4
      %v660 = vshll.u32 %v572, 16
      %v662 = vrot.slane %v660, 5
      %v663 = vsel %vm579, %v658, %v662
      %v665 = vshrl.u32 %v573, 16
      %v667 = vrot.slane %v665, 4
      %v668 = vshll.u32 %v573, 16
      %v670 = vrot.slane %v668, 5
      %v671 = vor.u32 %v667, %v670
      %v672 = vrot.slane %v671, 4
      %v674 = vshll.u32 %v574, 16
      %v676 = vrot.slane %v674, 5
      %v677 = vsel %vm579, %v672, %v676
      %v679 = vshrl.u32 %v575, 16
      %v681 = vrot.slane %v679, 4
      %v682 = vshll.u32 %v575, 16
      %v684 = vrot.slane %v682, 5
      %v685 = vor.u32 %v681, %v684
      %v686 = vrot.slane %v685, 4
      %v688 = vshll.u32 %v576, 16
      %v690 = vrot.slane %v688, 5
      %v691 = vsel %vm579, %v686, %v690
      %s692 = scalar_lea.vmem %s4, 4
      %v693 = vld [vmem:[%s692] sm:$0x3]
      %v694 = vunpack.c.l.b16 %v593
      %v695 = vunpack.c.l.b16 %v607
      %v696 = vunpack.c.l.b16 %v621
      %v697 = vunpack.c.l.b16 %v635
      %v698 = vunpack.c.l.b16 %v649
      %v699 = vunpack.c.l.b16 %v663
      %v700 = vunpack.c.l.b16 %v677
      %v701 = vunpack.c.l.b16 %v691
      %v702 = vpack.c.b16 %v695, %v694
      %v703 = vpack.c.b16 %v697, %v696
      %v704 = vpack.c.b16 %v699, %v698
      %v705 = vpack.c.b16 %v701, %v700
      %v707 = vsel %vm379, %v702, 0
      %v710 = vsel %vm379, %v703, 0
      %v713 = vsel %vm379, %v704, 0
      %v716 = vsel %vm379, %v705, 0
      %v719 = vsel %vm392, %v693, 0
      %721 = vmatprep.subr.bf16.mxu0 0
      %722 = vmatpush1.bf16.msra.mxu0 %v719
      %723 = vmatprep.subr.bf16.mxu0 0
      %724 = vmatpush1.bf16.msra.mxu0 0
      %725 = vmatprep.subr.bf16.mxu0 0
      %726 = vmatpush1.bf16.msra.mxu0 0
      %727 = vmatprep.subr.bf16.mxu0 0
      %728 = vmatpush1.bf16.msra.mxu0 0
      %729 = vmatprep.subr.bf16.mxu0 0
      %730 = vmatpush1.bf16.msra.mxu0 0
      %731 = vmatprep.subr.bf16.mxu0 0
      %732 = vmatpush1.bf16.msra.mxu0 0
      %733 = vmatprep.subr.bf16.mxu0 0
      %734 = vmatpush1.bf16.msra.mxu0 0
      %735 = vmatprep.subr.bf16.mxu0 0
      %736 = vmatpush1.bf16.msra.mxu0 0
      %737 = vmatprep.subr.bf16.mxu0 0
      %738 = vmatpush1.bf16.msra.mxu0 0
      %739 = vmatprep.subr.bf16.mxu0 0
      %740 = vmatpush1.bf16.msra.mxu0 0
      %741 = vmatprep.subr.bf16.mxu0 0
      %742 = vmatpush1.bf16.msra.mxu0 0
      %743 = vmatprep.subr.bf16.mxu0 0
      %744 = vmatpush1.bf16.msra.mxu0 0
      %745 = vmatprep.subr.bf16.mxu0 0
      %746 = vmatpush1.bf16.msra.mxu0 0
      %747 = vmatprep.subr.bf16.mxu0 0
      %748 = vmatpush1.bf16.msra.mxu0 0
      %749 = vmatprep.subr.bf16.mxu0 0
      %750 = vmatpush1.bf16.msra.mxu0 0
      %751 = vmatprep.subr.bf16.mxu0 0
      %752 = vmatpush1.bf16.msra.mxu0 0
      %753 = vmatprep.mubr.bf16.mxu0 0
      %754 = vmatmul.mubr.bf16.gmra.mrb[0].mxu0 %v707
      %v755 = vpop.f32.mrb[0].mxu0
      %v756 = vadd.f32 0.0, %v755
      %v757 = vpop.f32.mrb[0].mxu0
      %v758 = vpop.f32.mrb[0].mxu0
      %v759 = vadd.f32 0.0, %v758
      %v760 = vpop.f32.mrb[0].mxu0
      %761 = vmatprep.mubr.bf16.mxu0 0
      %762 = vmatmul.mubr.bf16.gmra.mrb[0].mxu0 %v710
      %v763 = vpop.f32.mrb[0].mxu0
      %v764 = vadd.f32 0.0, %v763
      %v765 = vpop.f32.mrb[0].mxu0
      %v766 = vpop.f32.mrb[0].mxu0
      %v767 = vadd.f32 0.0, %v766
      %v768 = vpop.f32.mrb[0].mxu0
      %769 = vmatprep.mubr.bf16.mxu0 0
      %770 = vmatmul.mubr.bf16.gmra.mrb[0].mxu0 %v713
      %v771 = vpop.f32.mrb[0].mxu0
      %v772 = vadd.f32 0.0, %v771
      %v773 = vpop.f32.mrb[0].mxu0
      %v774 = vpop.f32.mrb[0].mxu0
      %v775 = vadd.f32 0.0, %v774
      %v776 = vpop.f32.mrb[0].mxu0
      %777 = vmatprep.mubr.bf16.mxu0 0
      %778 = vmatmul.mubr.bf16.gmra.mrb[0].mxu0 %v716
      %v779 = vpop.f32.mrb[0].mxu0
      %v780 = vadd.f32 0.0, %v779
      %v781 = vpop.f32.mrb[0].mxu0
      %v782 = vpop.f32.mrb[0].mxu0
      %v783 = vadd.f32 0.0, %v782
      %v784 = vpop.f32.mrb[0].mxu0
      %785 = vdwg.mxu0
      %v786 = vadd.f32 %v531, %v756
      %v787 = vadd.f32 %v534, %v759
      %v788 = vadd.f32 %v539, %v764
      %v789 = vadd.f32 %v542, %v767
      %v790 = vadd.f32 %v547, %v772
      %v791 = vadd.f32 %v550, %v775
      %v792 = vadd.f32 %v555, %v780
      %v793 = vadd.f32 %v558, %v783
      %v794 = vld [vmem:[%s328] sm:$0xf]
      %v795 = vld [vmem:[%s328 + $0x8] sm:$0xf]
      %v796 = vld [vmem:[%s328 + $0x10] sm:$0xf]
      %v797 = vld [vmem:[%s328 + $0x18] sm:$0xf]
      %v798 = vld [vmem:[%s328 + $0x20] sm:$0xf]
      %v799 = vld [vmem:[%s328 + $0x28] sm:$0xf]
      %v800 = vld [vmem:[%s328 + $0x30] sm:$0xf]
      %v801 = vld [vmem:[%s328 + $0x38] sm:$0xf]
      %s802 = scalar_lea.vmem %s4, 6
      %v803 = vld [vmem:[%s802] sm:$0x3]
      %v812 = vunpack.c.l.b16 %v794
      %v813 = vunpack.c.l.b16 %v795
      %v814 = vunpack.c.l.b16 %v796
      %v815 = vunpack.c.l.b16 %v797
      %v816 = vunpack.c.l.b16 %v798
      %v817 = vunpack.c.l.b16 %v799
      %v818 = vunpack.c.l.b16 %v800
      %v819 = vunpack.c.l.b16 %v801
      %v820 = vpack.c.b16 %v813, %v812
      %v821 = vpack.c.b16 %v815, %v814
      %v822 = vpack.c.b16 %v817, %v816
      %v823 = vpack.c.b16 %v819, %v818
      %v825 = vsel %vm379, %v820, 0
      %v828 = vsel %vm379, %v821, 0
      %v831 = vsel %vm379, %v822, 0
      %v834 = vsel %vm379, %v823, 0
      %v837 = vsel %vm392, %v803, 0
      %839 = vmatprep.subr.bf16.mxu0 0
      %840 = vmatpush1.bf16.msra.mxu0 %v837
      %841 = vmatprep.subr.bf16.mxu0 0
      %842 = vmatpush1.bf16.msra.mxu0 0
      %843 = vmatprep.subr.bf16.mxu0 0
      %844 = vmatpush1.bf16.msra.mxu0 0
      %845 = vmatprep.subr.bf16.mxu0 0
      %846 = vmatpush1.bf16.msra.mxu0 0
      %847 = vmatprep.subr.bf16.mxu0 0
      %848 = vmatpush1.bf16.msra.mxu0 0
      %849 = vmatprep.subr.bf16.mxu0 0
      %850 = vmatpush1.bf16.msra.mxu0 0
      %851 = vmatprep.subr.bf16.mxu0 0
      %852 = vmatpush1.bf16.msra.mxu0 0
      %853 = vmatprep.subr.bf16.mxu0 0
      %854 = vmatpush1.bf16.msra.mxu0 0
      %855 = vmatprep.subr.bf16.mxu0 0
      %856 = vmatpush1.bf16.msra.mxu0 0
      %857 = vmatprep.subr.bf16.mxu0 0
      %858 = vmatpush1.bf16.msra.mxu0 0
      %859 = vmatprep.subr.bf16.mxu0 0
      %860 = vmatpush1.bf16.msra.mxu0 0
      %861 = vmatprep.subr.bf16.mxu0 0
      %862 = vmatpush1.bf16.msra.mxu0 0
      %863 = vmatprep.subr.bf16.mxu0 0
      %864 = vmatpush1.bf16.msra.mxu0 0
      %865 = vmatprep.subr.bf16.mxu0 0
      %866 = vmatpush1.bf16.msra.mxu0 0
      %867 = vmatprep.subr.bf16.mxu0 0
      %868 = vmatpush1.bf16.msra.mxu0 0
      %869 = vmatprep.subr.bf16.mxu0 0
      %870 = vmatpush1.bf16.msra.mxu0 0
      %871 = vmatprep.mubr.bf16.mxu0 0
      %872 = vmatmul.mubr.bf16.gmra.mrb[0].mxu0 %v825
      %v873 = vpop.f32.mrb[0].mxu0
      %v874 = vadd.f32 0.0, %v873
      %v875 = vpop.f32.mrb[0].mxu0
      %v876 = vpop.f32.mrb[0].mxu0
      %v877 = vadd.f32 0.0, %v876
      %v878 = vpop.f32.mrb[0].mxu0
      %879 = vmatprep.mubr.bf16.mxu0 0
      %880 = vmatmul.mubr.bf16.gmra.mrb[0].mxu0 %v828
      %v881 = vpop.f32.mrb[0].mxu0
      %v882 = vadd.f32 0.0, %v881
      %v883 = vpop.f32.mrb[0].mxu0
      %v884 = vpop.f32.mrb[0].mxu0
      %v885 = vadd.f32 0.0, %v884
      %v886 = vpop.f32.mrb[0].mxu0
      %887 = vmatprep.mubr.bf16.mxu0 0
      %888 = vmatmul.mubr.bf16.gmra.mrb[0].mxu0 %v831
      %v889 = vpop.f32.mrb[0].mxu0
      %v890 = vadd.f32 0.0, %v889
      %v891 = vpop.f32.mrb[0].mxu0
      %v892 = vpop.f32.mrb[0].mxu0
      %v893 = vadd.f32 0.0, %v892
      %v894 = vpop.f32.mrb[0].mxu0
      %895 = vmatprep.mubr.bf16.mxu0 0
      %896 = vmatmul.mubr.bf16.gmra.mrb[0].mxu0 %v834
      %v897 = vpop.f32.mrb[0].mxu0
      %v898 = vadd.f32 0.0, %v897
      %v899 = vpop.f32.mrb[0].mxu0
      %v900 = vpop.f32.mrb[0].mxu0
      %v901 = vadd.f32 0.0, %v900
      %v902 = vpop.f32.mrb[0].mxu0
      %903 = vdwg.mxu0
      %v904 = vadd.f32 %v786, %v874
      %v905 = vadd.f32 %v787, %v877
      %v906 = vadd.f32 %v788, %v882
      %v907 = vadd.f32 %v789, %v885
      %v908 = vadd.f32 %v790, %v890
      %v909 = vadd.f32 %v791, %v893
      %v910 = vadd.f32 %v792, %v898
      %v911 = vadd.f32 %v793, %v901
      %v912 = vld [vmem:[%s333] sm:$0xf]
      %v913 = vld [vmem:[%s333 + $0x8] sm:$0xf]
      %v914 = vld [vmem:[%s333 + $0x10] sm:$0xf]
      %v915 = vld [vmem:[%s333 + $0x18] sm:$0xf]
      %v916 = vld [vmem:[%s333 + $0x20] sm:$0xf]
      %v917 = vld [vmem:[%s333 + $0x28] sm:$0xf]
      %v918 = vld [vmem:[%s333 + $0x30] sm:$0xf]
      %v919 = vld [vmem:[%s333 + $0x38] sm:$0xf]
      %s920 = scalar_lea.vmem %s4, 8
      %v921 = vld [vmem:[%s920] sm:$0x3]
      %v930 = vunpack.c.l.b16 %v912
      %v931 = vunpack.c.l.b16 %v913
      %v932 = vunpack.c.l.b16 %v914
      %v933 = vunpack.c.l.b16 %v915
      %v934 = vunpack.c.l.b16 %v916
      %v935 = vunpack.c.l.b16 %v917
      %v936 = vunpack.c.l.b16 %v918
      %v937 = vunpack.c.l.b16 %v919
      %v938 = vpack.c.b16 %v931, %v930
      %v939 = vpack.c.b16 %v933, %v932
      %v940 = vpack.c.b16 %v935, %v934
      %v941 = vpack.c.b16 %v937, %v936
      %v943 = vsel %vm379, %v938, 0
      %v946 = vsel %vm379, %v939, 0
      %v949 = vsel %vm379, %v940, 0
      %v952 = vsel %vm379, %v941, 0
      %v955 = vsel %vm392, %v921, 0
      %957 = vmatprep.subr.bf16.mxu0 0
      %958 = vmatpush1.bf16.msra.mxu0 %v955
      %959 = vmatprep.subr.bf16.mxu0 0
      %960 = vmatpush1.bf16.msra.mxu0 0
      %961 = vmatprep.subr.bf16.mxu0 0
      %962 = vmatpush1.bf16.msra.mxu0 0
      %963 = vmatprep.subr.bf16.mxu0 0
      %964 = vmatpush1.bf16.msra.mxu0 0
      %965 = vmatprep.subr.bf16.mxu0 0
      %966 = vmatpush1.bf16.msra.mxu0 0
      %967 = vmatprep.subr.bf16.mxu0 0
      %968 = vmatpush1.bf16.msra.mxu0 0
      %969 = vmatprep.subr.bf16.mxu0 0
      %970 = vmatpush1.bf16.msra.mxu0 0
      %971 = vmatprep.subr.bf16.mxu0 0
      %972 = vmatpush1.bf16.msra.mxu0 0
      %973 = vmatprep.subr.bf16.mxu0 0
      %974 = vmatpush1.bf16.msra.mxu0 0
      %975 = vmatprep.subr.bf16.mxu0 0
      %976 = vmatpush1.bf16.msra.mxu0 0
      %977 = vmatprep.subr.bf16.mxu0 0
      %978 = vmatpush1.bf16.msra.mxu0 0
      %979 = vmatprep.subr.bf16.mxu0 0
      %980 = vmatpush1.bf16.msra.mxu0 0
      %981 = vmatprep.subr.bf16.mxu0 0
      %982 = vmatpush1.bf16.msra.mxu0 0
      %983 = vmatprep.subr.bf16.mxu0 0
      %984 = vmatpush1.bf16.msra.mxu0 0
      %985 = vmatprep.subr.bf16.mxu0 0
      %986 = vmatpush1.bf16.msra.mxu0 0
      %987 = vmatprep.subr.bf16.mxu0 0
      %988 = vmatpush1.bf16.msra.mxu0 0
      %989 = vmatprep.mubr.bf16.mxu0 0
      %990 = vmatmul.mubr.bf16.gmra.mrb[0].mxu0 %v943
      %v991 = vpop.f32.mrb[0].mxu0
      %v992 = vadd.f32 0.0, %v991
      %v993 = vpop.f32.mrb[0].mxu0
      %v994 = vpop.f32.mrb[0].mxu0
      %v995 = vadd.f32 0.0, %v994
      %v996 = vpop.f32.mrb[0].mxu0
      %997 = vmatprep.mubr.bf16.mxu0 0
      %998 = vmatmul.mubr.bf16.gmra.mrb[0].mxu0 %v946
      %v999 = vpop.f32.mrb[0].mxu0
      %v1000 = vadd.f32 0.0, %v999
      %v1001 = vpop.f32.mrb[0].mxu0
      %v1002 = vpop.f32.mrb[0].mxu0
      %v1003 = vadd.f32 0.0, %v1002
      %v1004 = vpop.f32.mrb[0].mxu0
      %1005 = vmatprep.mubr.bf16.mxu0 0
      %1006 = vmatmul.mubr.bf16.gmra.mrb[0].mxu0 %v949
      %v1007 = vpop.f32.mrb[0].mxu0
      %v1008 = vadd.f32 0.0, %v1007
      %v1009 = vpop.f32.mrb[0].mxu0
      %v1010 = vpop.f32.mrb[0].mxu0
      %v1011 = vadd.f32 0.0, %v1010
      %v1012 = vpop.f32.mrb[0].mxu0
      %1013 = vmatprep.mubr.bf16.mxu0 0
      %1014 = vmatmul.mubr.bf16.gmra.mrb[0].mxu0 %v952
      %v1015 = vpop.f32.mrb[0].mxu0
      %v1016 = vadd.f32 0.0, %v1015
      %v1017 = vpop.f32.mrb[0].mxu0
      %v1018 = vpop.f32.mrb[0].mxu0
      %v1019 = vadd.f32 0.0, %v1018
      %v1020 = vpop.f32.mrb[0].mxu0
      %1021 = vdwg.mxu0
      %v1022 = vadd.f32 %v904, %v992
      %v1023 = vadd.f32 %v905, %v995
      %v1024 = vadd.f32 %v906, %v1000
      %v1025 = vadd.f32 %v907, %v1003
      %v1026 = vadd.f32 %v908, %v1008
      %v1027 = vadd.f32 %v909, %v1011
      %v1028 = vadd.f32 %v910, %v1016
      %v1029 = vadd.f32 %v911, %v1019
      %v1030 = vld [vmem:[%s328] sm:$0xf]
      %v1031 = vld [vmem:[%s328 + $0x4] sm:$0x1]
      %v1032 = vld [vmem:[%s328 + $0x8] sm:$0xf]
      %v1033 = vld [vmem:[%s328 + $0xc] sm:$0x1]
      %v1034 = vld [vmem:[%s328 + $0x10] sm:$0xf]
      %v1035 = vld [vmem:[%s328 + $0x14] sm:$0x1]
      %v1036 = vld [vmem:[%s328 + $0x18] sm:$0xf]
      %v1037 = vld [vmem:[%s328 + $0x1c] sm:$0x1]
      %v1038 = vld [vmem:[%s328 + $0x20] sm:$0xf]
      %v1039 = vld [vmem:[%s328 + $0x24] sm:$0x1]
      %v1040 = vld [vmem:[%s328 + $0x28] sm:$0xf]
      %v1041 = vld [vmem:[%s328 + $0x2c] sm:$0x1]
      %v1042 = vld [vmem:[%s328 + $0x30] sm:$0xf]
      %v1043 = vld [vmem:[%s328 + $0x34] sm:$0x1]
      %v1044 = vld [vmem:[%s328 + $0x38] sm:$0xf]
      %v1045 = vld [vmem:[%s328 + $0x3c] sm:$0x1]
      %v1047 = vshrl.u32 %v1030, 16
      %v1049 = vrot.slane %v1047, 4
      %v1050 = vshll.u32 %v1030, 16
      %v1052 = vrot.slane %v1050, 5
      %v1053 = vor.u32 %v1049, %v1052
      %v1054 = vrot.slane %v1053, 4
      %v1056 = vshll.u32 %v1031, 16
      %v1058 = vrot.slane %v1056, 5
      %v1059 = vsel %vm579, %v1054, %v1058
      %v1061 = vshrl.u32 %v1032, 16
      %v1063 = vrot.slane %v1061, 4
      %v1064 = vshll.u32 %v1032, 16
      %v1066 = vrot.slane %v1064, 5
      %v1067 = vor.u32 %v1063, %v1066
      %v1068 = vrot.slane %v1067, 4
      %v1070 = vshll.u32 %v1033, 16
      %v1072 = vrot.slane %v1070, 5
      %v1073 = vsel %vm579, %v1068, %v1072
      %v1075 = vshrl.u32 %v1034, 16
      %v1077 = vrot.slane %v1075, 4
      %v1078 = vshll.u32 %v1034, 16
      %v1080 = vrot.slane %v1078, 5
      %v1081 = vor.u32 %v1077, %v1080
      %v1082 = vrot.slane %v1081, 4
      %v1084 = vshll.u32 %v1035, 16
      %v1086 = vrot.slane %v1084, 5
      %v1087 = vsel %vm579, %v1082, %v1086
      %v1089 = vshrl.u32 %v1036, 16
      %v1091 = vrot.slane %v1089, 4
      %v1092 = vshll.u32 %v1036, 16
      %v1094 = vrot.slane %v1092, 5
      %v1095 = vor.u32 %v1091, %v1094
      %v1096 = vrot.slane %v1095, 4
      %v1098 = vshll.u32 %v1037, 16
      %v1100 = vrot.slane %v1098, 5
      %v1101 = vsel %vm579, %v1096, %v1100
      %v1103 = vshrl.u32 %v1038, 16
      %v1105 = vrot.slane %v1103, 4
      %v1106 = vshll.u32 %v1038, 16
      %v1108 = vrot.slane %v1106, 5
      %v1109 = vor.u32 %v1105, %v1108
      %v1110 = vrot.slane %v1109, 4
      %v1112 = vshll.u32 %v1039, 16
      %v1114 = vrot.slane %v1112, 5
      %v1115 = vsel %vm579, %v1110, %v1114
      %v1117 = vshrl.u32 %v1040, 16
      %v1119 = vrot.slane %v1117, 4
      %v1120 = vshll.u32 %v1040, 16
      %v1122 = vrot.slane %v1120, 5
      %v1123 = vor.u32 %v1119, %v1122
      %v1124 = vrot.slane %v1123, 4
      %v1126 = vshll.u32 %v1041, 16
      %v1128 = vrot.slane %v1126, 5
      %v1129 = vsel %vm579, %v1124, %v1128
      %v1131 = vshrl.u32 %v1042, 16
      %v1133 = vrot.slane %v1131, 4
      %v1134 = vshll.u32 %v1042, 16
      %v1136 = vrot.slane %v1134, 5
      %v1137 = vor.u32 %v1133, %v1136
      %v1138 = vrot.slane %v1137, 4
      %v1140 = vshll.u32 %v1043, 16
      %v1142 = vrot.slane %v1140, 5
      %v1143 = vsel %vm579, %v1138, %v1142
      %v1145 = vshrl.u32 %v1044, 16
      %v1147 = vrot.slane %v1145, 4
      %v1148 = vshll.u32 %v1044, 16
      %v1150 = vrot.slane %v1148, 5
      %v1151 = vor.u32 %v1147, %v1150
      %v1152 = vrot.slane %v1151, 4
      %v1154 = vshll.u32 %v1045, 16
      %v1156 = vrot.slane %v1154, 5
      %v1157 = vsel %vm579, %v1152, %v1156
      %s1158 = scalar_lea.vmem %s4, 10
      %v1159 = vld [vmem:[%s1158] sm:$0x3]
      %v1160 = vunpack.c.l.b16 %v1059
      %v1161 = vunpack.c.l.b16 %v1073
      %v1162 = vunpack.c.l.b16 %v1087
      %v1163 = vunpack.c.l.b16 %v1101
      %v1164 = vunpack.c.l.b16 %v1115
      %v1165 = vunpack.c.l.b16 %v1129
      %v1166 = vunpack.c.l.b16 %v1143
      %v1167 = vunpack.c.l.b16 %v1157
      %v1168 = vpack.c.b16 %v1161, %v1160
      %v1169 = vpack.c.b16 %v1163, %v1162
      %v1170 = vpack.c.b16 %v1165, %v1164
      %v1171 = vpack.c.b16 %v1167, %v1166
      %v1173 = vsel %vm379, %v1168, 0
      %v1176 = vsel %vm379, %v1169, 0
      %v1179 = vsel %vm379, %v1170, 0
      %v1182 = vsel %vm379, %v1171, 0
      %v1185 = vsel %vm392, %v1159, 0
      %1187 = vmatprep.subr.bf16.mxu0 0
      %1188 = vmatpush1.bf16.msra.mxu0 %v1185
      %1189 = vmatprep.subr.bf16.mxu0 0
      %1190 = vmatpush1.bf16.msra.mxu0 0
      %1191 = vmatprep.subr.bf16.mxu0 0
      %1192 = vmatpush1.bf16.msra.mxu0 0
      %1193 = vmatprep.subr.bf16.mxu0 0
      %1194 = vmatpush1.bf16.msra.mxu0 0
      %1195 = vmatprep.subr.bf16.mxu0 0
      %1196 = vmatpush1.bf16.msra.mxu0 0
      %1197 = vmatprep.subr.bf16.mxu0 0
      %1198 = vmatpush1.bf16.msra.mxu0 0
      %1199 = vmatprep.subr.bf16.mxu0 0
      %1200 = vmatpush1.bf16.msra.mxu0 0
      %1201 = vmatprep.subr.bf16.mxu0 0
      %1202 = vmatpush1.bf16.msra.mxu0 0
      %1203 = vmatprep.subr.bf16.mxu0 0
      %1204 = vmatpush1.bf16.msra.mxu0 0
      %1205 = vmatprep.subr.bf16.mxu0 0
      %1206 = vmatpush1.bf16.msra.mxu0 0
      %1207 = vmatprep.subr.bf16.mxu0 0
      %1208 = vmatpush1.bf16.msra.mxu0 0
      %1209 = vmatprep.subr.bf16.mxu0 0
      %1210 = vmatpush1.bf16.msra.mxu0 0
      %1211 = vmatprep.subr.bf16.mxu0 0
      %1212 = vmatpush1.bf16.msra.mxu0 0
      %1213 = vmatprep.subr.bf16.mxu0 0
      %1214 = vmatpush1.bf16.msra.mxu0 0
      %1215 = vmatprep.subr.bf16.mxu0 0
      %1216 = vmatpush1.bf16.msra.mxu0 0
      %1217 = vmatprep.subr.bf16.mxu0 0
      %1218 = vmatpush1.bf16.msra.mxu0 0
      %1219 = vmatprep.mubr.bf16.mxu0 0
      %1220 = vmatmul.mubr.bf16.gmra.mrb[0].mxu0 %v1173
      %v1221 = vpop.f32.mrb[0].mxu0
      %v1222 = vadd.f32 0.0, %v1221
      %v1223 = vpop.f32.mrb[0].mxu0
      %v1224 = vpop.f32.mrb[0].mxu0
      %v1225 = vadd.f32 0.0, %v1224
      %v1226 = vpop.f32.mrb[0].mxu0
      %1227 = vmatprep.mubr.bf16.mxu0 0
      %1228 = vmatmul.mubr.bf16.gmra.mrb[0].mxu0 %v1176
      %v1229 = vpop.f32.mrb[0].mxu0
      %v1230 = vadd.f32 0.0, %v1229
      %v1231 = vpop.f32.mrb[0].mxu0
      %v1232 = vpop.f32.mrb[0].mxu0
      %v1233 = vadd.f32 0.0, %v1232
      %v1234 = vpop.f32.mrb[0].mxu0
      %1235 = vmatprep.mubr.bf16.mxu0 0
      %1236 = vmatmul.mubr.bf16.gmra.mrb[0].mxu0 %v1179
      %v1237 = vpop.f32.mrb[0].mxu0
      %v1238 = vadd.f32 0.0, %v1237
      %v1239 = vpop.f32.mrb[0].mxu0
      %v1240 = vpop.f32.mrb[0].mxu0
      %v1241 = vadd.f32 0.0, %v1240
      %v1242 = vpop.f32.mrb[0].mxu0
      %1243 = vmatprep.mubr.bf16.mxu0 0
      %1244 = vmatmul.mubr.bf16.gmra.mrb[0].mxu0 %v1182
      %v1245 = vpop.f32.mrb[0].mxu0
      %v1246 = vadd.f32 0.0, %v1245
      %v1247 = vpop.f32.mrb[0].mxu0
      %v1248 = vpop.f32.mrb[0].mxu0
      %v1249 = vadd.f32 0.0, %v1248
      %v1250 = vpop.f32.mrb[0].mxu0
      %1251 = vdwg.mxu0
      %v1252 = vadd.f32 %v1022, %v1222
      %v1253 = vadd.f32 %v1023, %v1225
      %v1254 = vadd.f32 %v1024, %v1230
      %v1255 = vadd.f32 %v1025, %v1233
      %v1256 = vadd.f32 %v1026, %v1238
      %v1257 = vadd.f32 %v1027, %v1241
      %v1258 = vadd.f32 %v1028, %v1246
      %v1259 = vadd.f32 %v1029, %v1249
      %s1260 = scalar_lea.vmem %s318, 8
      %v1261 = vld [vmem:[%s1260] sm:$0xf]
      %v1262 = vld [vmem:[%s1260 + $0x8] sm:$0xf]
      %v1263 = vld [vmem:[%s1260 + $0x10] sm:$0xf]
      %v1264 = vld [vmem:[%s1260 + $0x18] sm:$0xf]
      %v1265 = vld [vmem:[%s1260 + $0x20] sm:$0xf]
      %v1266 = vld [vmem:[%s1260 + $0x28] sm:$0xf]
      %v1267 = vld [vmem:[%s1260 + $0x30] sm:$0xf]
      %v1268 = vld [vmem:[%s1260 + $0x38] sm:$0xf]
      %s1269 = scalar_lea.vmem %s4, 12
      %v1270 = vld [vmem:[%s1269] sm:$0x3]
      %v1279 = vunpack.c.l.b16 %v1261
      %v1280 = vunpack.c.l.b16 %v1262
      %v1281 = vunpack.c.l.b16 %v1263
      %v1282 = vunpack.c.l.b16 %v1264
      %v1283 = vunpack.c.l.b16 %v1265
      %v1284 = vunpack.c.l.b16 %v1266
      %v1285 = vunpack.c.l.b16 %v1267
      %v1286 = vunpack.c.l.b16 %v1268
      %v1287 = vpack.c.b16 %v1280, %v1279
      %v1288 = vpack.c.b16 %v1282, %v1281
      %v1289 = vpack.c.b16 %v1284, %v1283
      %v1290 = vpack.c.b16 %v1286, %v1285
      %v1292 = vsel %vm379, %v1287, 0
      %v1295 = vsel %vm379, %v1288, 0
      %v1298 = vsel %vm379, %v1289, 0
      %v1301 = vsel %vm379, %v1290, 0
      %v1304 = vsel %vm392, %v1270, 0
      %1306 = vmatprep.subr.bf16.mxu0 0
      %1307 = vmatpush1.bf16.msra.mxu0 %v1304
      %1308 = vmatprep.subr.bf16.mxu0 0
      %1309 = vmatpush1.bf16.msra.mxu0 0
      %1310 = vmatprep.subr.bf16.mxu0 0
      %1311 = vmatpush1.bf16.msra.mxu0 0
      %1312 = vmatprep.subr.bf16.mxu0 0
      %1313 = vmatpush1.bf16.msra.mxu0 0
      %1314 = vmatprep.subr.bf16.mxu0 0
      %1315 = vmatpush1.bf16.msra.mxu0 0
      %1316 = vmatprep.subr.bf16.mxu0 0
      %1317 = vmatpush1.bf16.msra.mxu0 0
      %1318 = vmatprep.subr.bf16.mxu0 0
      %1319 = vmatpush1.bf16.msra.mxu0 0
      %1320 = vmatprep.subr.bf16.mxu0 0
      %1321 = vmatpush1.bf16.msra.mxu0 0
      %1322 = vmatprep.subr.bf16.mxu0 0
      %1323 = vmatpush1.bf16.msra.mxu0 0
      %1324 = vmatprep.subr.bf16.mxu0 0
      %1325 = vmatpush1.bf16.msra.mxu0 0
      %1326 = vmatprep.subr.bf16.mxu0 0
      %1327 = vmatpush1.bf16.msra.mxu0 0
      %1328 = vmatprep.subr.bf16.mxu0 0
      %1329 = vmatpush1.bf16.msra.mxu0 0
      %1330 = vmatprep.subr.bf16.mxu0 0
      %1331 = vmatpush1.bf16.msra.mxu0 0
      %1332 = vmatprep.subr.bf16.mxu0 0
      %1333 = vmatpush1.bf16.msra.mxu0 0
      %1334 = vmatprep.subr.bf16.mxu0 0
      %1335 = vmatpush1.bf16.msra.mxu0 0
      %1336 = vmatprep.subr.bf16.mxu0 0
      %1337 = vmatpush1.bf16.msra.mxu0 0
      %1338 = vmatprep.mubr.bf16.mxu0 0
      %1339 = vmatmul.mubr.bf16.gmra.mrb[0].mxu0 %v1292
      %v1340 = vpop.f32.mrb[0].mxu0
      %v1341 = vadd.f32 0.0, %v1340
      %v1342 = vpop.f32.mrb[0].mxu0
      %v1343 = vpop.f32.mrb[0].mxu0
      %v1344 = vadd.f32 0.0, %v1343
      %v1345 = vpop.f32.mrb[0].mxu0
      %1346 = vmatprep.mubr.bf16.mxu0 0
      %1347 = vmatmul.mubr.bf16.gmra.mrb[0].mxu0 %v1295
      %v1348 = vpop.f32.mrb[0].mxu0
      %v1349 = vadd.f32 0.0, %v1348
      %v1350 = vpop.f32.mrb[0].mxu0
      %v1351 = vpop.f32.mrb[0].mxu0
      %v1352 = vadd.f32 0.0, %v1351
      %v1353 = vpop.f32.mrb[0].mxu0
      %1354 = vmatprep.mubr.bf16.mxu0 0
      %1355 = vmatmul.mubr.bf16.gmra.mrb[0].mxu0 %v1298
      %v1356 = vpop.f32.mrb[0].mxu0
      %v1357 = vadd.f32 0.0, %v1356
      %v1358 = vpop.f32.mrb[0].mxu0
      %v1359 = vpop.f32.mrb[0].mxu0
      %v1360 = vadd.f32 0.0, %v1359
      %v1361 = vpop.f32.mrb[0].mxu0
      %1362 = vmatprep.mubr.bf16.mxu0 0
      %1363 = vmatmul.mubr.bf16.gmra.mrb[0].mxu0 %v1301
      %v1364 = vpop.f32.mrb[0].mxu0
      %v1365 = vadd.f32 0.0, %v1364
      %v1366 = vpop.f32.mrb[0].mxu0
      %v1367 = vpop.f32.mrb[0].mxu0
      %v1368 = vadd.f32 0.0, %v1367
      %v1369 = vpop.f32.mrb[0].mxu0
      %1370 = vdwg.mxu0
      %v1371 = vadd.f32 %v1252, %v1341
      %v1372 = vadd.f32 %v1253, %v1344
      %v1373 = vadd.f32 %v1254, %v1349
      %v1374 = vadd.f32 %v1255, %v1352
      %v1375 = vadd.f32 %v1256, %v1357
      %v1376 = vadd.f32 %v1257, %v1360
      %v1377 = vadd.f32 %v1258, %v1365
      %v1378 = vadd.f32 %v1259, %v1368
      %s1379 = scalar_lea.vmem %s323, 8
      %v1380 = vld [vmem:[%s1379] sm:$0xf]
      %v1381 = vld [vmem:[%s1379 + $0x8] sm:$0xf]
      %v1382 = vld [vmem:[%s1379 + $0x10] sm:$0xf]
      %v1383 = vld [vmem:[%s1379 + $0x18] sm:$0xf]
      %v1384 = vld [vmem:[%s1379 + $0x20] sm:$0xf]
      %v1385 = vld [vmem:[%s1379 + $0x28] sm:$0xf]
      %v1386 = vld [vmem:[%s1379 + $0x30] sm:$0xf]
      %v1387 = vld [vmem:[%s1379 + $0x38] sm:$0xf]
      %s1388 = scalar_lea.vmem %s4, 14
      %v1389 = vld [vmem:[%s1388] sm:$0x3]
      %v1398 = vunpack.c.l.b16 %v1380
      %v1399 = vunpack.c.l.b16 %v1381
      %v1400 = vunpack.c.l.b16 %v1382
      %v1401 = vunpack.c.l.b16 %v1383
      %v1402 = vunpack.c.l.b16 %v1384
      %v1403 = vunpack.c.l.b16 %v1385
      %v1404 = vunpack.c.l.b16 %v1386
      %v1405 = vunpack.c.l.b16 %v1387
      %v1406 = vpack.c.b16 %v1399, %v1398
      %v1407 = vpack.c.b16 %v1401, %v1400
      %v1408 = vpack.c.b16 %v1403, %v1402
      %v1409 = vpack.c.b16 %v1405, %v1404
      %v1411 = vsel %vm379, %v1406, 0
      %v1414 = vsel %vm379, %v1407, 0
      %v1417 = vsel %vm379, %v1408, 0
      %v1420 = vsel %vm379, %v1409, 0
      %v1423 = vsel %vm392, %v1389, 0
      %1425 = vmatprep.subr.bf16.mxu0 0
      %1426 = vmatpush1.bf16.msra.mxu0 %v1423
      %1427 = vmatprep.subr.bf16.mxu0 0
      %1428 = vmatpush1.bf16.msra.mxu0 0
      %1429 = vmatprep.subr.bf16.mxu0 0
      %1430 = vmatpush1.bf16.msra.mxu0 0
      %1431 = vmatprep.subr.bf16.mxu0 0
      %1432 = vmatpush1.bf16.msra.mxu0 0
      %1433 = vmatprep.subr.bf16.mxu0 0
      %1434 = vmatpush1.bf16.msra.mxu0 0
      %1435 = vmatprep.subr.bf16.mxu0 0
      %1436 = vmatpush1.bf16.msra.mxu0 0
      %1437 = vmatprep.subr.bf16.mxu0 0
      %1438 = vmatpush1.bf16.msra.mxu0 0
      %1439 = vmatprep.subr.bf16.mxu0 0
      %1440 = vmatpush1.bf16.msra.mxu0 0
      %1441 = vmatprep.subr.bf16.mxu0 0
      %1442 = vmatpush1.bf16.msra.mxu0 0
      %1443 = vmatprep.subr.bf16.mxu0 0
      %1444 = vmatpush1.bf16.msra.mxu0 0
      %1445 = vmatprep.subr.bf16.mxu0 0
      %1446 = vmatpush1.bf16.msra.mxu0 0
      %1447 = vmatprep.subr.bf16.mxu0 0
      %1448 = vmatpush1.bf16.msra.mxu0 0
      %1449 = vmatprep.subr.bf16.mxu0 0
      %1450 = vmatpush1.bf16.msra.mxu0 0
      %1451 = vmatprep.subr.bf16.mxu0 0
      %1452 = vmatpush1.bf16.msra.mxu0 0
      %1453 = vmatprep.subr.bf16.mxu0 0
      %1454 = vmatpush1.bf16.msra.mxu0 0
      %1455 = vmatprep.subr.bf16.mxu0 0
      %1456 = vmatpush1.bf16.msra.mxu0 0
      %1457 = vmatprep.mubr.bf16.mxu0 0
      %1458 = vmatmul.mubr.bf16.gmra.mrb[0].mxu0 %v1411
      %v1459 = vpop.f32.mrb[0].mxu0
      %v1460 = vadd.f32 0.0, %v1459
      %v1461 = vpop.f32.mrb[0].mxu0
      %v1462 = vpop.f32.mrb[0].mxu0
      %v1463 = vadd.f32 0.0, %v1462
      %v1464 = vpop.f32.mrb[0].mxu0
      %1465 = vmatprep.mubr.bf16.mxu0 0
      %1466 = vmatmul.mubr.bf16.gmra.mrb[0].mxu0 %v1414
      %v1467 = vpop.f32.mrb[0].mxu0
      %v1468 = vadd.f32 0.0, %v1467
      %v1469 = vpop.f32.mrb[0].mxu0
      %v1470 = vpop.f32.mrb[0].mxu0
      %v1471 = vadd.f32 0.0, %v1470
      %v1472 = vpop.f32.mrb[0].mxu0
      %1473 = vmatprep.mubr.bf16.mxu0 0
      %1474 = vmatmul.mubr.bf16.gmra.mrb[0].mxu0 %v1417
      %v1475 = vpop.f32.mrb[0].mxu0
      %v1476 = vadd.f32 0.0, %v1475
      %v1477 = vpop.f32.mrb[0].mxu0
      %v1478 = vpop.f32.mrb[0].mxu0
      %v1479 = vadd.f32 0.0, %v1478
      %v1480 = vpop.f32.mrb[0].mxu0
      %1481 = vmatprep.mubr.bf16.mxu0 0
      %1482 = vmatmul.mubr.bf16.gmra.mrb[0].mxu0 %v1420
      %v1483 = vpop.f32.mrb[0].mxu0
      %v1484 = vadd.f32 0.0, %v1483
      %v1485 = vpop.f32.mrb[0].mxu0
      %v1486 = vpop.f32.mrb[0].mxu0
      %v1487 = vadd.f32 0.0, %v1486
      %v1488 = vpop.f32.mrb[0].mxu0
      %1489 = vdwg.mxu0
      %v1490 = vadd.f32 %v1371, %v1460
      %v1491 = vadd.f32 %v1372, %v1463
      %v1492 = vadd.f32 %v1373, %v1468
      %v1493 = vadd.f32 %v1374, %v1471
      %v1494 = vadd.f32 %v1375, %v1476
      %v1495 = vadd.f32 %v1376, %v1479
      %v1496 = vadd.f32 %v1377, %v1484
      %v1497 = vadd.f32 %v1378, %v1487
      %v1498 = vld [vmem:[%s1260] sm:$0xf]
      %v1499 = vld [vmem:[%s1260 + $0x4] sm:$0x1]
      %v1500 = vld [vmem:[%s1260 + $0x8] sm:$0xf]
      %v1501 = vld [vmem:[%s1260 + $0xc] sm:$0x1]
      %v1502 = vld [vmem:[%s1260 + $0x10] sm:$0xf]
      %v1503 = vld [vmem:[%s1260 + $0x14] sm:$0x1]
      %v1504 = vld [vmem:[%s1260 + $0x18] sm:$0xf]
      %v1505 = vld [vmem:[%s1260 + $0x1c] sm:$0x1]
      %v1506 = vld [vmem:[%s1260 + $0x20] sm:$0xf]
      %v1507 = vld [vmem:[%s1260 + $0x24] sm:$0x1]
      %v1508 = vld [vmem:[%s1260 + $0x28] sm:$0xf]
      %v1509 = vld [vmem:[%s1260 + $0x2c] sm:$0x1]
      %v1510 = vld [vmem:[%s1260 + $0x30] sm:$0xf]
      %v1511 = vld [vmem:[%s1260 + $0x34] sm:$0x1]
      %v1512 = vld [vmem:[%s1260 + $0x38] sm:$0xf]
      %v1513 = vld [vmem:[%s1260 + $0x3c] sm:$0x1]
      %v1515 = vshrl.u32 %v1498, 16
      %v1517 = vrot.slane %v1515, 4
      %v1518 = vshll.u32 %v1498, 16
      %v1520 = vrot.slane %v1518, 5
      %v1521 = vor.u32 %v1517, %v1520
      %v1522 = vrot.slane %v1521, 4
      %v1524 = vshll.u32 %v1499, 16
      %v1526 = vrot.slane %v1524, 5
      %v1527 = vsel %vm579, %v1522, %v1526
      %v1529 = vshrl.u32 %v1500, 16
      %v1531 = vrot.slane %v1529, 4
      %v1532 = vshll.u32 %v1500, 16
      %v1534 = vrot.slane %v1532, 5
      %v1535 = vor.u32 %v1531, %v1534
      %v1536 = vrot.slane %v1535, 4
      %v1538 = vshll.u32 %v1501, 16
      %v1540 = vrot.slane %v1538, 5
      %v1541 = vsel %vm579, %v1536, %v1540
      %v1543 = vshrl.u32 %v1502, 16
      %v1545 = vrot.slane %v1543, 4
      %v1546 = vshll.u32 %v1502, 16
      %v1548 = vrot.slane %v1546, 5
      %v1549 = vor.u32 %v1545, %v1548
      %v1550 = vrot.slane %v1549, 4
      %v1552 = vshll.u32 %v1503, 16
      %v1554 = vrot.slane %v1552, 5
      %v1555 = vsel %vm579, %v1550, %v1554
      %v1557 = vshrl.u32 %v1504, 16
      %v1559 = vrot.slane %v1557, 4
      %v1560 = vshll.u32 %v1504, 16
      %v1562 = vrot.slane %v1560, 5
      %v1563 = vor.u32 %v1559, %v1562
      %v1564 = vrot.slane %v1563, 4
      %v1566 = vshll.u32 %v1505, 16
      %v1568 = vrot.slane %v1566, 5
      %v1569 = vsel %vm579, %v1564, %v1568
      %v1571 = vshrl.u32 %v1506, 16
      %v1573 = vrot.slane %v1571, 4
      %v1574 = vshll.u32 %v1506, 16
      %v1576 = vrot.slane %v1574, 5
      %v1577 = vor.u32 %v1573, %v1576
      %v1578 = vrot.slane %v1577, 4
      %v1580 = vshll.u32 %v1507, 16
      %v1582 = vrot.slane %v1580, 5
      %v1583 = vsel %vm579, %v1578, %v1582
      %v1585 = vshrl.u32 %v1508, 16
      %v1587 = vrot.slane %v1585, 4
      %v1588 = vshll.u32 %v1508, 16
      %v1590 = vrot.slane %v1588, 5
      %v1591 = vor.u32 %v1587, %v1590
      %v1592 = vrot.slane %v1591, 4
      %v1594 = vshll.u32 %v1509, 16
      %v1596 = vrot.slane %v1594, 5
      %v1597 = vsel %vm579, %v1592, %v1596
      %v1599 = vshrl.u32 %v1510, 16
      %v1601 = vrot.slane %v1599, 4
      %v1602 = vshll.u32 %v1510, 16
      %v1604 = vrot.slane %v1602, 5
      %v1605 = vor.u32 %v1601, %v1604
      %v1606 = vrot.slane %v1605, 4
      %v1608 = vshll.u32 %v1511, 16
      %v1610 = vrot.slane %v1608, 5
      %v1611 = vsel %vm579, %v1606, %v1610
      %v1613 = vshrl.u32 %v1512, 16
      %v1615 = vrot.slane %v1613, 4
      %v1616 = vshll.u32 %v1512, 16
      %v1618 = vrot.slane %v1616, 5
      %v1619 = vor.u32 %v1615, %v1618
      %v1620 = vrot.slane %v1619, 4
      %v1622 = vshll.u32 %v1513, 16
      %v1624 = vrot.slane %v1622, 5
      %v1625 = vsel %vm579, %v1620, %v1624
      %s1626 = scalar_lea.vmem %s4, 16
      %v1627 = vld [vmem:[%s1626] sm:$0x3]
      %v1628 = vunpack.c.l.b16 %v1527
      %v1629 = vunpack.c.l.b16 %v1541
      %v1630 = vunpack.c.l.b16 %v1555
      %v1631 = vunpack.c.l.b16 %v1569
      %v1632 = vunpack.c.l.b16 %v1583
      %v1633 = vunpack.c.l.b16 %v1597
      %v1634 = vunpack.c.l.b16 %v1611
      %v1635 = vunpack.c.l.b16 %v1625
      %v1636 = vpack.c.b16 %v1629, %v1628
      %v1637 = vpack.c.b16 %v1631, %v1630
      %v1638 = vpack.c.b16 %v1633, %v1632
      %v1639 = vpack.c.b16 %v1635, %v1634
      %v1641 = vsel %vm379, %v1636, 0
      %v1644 = vsel %vm379, %v1637, 0
      %v1647 = vsel %vm379, %v1638, 0
      %v1650 = vsel %vm379, %v1639, 0
      %v1653 = vsel %vm392, %v1627, 0
      %1655 = vmatprep.subr.bf16.mxu0 0
      %1656 = vmatpush1.bf16.msra.mxu0 %v1653
      %1657 = vmatprep.subr.bf16.mxu0 0
      %1658 = vmatpush1.bf16.msra.mxu0 0
      %1659 = vmatprep.subr.bf16.mxu0 0
      %1660 = vmatpush1.bf16.msra.mxu0 0
      %1661 = vmatprep.subr.bf16.mxu0 0
      %1662 = vmatpush1.bf16.msra.mxu0 0
      %1663 = vmatprep.subr.bf16.mxu0 0
      %1664 = vmatpush1.bf16.msra.mxu0 0
      %1665 = vmatprep.subr.bf16.mxu0 0
      %1666 = vmatpush1.bf16.msra.mxu0 0
      %1667 = vmatprep.subr.bf16.mxu0 0
      %1668 = vmatpush1.bf16.msra.mxu0 0
      %1669 = vmatprep.subr.bf16.mxu0 0
      %1670 = vmatpush1.bf16.msra.mxu0 0
      %1671 = vmatprep.subr.bf16.mxu0 0
      %1672 = vmatpush1.bf16.msra.mxu0 0
      %1673 = vmatprep.subr.bf16.mxu0 0
      %1674 = vmatpush1.bf16.msra.mxu0 0
      %1675 = vmatprep.subr.bf16.mxu0 0
      %1676 = vmatpush1.bf16.msra.mxu0 0
      %1677 = vmatprep.subr.bf16.mxu0 0
      %1678 = vmatpush1.bf16.msra.mxu0 0
      %1679 = vmatprep.subr.bf16.mxu0 0
      %1680 = vmatpush1.bf16.msra.mxu0 0
      %1681 = vmatprep.subr.bf16.mxu0 0
      %1682 = vmatpush1.bf16.msra.mxu0 0
      %1683 = vmatprep.subr.bf16.mxu0 0
      %1684 = vmatpush1.bf16.msra.mxu0 0
      %1685 = vmatprep.subr.bf16.mxu0 0
      %1686 = vmatpush1.bf16.msra.mxu0 0
      %1687 = vmatprep.mubr.bf16.mxu0 0
      %1688 = vmatmul.mubr.bf16.gmra.mrb[0].mxu0 %v1641
      %v1689 = vpop.f32.mrb[0].mxu0
      %v1690 = vadd.f32 0.0, %v1689
      %v1691 = vpop.f32.mrb[0].mxu0
      %v1692 = vpop.f32.mrb[0].mxu0
      %v1693 = vadd.f32 0.0, %v1692
      %v1694 = vpop.f32.mrb[0].mxu0
      %1695 = vmatprep.mubr.bf16.mxu0 0
      %1696 = vmatmul.mubr.bf16.gmra.mrb[0].mxu0 %v1644
      %v1697 = vpop.f32.mrb[0].mxu0
      %v1698 = vadd.f32 0.0, %v1697
      %v1699 = vpop.f32.mrb[0].mxu0
      %v1700 = vpop.f32.mrb[0].mxu0
      %v1701 = vadd.f32 0.0, %v1700
      %v1702 = vpop.f32.mrb[0].mxu0
      %1703 = vmatprep.mubr.bf16.mxu0 0
      %1704 = vmatmul.mubr.bf16.gmra.mrb[0].mxu0 %v1647
      %v1705 = vpop.f32.mrb[0].mxu0
      %v1706 = vadd.f32 0.0, %v1705
      %v1707 = vpop.f32.mrb[0].mxu0
      %v1708 = vpop.f32.mrb[0].mxu0
      %v1709 = vadd.f32 0.0, %v1708
      %v1710 = vpop.f32.mrb[0].mxu0
      %1711 = vmatprep.mubr.bf16.mxu0 0
      %1712 = vmatmul.mubr.bf16.gmra.mrb[0].mxu0 %v1650
      %v1713 = vpop.f32.mrb[0].mxu0
      %v1714 = vadd.f32 0.0, %v1713
      %v1715 = vpop.f32.mrb[0].mxu0
      %v1716 = vpop.f32.mrb[0].mxu0
      %v1717 = vadd.f32 0.0, %v1716
      %v1718 = vpop.f32.mrb[0].mxu0
      %1719 = vdwg.mxu0
      %v1720 = vadd.f32 %v1490, %v1690
      %v1721 = vadd.f32 %v1491, %v1693
      %v1722 = vadd.f32 %v1492, %v1698
      %v1723 = vadd.f32 %v1493, %v1701
      %v1724 = vadd.f32 %v1494, %v1706
      %v1725 = vadd.f32 %v1495, %v1709
      %v1726 = vadd.f32 %v1496, %v1714
      %v1727 = vadd.f32 %v1497, %v1717
      %vm1728 = vcmask 64512
      %v1729 = vsel %vm1728, %v1720, 0.0
      %v1730 = vsel %vm1728, %v1721, 0.0
      %v1731 = vadd.f32 %v1729, %v1730
      %v1732 = vsel %vm1728, %v1722, 0.0
      %v1733 = vadd.f32 %v1731, %v1732
      %v1734 = vsel %vm1728, %v1723, 0.0
      %v1735 = vadd.f32 %v1733, %v1734
      %v1736 = vsel %vm1728, %v1724, 0.0
      %v1737 = vadd.f32 %v1735, %v1736
      %v1738 = vsel %vm1728, %v1725, 0.0
      %v1739 = vadd.f32 %v1737, %v1738
      %v1740 = vsel %vm1728, %v1726, 0.0
      %v1741 = vadd.f32 %v1739, %v1740
      %v1742 = vsel %vm1728, %v1727, 0.0
      %v1743 = vadd.f32 %v1741, %v1742
      %v1744 = vrot.slane %v1743, 4
      %v1745 = vadd.f32 %v1743, %v1744
      %v1746 = vrot.slane %v1745, 2
      %v1747 = vadd.f32 %v1745, %v1746
      %v1748 = vrot.slane %v1747, 1
      %v1749 = vadd.f32 %v1747, %v1748
      %v1750 = vmul.f32 %v1720, %v1720
      %v1751 = vmul.f32 %v1721, %v1721
      %v1752 = vmul.f32 %v1722, %v1722
      %v1753 = vmul.f32 %v1723, %v1723
      %v1754 = vmul.f32 %v1724, %v1724
      %v1755 = vmul.f32 %v1725, %v1725
      %v1756 = vmul.f32 %v1726, %v1726
      %v1757 = vmul.f32 %v1727, %v1727
      %v1758 = vsel %vm1728, %v1750, 0.0
      %v1759 = vsel %vm1728, %v1751, 0.0
      %v1760 = vadd.f32 %v1758, %v1759
      %v1761 = vsel %vm1728, %v1752, 0.0
      %v1762 = vadd.f32 %v1760, %v1761
      %v1763 = vsel %vm1728, %v1753, 0.0
      %v1764 = vadd.f32 %v1762, %v1763
      %v1765 = vsel %vm1728, %v1754, 0.0
      %v1766 = vadd.f32 %v1764, %v1765
      %v1767 = vsel %vm1728, %v1755, 0.0
      %v1768 = vadd.f32 %v1766, %v1767
      %v1769 = vsel %vm1728, %v1756, 0.0
      %v1770 = vadd.f32 %v1768, %v1769
      %v1771 = vsel %vm1728, %v1757, 0.0
      %v1772 = vadd.f32 %v1770, %v1771
      %v1773 = vrot.slane %v1772, 4
      %v1774 = vadd.f32 %v1772, %v1773
      %v1775 = vrot.slane %v1774, 2
      %v1776 = vadd.f32 %v1774, %v1775
      %v1777 = vrot.slane %v1776, 1
      %v1778 = vadd.f32 %v1776, %v1777
      %v1779 = vmul.f32 %v1749, 0.015625
      %v1780 = vmul.f32 %v1778, 0.015625
      %v1781 = vmul.f32 %v1779, %v1779
      %v1782 = vsub.f32 %v1780, %v1781
      %v1783 = vmax.f32 %v1782, 0.0
      %v1784 = vsub.f32 %v1720, %v1779
      %v1785 = vsub.f32 %v1721, %v1779
      %v1786 = vsub.f32 %v1722, %v1779
      %v1787 = vsub.f32 %v1723, %v1779
      %v1788 = vsub.f32 %v1724, %v1779
      %v1789 = vsub.f32 %v1725, %v1779
      %v1790 = vsub.f32 %v1726, %v1779
      %v1791 = vsub.f32 %v1727, %v1779
      %v1792 = vadd.f32 %v1783, 1e-05
      %v1793 = vrsqrt.pop %v1792
      %v1794 = vmul.f32 %v1784, %v1793
      %v1795 = vmul.f32 %v1785, %v1793
      %v1796 = vmul.f32 %v1786, %v1793
      %v1797 = vmul.f32 %v1787, %v1793
      %v1798 = vmul.f32 %v1788, %v1793
      %v1799 = vmul.f32 %v1789, %v1793
      %v1800 = vmul.f32 %v1790, %v1793
      %v1801 = vmul.f32 %v1791, %v1793
      %vm1802 = vcmp.ge.f32.partialorder %v1794, 0.0
      %vm1803 = vcmp.ge.f32.partialorder %v1795, 0.0
      %vm1804 = vcmp.ge.f32.partialorder %v1796, 0.0
      %vm1805 = vcmp.ge.f32.partialorder %v1797, 0.0
      %vm1806 = vcmp.ge.f32.partialorder %v1798, 0.0
      %vm1807 = vcmp.ge.f32.partialorder %v1799, 0.0
      %vm1808 = vcmp.ge.f32.partialorder %v1800, 0.0
      %vm1809 = vcmp.ge.f32.partialorder %v1801, 0.0
      %v1810 = vmul.f32 %v1794, 0.01
      %v1811 = vmul.f32 %v1795, 0.01
      %v1812 = vmul.f32 %v1796, 0.01
      %v1813 = vmul.f32 %v1797, 0.01
      %v1814 = vmul.f32 %v1798, 0.01
      %v1815 = vmul.f32 %v1799, 0.01
      %v1816 = vmul.f32 %v1800, 0.01
      %v1817 = vmul.f32 %v1801, 0.01
      %v1818 = vsel %vm1802, %v1794, %v1810
      %v1819 = vsel %vm1803, %v1795, %v1811
      %v1820 = vsel %vm1804, %v1796, %v1812
      %v1821 = vsel %vm1805, %v1797, %v1813
      %v1822 = vsel %vm1806, %v1798, %v1814
      %v1823 = vsel %vm1807, %v1799, %v1815
      %v1824 = vsel %vm1808, %v1800, %v1816
      %v1825 = vsel %vm1809, %v1801, %v1817
      %vm1826 = vcmask 60416
      %1827 = vst.msk [vmem:[#allocation2] sm:$0xf] %vm1826, 0
      %vm1828 = vcmask 57344
      %1829 = vst.msk [vmem:[#allocation2 + $0x4] sm:$0x1] %vm1828, 0
      %1830 = vst.msk [vmem:[#allocation2 + $0x8] sm:$0xf] %vm1826, 0
      %1831 = vst.msk [vmem:[#allocation2 + $0xc] sm:$0x1] %vm1828, 0
      %1832 = vst.msk [vmem:[#allocation2 + $0x10] sm:$0xf] %vm1826, 0
      %1833 = vst.msk [vmem:[#allocation2 + $0x14] sm:$0x1] %vm1828, 0
      %1834 = vst.msk [vmem:[#allocation2 + $0x18] sm:$0xf] %vm1826, 0
      %1835 = vst.msk [vmem:[#allocation2 + $0x1c] sm:$0x1] %vm1828, 0
      %1836 = vst.msk [vmem:[#allocation2 + $0x20] sm:$0xf] %vm1826, 0
      %1837 = vst.msk [vmem:[#allocation2 + $0x24] sm:$0x1] %vm1828, 0
      %1838 = vst.msk [vmem:[#allocation2 + $0x28] sm:$0xf] %vm1826, 0
      %1839 = vst.msk [vmem:[#allocation2 + $0x2c] sm:$0x1] %vm1828, 0
      %1840 = vst.msk [vmem:[#allocation2 + $0x30] sm:$0xf] %vm1826, 0
      %1841 = vst.msk [vmem:[#allocation2 + $0x34] sm:$0x1] %vm1828, 0
      %1842 = vst.msk [vmem:[#allocation2 + $0x38] sm:$0xf] %vm1826, 0
      %1843 = vst.msk [vmem:[#allocation2 + $0x3c] sm:$0x1] %vm1828, 0
      %1844 = vst.msk [vmem:[#allocation2 + $0x40] sm:$0xf] %vm1826, 0
      %1845 = vst.msk [vmem:[#allocation2 + $0x44] sm:$0x1] %vm1828, 0
      %1846 = vst.msk [vmem:[#allocation2 + $0x48] sm:$0xf] %vm1826, 0
      %1847 = vst.msk [vmem:[#allocation2 + $0x4c] sm:$0x1] %vm1828, 0
      %v1848 = vpack.c.bf16 %v1818, %v1818
      %v1849 = vpack.c.bf16 %v1819, %v1819
      %v1850 = vpack.c.bf16 %v1820, %v1820
      %v1851 = vpack.c.bf16 %v1821, %v1821
      %v1852 = vpack.c.bf16 %v1822, %v1822
      %v1853 = vpack.c.bf16 %v1823, %v1823
      %v1854 = vpack.c.bf16 %v1824, %v1824
      %v1855 = vpack.c.bf16 %v1825, %v1825
      %v1864 = vunpack.c.l.b16 %v1848
      %v1865 = vunpack.c.l.b16 %v1849
      %v1866 = vunpack.c.l.b16 %v1850
      %v1867 = vunpack.c.l.b16 %v1851
      %v1868 = vunpack.c.l.b16 %v1852
      %v1869 = vunpack.c.l.b16 %v1853
      %v1870 = vunpack.c.l.b16 %v1854
      %v1871 = vunpack.c.l.b16 %v1855
      %v1872 = vpack.c.b16 %v1864, %v1864
      %v1873 = vpack.c.b16 %v1865, %v1865
      %v1874 = vpack.c.b16 %v1866, %v1866
      %v1875 = vpack.c.b16 %v1867, %v1867
      %v1876 = vpack.c.b16 %v1868, %v1868
      %v1877 = vpack.c.b16 %v1869, %v1869
      %v1878 = vpack.c.b16 %v1870, %v1870
      %v1879 = vpack.c.b16 %v1871, %v1871
      %v1881 = vshrl.u32 %v1872, 16
      %v1883 = vrot.slane %v1881, 7
      %v1884 = vshll.u32 %v1872, 16
      %v1886 = vor.u32 %v1883, %v1884
      %v1887 = vrot.slane %v1883, 4
      %v1889 = vshrl.u32 %v1873, 16
      %v1891 = vrot.slane %v1889, 7
      %v1892 = vshll.u32 %v1873, 16
      %v1894 = vor.u32 %v1891, %v1892
      %v1895 = vrot.slane %v1891, 4
      %v1897 = vshrl.u32 %v1874, 16
      %v1899 = vrot.slane %v1897, 7
      %v1900 = vshll.u32 %v1874, 16
      %v1902 = vor.u32 %v1899, %v1900
      %v1903 = vrot.slane %v1899, 4
      %v1905 = vshrl.u32 %v1875, 16
      %v1907 = vrot.slane %v1905, 7
      %v1908 = vshll.u32 %v1875, 16
      %v1910 = vor.u32 %v1907, %v1908
      %v1911 = vrot.slane %v1907, 4
      %v1913 = vshrl.u32 %v1876, 16
      %v1915 = vrot.slane %v1913, 7
      %v1916 = vshll.u32 %v1876, 16
      %v1918 = vor.u32 %v1915, %v1916
      %v1919 = vrot.slane %v1915, 4
      %v1921 = vshrl.u32 %v1877, 16
      %v1923 = vrot.slane %v1921, 7
      %v1924 = vshll.u32 %v1877, 16
      %v1926 = vor.u32 %v1923, %v1924
      %v1927 = vrot.slane %v1923, 4
      %v1929 = vshrl.u32 %v1878, 16
      %v1931 = vrot.slane %v1929, 7
      %v1932 = vshll.u32 %v1878, 16
      %v1934 = vor.u32 %v1931, %v1932
      %v1935 = vrot.slane %v1931, 4
      %v1937 = vshrl.u32 %v1879, 16
      %v1939 = vrot.slane %v1937, 7
      %v1940 = vshll.u32 %v1879, 16
      %v1942 = vor.u32 %v1939, %v1940
      %v1943 = vrot.slane %v1939, 4
      %s1960 = scalar_lea.vmem [#allocation2], 8
      %vm1961 = vcmask 60416
      %vm1962 = vsmask.f32 7938
      %vm1963 = vmand %vm1961, %vm1962
      %v1964 = vld [vmem:[%s1960] sm:$0xf]
      %v1965 = vsel %vm1963, %v1886, %v1964
      %1966 = vst [vmem:[%s1960] sm:$0xf] %v1965
      %vm1967 = vcmask 57344
      %vm1968 = vsmask.f32 256
      %vm1969 = vmand %vm1967, %vm1968
      %v1970 = vld [vmem:[%s1960 + $0x4] sm:$0x1]
      %v1971 = vsel %vm1969, %v1887, %v1970
      %1972 = vst [vmem:[%s1960 + $0x4] sm:$0x1] %v1971
      %v1973 = vld [vmem:[%s1960 + $0x8] sm:$0xf]
      %v1974 = vsel %vm1963, %v1894, %v1973
      %1975 = vst [vmem:[%s1960 + $0x8] sm:$0xf] %v1974
      %v1976 = vld [vmem:[%s1960 + $0xc] sm:$0x1]
      %v1977 = vsel %vm1969, %v1895, %v1976
      %1978 = vst [vmem:[%s1960 + $0xc] sm:$0x1] %v1977
      %v1979 = vld [vmem:[%s1960 + $0x10] sm:$0xf]
      %v1980 = vsel %vm1963, %v1902, %v1979
      %1981 = vst [vmem:[%s1960 + $0x10] sm:$0xf] %v1980
      %v1982 = vld [vmem:[%s1960 + $0x14] sm:$0x1]
      %v1983 = vsel %vm1969, %v1903, %v1982
      %1984 = vst [vmem:[%s1960 + $0x14] sm:$0x1] %v1983
      %v1985 = vld [vmem:[%s1960 + $0x18] sm:$0xf]
      %v1986 = vsel %vm1963, %v1910, %v1985
      %1987 = vst [vmem:[%s1960 + $0x18] sm:$0xf] %v1986
      %v1988 = vld [vmem:[%s1960 + $0x1c] sm:$0x1]
      %v1989 = vsel %vm1969, %v1911, %v1988
      %1990 = vst [vmem:[%s1960 + $0x1c] sm:$0x1] %v1989
      %v1991 = vld [vmem:[%s1960 + $0x20] sm:$0xf]
      %v1992 = vsel %vm1963, %v1918, %v1991
      %1993 = vst [vmem:[%s1960 + $0x20] sm:$0xf] %v1992
      %v1994 = vld [vmem:[%s1960 + $0x24] sm:$0x1]
      %v1995 = vsel %vm1969, %v1919, %v1994
      %1996 = vst [vmem:[%s1960 + $0x24] sm:$0x1] %v1995
      %v1997 = vld [vmem:[%s1960 + $0x28] sm:$0xf]
      %v1998 = vsel %vm1963, %v1926, %v1997
      %1999 = vst [vmem:[%s1960 + $0x28] sm:$0xf] %v1998
      %v2000 = vld [vmem:[%s1960 + $0x2c] sm:$0x1]
      %v2001 = vsel %vm1969, %v1927, %v2000
      %2002 = vst [vmem:[%s1960 + $0x2c] sm:$0x1] %v2001
      %v2003 = vld [vmem:[%s1960 + $0x30] sm:$0xf]
      %v2004 = vsel %vm1963, %v1934, %v2003
      %2005 = vst [vmem:[%s1960 + $0x30] sm:$0xf] %v2004
      %v2006 = vld [vmem:[%s1960 + $0x34] sm:$0x1]
      %v2007 = vsel %vm1969, %v1935, %v2006
      %2008 = vst [vmem:[%s1960 + $0x34] sm:$0x1] %v2007
      %v2009 = vld [vmem:[%s1960 + $0x38] sm:$0xf]
      %v2010 = vsel %vm1963, %v1942, %v2009
      %2011 = vst [vmem:[%s1960 + $0x38] sm:$0xf] %v2010
      %v2012 = vld [vmem:[%s1960 + $0x3c] sm:$0x1]
      %v2013 = vsel %vm1969, %v1943, %v2012
      %2014 = vst [vmem:[%s1960 + $0x3c] sm:$0x1] %v2013
      %v2015 = vld [vmem:[#allocation2] sm:$0xf]
      %v2016 = vld [vmem:[#allocation2 + $0x8] sm:$0xf]
      %v2017 = vld [vmem:[#allocation2 + $0x10] sm:$0xf]
      %v2018 = vld [vmem:[#allocation2 + $0x18] sm:$0xf]
      %v2019 = vld [vmem:[#allocation2 + $0x20] sm:$0xf]
      %v2020 = vld [vmem:[#allocation2 + $0x28] sm:$0xf]
      %v2021 = vld [vmem:[#allocation2 + $0x30] sm:$0xf]
      %v2022 = vld [vmem:[#allocation2 + $0x38] sm:$0xf]
      %v2023 = vld [vmem:[%s5] sm:$0xf]
      %v2024 = vld [vmem:[#allocation2 + $0x4] sm:$0x1]
      %v2025 = vld [vmem:[#allocation2 + $0xc] sm:$0x1]
      %v2026 = vld [vmem:[#allocation2 + $0x14] sm:$0x1]
      %v2027 = vld [vmem:[#allocation2 + $0x1c] sm:$0x1]
      %v2028 = vld [vmem:[#allocation2 + $0x24] sm:$0x1]
      %v2029 = vld [vmem:[#allocation2 + $0x2c] sm:$0x1]
      %v2030 = vld [vmem:[#allocation2 + $0x34] sm:$0x1]
      %v2031 = vld [vmem:[#allocation2 + $0x3c] sm:$0x1]
      %v2033 = vshrl.u32 %v2015, 16
      %v2035 = vrot.slane %v2033, 4
      %v2036 = vshll.u32 %v2015, 16
      %v2038 = vrot.slane %v2036, 5
      %v2039 = vor.u32 %v2035, %v2038
      %v2040 = vrot.slane %v2039, 4
      %v2042 = vshll.u32 %v2024, 16
      %v2044 = vrot.slane %v2042, 5
      %v2045 = vsel %vm579, %v2040, %v2044
      %v2047 = vshrl.u32 %v2016, 16
      %v2049 = vrot.slane %v2047, 4
      %v2050 = vshll.u32 %v2016, 16
      %v2052 = vrot.slane %v2050, 5
      %v2053 = vor.u32 %v2049, %v2052
      %v2054 = vrot.slane %v2053, 4
      %v2056 = vshll.u32 %v2025, 16
      %v2058 = vrot.slane %v2056, 5
      %v2059 = vsel %vm579, %v2054, %v2058
      %v2061 = vshrl.u32 %v2017, 16
      %v2063 = vrot.slane %v2061, 4
      %v2064 = vshll.u32 %v2017, 16
      %v2066 = vrot.slane %v2064, 5
      %v2067 = vor.u32 %v2063, %v2066
      %v2068 = vrot.slane %v2067, 4
      %v2070 = vshll.u32 %v2026, 16
      %v2072 = vrot.slane %v2070, 5
      %v2073 = vsel %vm579, %v2068, %v2072
      %v2075 = vshrl.u32 %v2018, 16
      %v2077 = vrot.slane %v2075, 4
      %v2078 = vshll.u32 %v2018, 16
      %v2080 = vrot.slane %v2078, 5
      %v2081 = vor.u32 %v2077, %v2080
      %v2082 = vrot.slane %v2081, 4
      %v2084 = vshll.u32 %v2027, 16
      %v2086 = vrot.slane %v2084, 5
      %v2087 = vsel %vm579, %v2082, %v2086
      %v2089 = vshrl.u32 %v2019, 16
      %v2091 = vrot.slane %v2089, 4
      %v2092 = vshll.u32 %v2019, 16
      %v2094 = vrot.slane %v2092, 5
      %v2095 = vor.u32 %v2091, %v2094
      %v2096 = vrot.slane %v2095, 4
      %v2098 = vshll.u32 %v2028, 16
      %v2100 = vrot.slane %v2098, 5
      %v2101 = vsel %vm579, %v2096, %v2100
      %v2103 = vshrl.u32 %v2020, 16
      %v2105 = vrot.slane %v2103, 4
      %v2106 = vshll.u32 %v2020, 16
      %v2108 = vrot.slane %v2106, 5
      %v2109 = vor.u32 %v2105, %v2108
      %v2110 = vrot.slane %v2109, 4
      %v2112 = vshll.u32 %v2029, 16
      %v2114 = vrot.slane %v2112, 5
      %v2115 = vsel %vm579, %v2110, %v2114
      %v2117 = vshrl.u32 %v2021, 16
      %v2119 = vrot.slane %v2117, 4
      %v2120 = vshll.u32 %v2021, 16
      %v2122 = vrot.slane %v2120, 5
      %v2123 = vor.u32 %v2119, %v2122
      %v2124 = vrot.slane %v2123, 4
      %v2126 = vshll.u32 %v2030, 16
      %v2128 = vrot.slane %v2126, 5
      %v2129 = vsel %vm579, %v2124, %v2128
      %v2131 = vshrl.u32 %v2022, 16
      %v2133 = vrot.slane %v2131, 4
      %v2134 = vshll.u32 %v2022, 16
      %v2136 = vrot.slane %v2134, 5
      %v2137 = vor.u32 %v2133, %v2136
      %v2138 = vrot.slane %v2137, 4
      %v2140 = vshll.u32 %v2031, 16
      %v2142 = vrot.slane %v2140, 5
      %v2143 = vsel %vm579, %v2138, %v2142
      %s2144 = scalar_lea.vmem %s5, 4
      %v2145 = vld [vmem:[%s2144] sm:$0xf]
      %v2146 = vunpack.c.l.b16 %v2045
      %v2147 = vunpack.c.l.b16 %v2059
      %v2148 = vunpack.c.l.b16 %v2073
      %v2149 = vunpack.c.l.b16 %v2087
      %v2150 = vunpack.c.l.b16 %v2101
      %v2151 = vunpack.c.l.b16 %v2115
      %v2152 = vunpack.c.l.b16 %v2129
      %v2153 = vunpack.c.l.b16 %v2143
      %v2154 = vpack.c.b16 %v2147, %v2146
      %v2155 = vpack.c.b16 %v2149, %v2148
      %v2156 = vpack.c.b16 %v2151, %v2150
      %v2157 = vpack.c.b16 %v2153, %v2152
      %v2159 = vsel %vm1728, %v2154, 0
      %v2162 = vsel %vm1728, %v2155, 0
      %v2165 = vsel %vm1728, %v2156, 0
      %v2168 = vsel %vm1728, %v2157, 0
      %vm2170 = vcmask 1043456
      %v2172 = vsel %vm2170, %v2145, 0
      %2174 = vmatprep.subr.bf16.mxu0 0
      %2175 = vmatpush1.bf16.msra.mxu0 %v2172
      %2176 = vmatprep.subr.bf16.mxu0 0
      %2177 = vmatpush1.bf16.msra.mxu0 0
      %2178 = vmatprep.subr.bf16.mxu0 0
      %2179 = vmatpush1.bf16.msra.mxu0 0
      %2180 = vmatprep.subr.bf16.mxu0 0
      %2181 = vmatpush1.bf16.msra.mxu0 0
      %2182 = vmatprep.subr.bf16.mxu0 0
      %2183 = vmatpush1.bf16.msra.mxu0 0
      %2184 = vmatprep.subr.bf16.mxu0 0
      %2185 = vmatpush1.bf16.msra.mxu0 0
      %2186 = vmatprep.subr.bf16.mxu0 0
      %2187 = vmatpush1.bf16.msra.mxu0 0
      %2188 = vmatprep.subr.bf16.mxu0 0
      %2189 = vmatpush1.bf16.msra.mxu0 0
      %2190 = vmatprep.subr.bf16.mxu0 0
      %2191 = vmatpush1.bf16.msra.mxu0 0
      %2192 = vmatprep.subr.bf16.mxu0 0
      %2193 = vmatpush1.bf16.msra.mxu0 0
      %2194 = vmatprep.subr.bf16.mxu0 0
      %2195 = vmatpush1.bf16.msra.mxu0 0
      %2196 = vmatprep.subr.bf16.mxu0 0
      %2197 = vmatpush1.bf16.msra.mxu0 0
      %2198 = vmatprep.subr.bf16.mxu0 0
      %2199 = vmatpush1.bf16.msra.mxu0 0
      %2200 = vmatprep.subr.bf16.mxu0 0
      %2201 = vmatpush1.bf16.msra.mxu0 0
      %2202 = vmatprep.subr.bf16.mxu0 0
      %2203 = vmatpush1.bf16.msra.mxu0 0
      %2204 = vmatprep.subr.bf16.mxu0 0
      %2205 = vmatpush1.bf16.msra.mxu0 0
      %2206 = vmatprep.mubr.bf16.mxu0 0
      %2207 = vmatmul.mubr.bf16.gmra.mrb[0].mxu0 %v2159
      %v2208 = vpop.f32.mrb[0].mxu0
      %v2209 = vadd.f32 0.0, %v2208
      %v2210 = vpop.f32.mrb[0].mxu0
      %v2211 = vpop.f32.mrb[0].mxu0
      %v2212 = vadd.f32 0.0, %v2211
      %v2213 = vpop.f32.mrb[0].mxu0
      %2214 = vmatprep.mubr.bf16.mxu0 0
      %2215 = vmatmul.mubr.bf16.gmra.mrb[0].mxu0 %v2162
      %v2216 = vpop.f32.mrb[0].mxu0
      %v2217 = vadd.f32 0.0, %v2216
      %v2218 = vpop.f32.mrb[0].mxu0
      %v2219 = vpop.f32.mrb[0].mxu0
      %v2220 = vadd.f32 0.0, %v2219
      %v2221 = vpop.f32.mrb[0].mxu0
      %2222 = vmatprep.mubr.bf16.mxu0 0
      %2223 = vmatmul.mubr.bf16.gmra.mrb[0].mxu0 %v2165
      %v2224 = vpop.f32.mrb[0].mxu0
      %v2225 = vadd.f32 0.0, %v2224
      %v2226 = vpop.f32.mrb[0].mxu0
      %v2227 = vpop.f32.mrb[0].mxu0
      %v2228 = vadd.f32 0.0, %v2227
      %v2229 = vpop.f32.mrb[0].mxu0
      %2230 = vmatprep.mubr.bf16.mxu0 0
      %2231 = vmatmul.mubr.bf16.gmra.mrb[0].mxu0 %v2168
      %v2232 = vpop.f32.mrb[0].mxu0
      %v2233 = vadd.f32 0.0, %v2232
      %v2234 = vpop.f32.mrb[0].mxu0
      %v2235 = vpop.f32.mrb[0].mxu0
      %v2236 = vadd.f32 0.0, %v2235
      %v2237 = vpop.f32.mrb[0].mxu0
      %2238 = vdwg.mxu0
      %v2247 = vunpack.c.l.b16 %v2015
      %v2248 = vunpack.c.l.b16 %v2016
      %v2249 = vunpack.c.l.b16 %v2017
      %v2250 = vunpack.c.l.b16 %v2018
      %v2251 = vunpack.c.l.b16 %v2019
      %v2252 = vunpack.c.l.b16 %v2020
      %v2253 = vunpack.c.l.b16 %v2021
      %v2254 = vunpack.c.l.b16 %v2022
      %v2255 = vpack.c.b16 %v2248, %v2247
      %v2256 = vpack.c.b16 %v2250, %v2249
      %v2257 = vpack.c.b16 %v2252, %v2251
      %v2258 = vpack.c.b16 %v2254, %v2253
      %v2260 = vsel %vm1728, %v2255, 0
      %v2263 = vsel %vm1728, %v2256, 0
      %v2266 = vsel %vm1728, %v2257, 0
      %v2269 = vsel %vm1728, %v2258, 0
      %v2272 = vsel %vm2170, %v2023, 0
      %2274 = vmatprep.subr.bf16.mxu0 0
      %2275 = vmatpush1.bf16.msra.mxu0 %v2272
      %2276 = vmatprep.subr.bf16.mxu0 0
      %2277 = vmatpush1.bf16.msra.mxu0 0
      %2278 = vmatprep.subr.bf16.mxu0 0
      %2279 = vmatpush1.bf16.msra.mxu0 0
      %2280 = vmatprep.subr.bf16.mxu0 0
      %2281 = vmatpush1.bf16.msra.mxu0 0
      %2282 = vmatprep.subr.bf16.mxu0 0
      %2283 = vmatpush1.bf16.msra.mxu0 0
      %2284 = vmatprep.subr.bf16.mxu0 0
      %2285 = vmatpush1.bf16.msra.mxu0 0
      %2286 = vmatprep.subr.bf16.mxu0 0
      %2287 = vmatpush1.bf16.msra.mxu0 0
      %2288 = vmatprep.subr.bf16.mxu0 0
      %2289 = vmatpush1.bf16.msra.mxu0 0
      %2290 = vmatprep.subr.bf16.mxu0 0
      %2291 = vmatpush1.bf16.msra.mxu0 0
      %2292 = vmatprep.subr.bf16.mxu0 0
      %2293 = vmatpush1.bf16.msra.mxu0 0
      %2294 = vmatprep.subr.bf16.mxu0 0
      %2295 = vmatpush1.bf16.msra.mxu0 0
      %2296 = vmatprep.subr.bf16.mxu0 0
      %2297 = vmatpush1.bf16.msra.mxu0 0
      %2298 = vmatprep.subr.bf16.mxu0 0
      %2299 = vmatpush1.bf16.msra.mxu0 0
      %2300 = vmatprep.subr.bf16.mxu0 0
      %2301 = vmatpush1.bf16.msra.mxu0 0
      %2302 = vmatprep.subr.bf16.mxu0 0
      %2303 = vmatpush1.bf16.msra.mxu0 0
      %2304 = vmatprep.subr.bf16.mxu0 0
      %2305 = vmatpush1.bf16.msra.mxu0 0
      %2306 = vmatprep.mubr.bf16.mxu0 0
      %2307 = vmatmul.mubr.bf16.gmra.mrb[0].mxu0 %v2260
      %v2308 = vpop.f32.mrb[0].mxu0
      %v2309 = vadd.f32 %v2209, %v2308
      %v2310 = vpop.f32.mrb[0].mxu0
      %v2311 = vpop.f32.mrb[0].mxu0
      %v2312 = vadd.f32 %v2212, %v2311
      %v2313 = vpop.f32.mrb[0].mxu0
      %2314 = vmatprep.mubr.bf16.mxu0 0
      %2315 = vmatmul.mubr.bf16.gmra.mrb[0].mxu0 %v2263
      %v2316 = vpop.f32.mrb[0].mxu0
      %v2317 = vadd.f32 %v2217, %v2316
      %v2318 = vpop.f32.mrb[0].mxu0
      %v2319 = vpop.f32.mrb[0].mxu0
      %v2320 = vadd.f32 %v2220, %v2319
      %v2321 = vpop.f32.mrb[0].mxu0
      %2322 = vmatprep.mubr.bf16.mxu0 0
      %2323 = vmatmul.mubr.bf16.gmra.mrb[0].mxu0 %v2266
      %v2324 = vpop.f32.mrb[0].mxu0
      %v2325 = vadd.f32 %v2225, %v2324
      %v2326 = vpop.f32.mrb[0].mxu0
      %v2327 = vpop.f32.mrb[0].mxu0
      %v2328 = vadd.f32 %v2228, %v2327
      %v2329 = vpop.f32.mrb[0].mxu0
      %2330 = vmatprep.mubr.bf16.mxu0 0
      %2331 = vmatmul.mubr.bf16.gmra.mrb[0].mxu0 %v2269
      %v2332 = vpop.f32.mrb[0].mxu0
      %v2333 = vadd.f32 %v2233, %v2332
      %v2334 = vpop.f32.mrb[0].mxu0
      %v2335 = vpop.f32.mrb[0].mxu0
      %v2336 = vadd.f32 %v2236, %v2335
      %v2337 = vpop.f32.mrb[0].mxu0
      %2338 = vdwg.mxu0
      %v2339 = vld [vmem:[#allocation2] sm:$0xe]
      %v2340 = vld [vmem:[#allocation2 + $0x8] sm:$0xe]
      %v2341 = vld [vmem:[#allocation2 + $0x10] sm:$0xe]
      %v2342 = vld [vmem:[#allocation2 + $0x18] sm:$0xe]
      %v2343 = vld [vmem:[#allocation2 + $0x20] sm:$0xe]
      %v2344 = vld [vmem:[#allocation2 + $0x28] sm:$0xe]
      %v2345 = vld [vmem:[#allocation2 + $0x30] sm:$0xe]
      %v2346 = vld [vmem:[#allocation2 + $0x38] sm:$0xe]
      %vm2363 = vcmask 1042432
      %vm2364 = vcmask 1046532
      %vm2365 = vmor %vm2363, %vm2364
      %v2366 = vrot.slane %v2339, 5
      %v2367 = vrot.slane %v2366, 4
      %v2368 = vrot.slane %v2024, 5
      %v2369 = vsel %vm2365, %v2367, %v2368
      %v2370 = vrot.slane %v2340, 5
      %v2371 = vrot.slane %v2370, 4
      %v2372 = vrot.slane %v2025, 5
      %v2373 = vsel %vm2365, %v2371, %v2372
      %v2374 = vrot.slane %v2341, 5
      %v2375 = vrot.slane %v2374, 4
      %v2376 = vrot.slane %v2026, 5
      %v2377 = vsel %vm2365, %v2375, %v2376
      %v2378 = vrot.slane %v2342, 5
      %v2379 = vrot.slane %v2378, 4
      %v2380 = vrot.slane %v2027, 5
      %v2381 = vsel %vm2365, %v2379, %v2380
      %v2382 = vrot.slane %v2343, 5
      %v2383 = vrot.slane %v2382, 4
      %v2384 = vrot.slane %v2028, 5
      %v2385 = vsel %vm2365, %v2383, %v2384
      %v2386 = vrot.slane %v2344, 5
      %v2387 = vrot.slane %v2386, 4
      %v2388 = vrot.slane %v2029, 5
      %v2389 = vsel %vm2365, %v2387, %v2388
      %v2390 = vrot.slane %v2345, 5
      %v2391 = vrot.slane %v2390, 4
      %v2392 = vrot.slane %v2030, 5
      %v2393 = vsel %vm2365, %v2391, %v2392
      %v2394 = vrot.slane %v2346, 5
      %v2395 = vrot.slane %v2394, 4
      %v2396 = vrot.slane %v2031, 5
      %v2397 = vsel %vm2365, %v2395, %v2396
      %s2398 = scalar_lea.vmem %s5, 8
      %v2399 = vld [vmem:[%s2398] sm:$0xf]
      %v2400 = vunpack.c.l.b16 %v2369
      %v2401 = vunpack.c.l.b16 %v2373
      %v2402 = vunpack.c.l.b16 %v2377
      %v2403 = vunpack.c.l.b16 %v2381
      %v2404 = vunpack.c.l.b16 %v2385
      %v2405 = vunpack.c.l.b16 %v2389
      %v2406 = vunpack.c.l.b16 %v2393
      %v2407 = vunpack.c.l.b16 %v2397
      %v2408 = vpack.c.b16 %v2401, %v2400
      %v2409 = vpack.c.b16 %v2403, %v2402
      %v2410 = vpack.c.b16 %v2405, %v2404
      %v2411 = vpack.c.b16 %v2407, %v2406
      %v2413 = vsel %vm1728, %v2408, 0
      %v2416 = vsel %vm1728, %v2409, 0
      %v2419 = vsel %vm1728, %v2410, 0
      %v2422 = vsel %vm1728, %v2411, 0
      %v2425 = vsel %vm2170, %v2399, 0
      %2427 = vmatprep.subr.bf16.mxu0 0
      %2428 = vmatpush1.bf16.msra.mxu0 %v2425
      %2429 = vmatprep.subr.bf16.mxu0 0
      %2430 = vmatpush1.bf16.msra.mxu0 0
      %2431 = vmatprep.subr.bf16.mxu0 0
      %2432 = vmatpush1.bf16.msra.mxu0 0
      %2433 = vmatprep.subr.bf16.mxu0 0
      %2434 = vmatpush1.bf16.msra.mxu0 0
      %2435 = vmatprep.subr.bf16.mxu0 0
      %2436 = vmatpush1.bf16.msra.mxu0 0
      %2437 = vmatprep.subr.bf16.mxu0 0
      %2438 = vmatpush1.bf16.msra.mxu0 0
      %2439 = vmatprep.subr.bf16.mxu0 0
      %2440 = vmatpush1.bf16.msra.mxu0 0
      %2441 = vmatprep.subr.bf16.mxu0 0
      %2442 = vmatpush1.bf16.msra.mxu0 0
      %2443 = vmatprep.subr.bf16.mxu0 0
      %2444 = vmatpush1.bf16.msra.mxu0 0
      %2445 = vmatprep.subr.bf16.mxu0 0
      %2446 = vmatpush1.bf16.msra.mxu0 0
      %2447 = vmatprep.subr.bf16.mxu0 0
      %2448 = vmatpush1.bf16.msra.mxu0 0
      %2449 = vmatprep.subr.bf16.mxu0 0
      %2450 = vmatpush1.bf16.msra.mxu0 0
      %2451 = vmatprep.subr.bf16.mxu0 0
      %2452 = vmatpush1.bf16.msra.mxu0 0
      %2453 = vmatprep.subr.bf16.mxu0 0
      %2454 = vmatpush1.bf16.msra.mxu0 0
      %2455 = vmatprep.subr.bf16.mxu0 0
      %2456 = vmatpush1.bf16.msra.mxu0 0
      %2457 = vmatprep.subr.bf16.mxu0 0
      %2458 = vmatpush1.bf16.msra.mxu0 0
      %2459 = vmatprep.mubr.bf16.mxu0 0
      %2460 = vmatmul.mubr.bf16.gmra.mrb[0].mxu0 %v2413
      %v2461 = vpop.f32.mrb[0].mxu0
      %v2462 = vadd.f32 0.0, %v2461
      %v2463 = vpop.f32.mrb[0].mxu0
      %v2464 = vpop.f32.mrb[0].mxu0
      %v2465 = vadd.f32 0.0, %v2464
      %v2466 = vpop.f32.mrb[0].mxu0
      %2467 = vmatprep.mubr.bf16.mxu0 0
      %2468 = vmatmul.mubr.bf16.gmra.mrb[0].mxu0 %v2416
      %v2469 = vpop.f32.mrb[0].mxu0
      %v2470 = vadd.f32 0.0, %v2469
      %v2471 = vpop.f32.mrb[0].mxu0
      %v2472 = vpop.f32.mrb[0].mxu0
      %v2473 = vadd.f32 0.0, %v2472
      %v2474 = vpop.f32.mrb[0].mxu0
      %2475 = vmatprep.mubr.bf16.mxu0 0
      %2476 = vmatmul.mubr.bf16.gmra.mrb[0].mxu0 %v2419
      %v2477 = vpop.f32.mrb[0].mxu0
      %v2478 = vadd.f32 0.0, %v2477
      %v2479 = vpop.f32.mrb[0].mxu0
      %v2480 = vpop.f32.mrb[0].mxu0
      %v2481 = vadd.f32 0.0, %v2480
      %v2482 = vpop.f32.mrb[0].mxu0
      %2483 = vmatprep.mubr.bf16.mxu0 0
      %2484 = vmatmul.mubr.bf16.gmra.mrb[0].mxu0 %v2422
      %v2485 = vpop.f32.mrb[0].mxu0
      %v2486 = vadd.f32 0.0, %v2485
      %v2487 = vpop.f32.mrb[0].mxu0
      %v2488 = vpop.f32.mrb[0].mxu0
      %v2489 = vadd.f32 0.0, %v2488
      %v2490 = vpop.f32.mrb[0].mxu0
      %2491 = vdwg.mxu0
      %v2492 = vadd.f32 %v2309, %v2462
      %v2493 = vadd.f32 %v2312, %v2465
      %v2494 = vadd.f32 %v2317, %v2470
      %v2495 = vadd.f32 %v2320, %v2473
      %v2496 = vadd.f32 %v2325, %v2478
      %v2497 = vadd.f32 %v2328, %v2481
      %v2498 = vadd.f32 %v2333, %v2486
      %v2499 = vadd.f32 %v2336, %v2489
      %v2500 = vld [vmem:[%s1960] sm:$0xf]
      %v2501 = vld [vmem:[%s1960 + $0x8] sm:$0xf]
      %v2502 = vld [vmem:[%s1960 + $0x10] sm:$0xf]
      %v2503 = vld [vmem:[%s1960 + $0x18] sm:$0xf]
      %v2504 = vld [vmem:[%s1960 + $0x20] sm:$0xf]
      %v2505 = vld [vmem:[%s1960 + $0x28] sm:$0xf]
      %v2506 = vld [vmem:[%s1960 + $0x30] sm:$0xf]
      %v2507 = vld [vmem:[%s1960 + $0x38] sm:$0xf]
      %s2508 = scalar_lea.vmem %s5, 12
      %v2509 = vld [vmem:[%s2508] sm:$0xf]
      %v2518 = vunpack.c.l.b16 %v2500
      %v2519 = vunpack.c.l.b16 %v2501
      %v2520 = vunpack.c.l.b16 %v2502
      %v2521 = vunpack.c.l.b16 %v2503
      %v2522 = vunpack.c.l.b16 %v2504
      %v2523 = vunpack.c.l.b16 %v2505
      %v2524 = vunpack.c.l.b16 %v2506
      %v2525 = vunpack.c.l.b16 %v2507
      %v2526 = vpack.c.b16 %v2519, %v2518
      %v2527 = vpack.c.b16 %v2521, %v2520
      %v2528 = vpack.c.b16 %v2523, %v2522
      %v2529 = vpack.c.b16 %v2525, %v2524
      %v2531 = vsel %vm1728, %v2526, 0
      %v2534 = vsel %vm1728, %v2527, 0
      %v2537 = vsel %vm1728, %v2528, 0
      %v2540 = vsel %vm1728, %v2529, 0
      %v2543 = vsel %vm2170, %v2509, 0
      %2545 = vmatprep.subr.bf16.mxu0 0
      %2546 = vmatpush1.bf16.msra.mxu0 %v2543
      %2547 = vmatprep.subr.bf16.mxu0 0
      %2548 = vmatpush1.bf16.msra.mxu0 0
      %2549 = vmatprep.subr.bf16.mxu0 0
      %2550 = vmatpush1.bf16.msra.mxu0 0
      %2551 = vmatprep.subr.bf16.mxu0 0
      %2552 = vmatpush1.bf16.msra.mxu0 0
      %2553 = vmatprep.subr.bf16.mxu0 0
      %2554 = vmatpush1.bf16.msra.mxu0 0
      %2555 = vmatprep.subr.bf16.mxu0 0
      %2556 = vmatpush1.bf16.msra.mxu0 0
      %2557 = vmatprep.subr.bf16.mxu0 0
      %2558 = vmatpush1.bf16.msra.mxu0 0
      %2559 = vmatprep.subr.bf16.mxu0 0
      %2560 = vmatpush1.bf16.msra.mxu0 0
      %2561 = vmatprep.subr.bf16.mxu0 0
      %2562 = vmatpush1.bf16.msra.mxu0 0
      %2563 = vmatprep.subr.bf16.mxu0 0
      %2564 = vmatpush1.bf16.msra.mxu0 0
      %2565 = vmatprep.subr.bf16.mxu0 0
      %2566 = vmatpush1.bf16.msra.mxu0 0
      %2567 = vmatprep.subr.bf16.mxu0 0
      %2568 = vmatpush1.bf16.msra.mxu0 0
      %2569 = vmatprep.subr.bf16.mxu0 0
      %2570 = vmatpush1.bf16.msra.mxu0 0
      %2571 = vmatprep.subr.bf16.mxu0 0
      %2572 = vmatpush1.bf16.msra.mxu0 0
      %2573 = vmatprep.subr.bf16.mxu0 0
      %2574 = vmatpush1.bf16.msra.mxu0 0
      %2575 = vmatprep.subr.bf16.mxu0 0
      %2576 = vmatpush1.bf16.msra.mxu0 0
      %2577 = vmatprep.mubr.bf16.mxu0 0
      %2578 = vmatmul.mubr.bf16.gmra.mrb[0].mxu0 %v2531
      %v2579 = vpop.f32.mrb[0].mxu0
      %v2580 = vadd.f32 0.0, %v2579
      %v2581 = vpop.f32.mrb[0].mxu0
      %v2582 = vpop.f32.mrb[0].mxu0
      %v2583 = vadd.f32 0.0, %v2582
      %v2584 = vpop.f32.mrb[0].mxu0
      %2585 = vmatprep.mubr.bf16.mxu0 0
      %2586 = vmatmul.mubr.bf16.gmra.mrb[0].mxu0 %v2534
      %v2587 = vpop.f32.mrb[0].mxu0
      %v2588 = vadd.f32 0.0, %v2587
      %v2589 = vpop.f32.mrb[0].mxu0
      %v2590 = vpop.f32.mrb[0].mxu0
      %v2591 = vadd.f32 0.0, %v2590
      %v2592 = vpop.f32.mrb[0].mxu0
      %2593 = vmatprep.mubr.bf16.mxu0 0
      %2594 = vmatmul.mubr.bf16.gmra.mrb[0].mxu0 %v2537
      %v2595 = vpop.f32.mrb[0].mxu0
      %v2596 = vadd.f32 0.0, %v2595
      %v2597 = vpop.f32.mrb[0].mxu0
      %v2598 = vpop.f32.mrb[0].mxu0
      %v2599 = vadd.f32 0.0, %v2598
      %v2600 = vpop.f32.mrb[0].mxu0
      %2601 = vmatprep.mubr.bf16.mxu0 0
      %2602 = vmatmul.mubr.bf16.gmra.mrb[0].mxu0 %v2540
      %v2603 = vpop.f32.mrb[0].mxu0
      %v2604 = vadd.f32 0.0, %v2603
      %v2605 = vpop.f32.mrb[0].mxu0
      %v2606 = vpop.f32.mrb[0].mxu0
      %v2607 = vadd.f32 0.0, %v2606
      %v2608 = vpop.f32.mrb[0].mxu0
      %2609 = vdwg.mxu0
      %v2610 = vadd.f32 %v2492, %v2580
      %v2611 = vadd.f32 %v2493, %v2583
      %v2612 = vadd.f32 %v2494, %v2588
      %v2613 = vadd.f32 %v2495, %v2591
      %v2614 = vadd.f32 %v2496, %v2596
      %v2615 = vadd.f32 %v2497, %v2599
      %v2616 = vadd.f32 %v2498, %v2604
      %v2617 = vadd.f32 %v2499, %v2607
      %v2618 = vld [vmem:[%s1960] sm:$0xf]
      %v2619 = vld [vmem:[%s1960 + $0x4] sm:$0x1]
      %v2620 = vld [vmem:[%s1960 + $0x8] sm:$0xf]
      %v2621 = vld [vmem:[%s1960 + $0xc] sm:$0x1]
      %v2622 = vld [vmem:[%s1960 + $0x10] sm:$0xf]
      %v2623 = vld [vmem:[%s1960 + $0x14] sm:$0x1]
      %v2624 = vld [vmem:[%s1960 + $0x18] sm:$0xf]
      %v2625 = vld [vmem:[%s1960 + $0x1c] sm:$0x1]
      %v2626 = vld [vmem:[%s1960 + $0x20] sm:$0xf]
      %v2627 = vld [vmem:[%s1960 + $0x24] sm:$0x1]
      %v2628 = vld [vmem:[%s1960 + $0x28] sm:$0xf]
      %v2629 = vld [vmem:[%s1960 + $0x2c] sm:$0x1]
      %v2630 = vld [vmem:[%s1960 + $0x30] sm:$0xf]
      %v2631 = vld [vmem:[%s1960 + $0x34] sm:$0x1]
      %v2632 = vld [vmem:[%s1960 + $0x38] sm:$0xf]
      %v2633 = vld [vmem:[%s1960 + $0x3c] sm:$0x1]
      %v2635 = vshrl.u32 %v2618, 16
      %v2637 = vrot.slane %v2635, 4
      %v2638 = vshll.u32 %v2618, 16
      %v2640 = vrot.slane %v2638, 5
      %v2641 = vor.u32 %v2637, %v2640
      %v2642 = vrot.slane %v2641, 4
      %v2644 = vshll.u32 %v2619, 16
      %v2646 = vrot.slane %v2644, 5
      %v2647 = vsel %vm579, %v2642, %v2646
      %v2649 = vshrl.u32 %v2620, 16
      %v2651 = vrot.slane %v2649, 4
      %v2652 = vshll.u32 %v2620, 16
      %v2654 = vrot.slane %v2652, 5
      %v2655 = vor.u32 %v2651, %v2654
      %v2656 = vrot.slane %v2655, 4
      %v2658 = vshll.u32 %v2621, 16
      %v2660 = vrot.slane %v2658, 5
      %v2661 = vsel %vm579, %v2656, %v2660
      %v2663 = vshrl.u32 %v2622, 16
      %v2665 = vrot.slane %v2663, 4
      %v2666 = vshll.u32 %v2622, 16
      %v2668 = vrot.slane %v2666, 5
      %v2669 = vor.u32 %v2665, %v2668
      %v2670 = vrot.slane %v2669, 4
      %v2672 = vshll.u32 %v2623, 16
      %v2674 = vrot.slane %v2672, 5
      %v2675 = vsel %vm579, %v2670, %v2674
      %v2677 = vshrl.u32 %v2624, 16
      %v2679 = vrot.slane %v2677, 4
      %v2680 = vshll.u32 %v2624, 16
      %v2682 = vrot.slane %v2680, 5
      %v2683 = vor.u32 %v2679, %v2682
      %v2684 = vrot.slane %v2683, 4
      %v2686 = vshll.u32 %v2625, 16
      %v2688 = vrot.slane %v2686, 5
      %v2689 = vsel %vm579, %v2684, %v2688
      %v2691 = vshrl.u32 %v2626, 16
      %v2693 = vrot.slane %v2691, 4
      %v2694 = vshll.u32 %v2626, 16
      %v2696 = vrot.slane %v2694, 5
      %v2697 = vor.u32 %v2693, %v2696
      %v2698 = vrot.slane %v2697, 4
      %v2700 = vshll.u32 %v2627, 16
      %v2702 = vrot.slane %v2700, 5
      %v2703 = vsel %vm579, %v2698, %v2702
      %v2705 = vshrl.u32 %v2628, 16
      %v2707 = vrot.slane %v2705, 4
      %v2708 = vshll.u32 %v2628, 16
      %v2710 = vrot.slane %v2708, 5
      %v2711 = vor.u32 %v2707, %v2710
      %v2712 = vrot.slane %v2711, 4
      %v2714 = vshll.u32 %v2629, 16
      %v2716 = vrot.slane %v2714, 5
      %v2717 = vsel %vm579, %v2712, %v2716
      %v2719 = vshrl.u32 %v2630, 16
      %v2721 = vrot.slane %v2719, 4
      %v2722 = vshll.u32 %v2630, 16
      %v2724 = vrot.slane %v2722, 5
      %v2725 = vor.u32 %v2721, %v2724
      %v2726 = vrot.slane %v2725, 4
      %v2728 = vshll.u32 %v2631, 16
      %v2730 = vrot.slane %v2728, 5
      %v2731 = vsel %vm579, %v2726, %v2730
      %v2733 = vshrl.u32 %v2632, 16
      %v2735 = vrot.slane %v2733, 4
      %v2736 = vshll.u32 %v2632, 16
      %v2738 = vrot.slane %v2736, 5
      %v2739 = vor.u32 %v2735, %v2738
      %v2740 = vrot.slane %v2739, 4
      %v2742 = vshll.u32 %v2633, 16
      %v2744 = vrot.slane %v2742, 5
      %v2745 = vsel %vm579, %v2740, %v2744
      %s2746 = scalar_lea.vmem %s5, 16
      %v2747 = vld [vmem:[%s2746] sm:$0xf]
      %v2748 = vunpack.c.l.b16 %v2647
      %v2749 = vunpack.c.l.b16 %v2661
      %v2750 = vunpack.c.l.b16 %v2675
      %v2751 = vunpack.c.l.b16 %v2689
      %v2752 = vunpack.c.l.b16 %v2703
      %v2753 = vunpack.c.l.b16 %v2717
      %v2754 = vunpack.c.l.b16 %v2731
      %v2755 = vunpack.c.l.b16 %v2745
      %v2756 = vpack.c.b16 %v2749, %v2748
      %v2757 = vpack.c.b16 %v2751, %v2750
      %v2758 = vpack.c.b16 %v2753, %v2752
      %v2759 = vpack.c.b16 %v2755, %v2754
      %v2761 = vsel %vm1728, %v2756, 0
      %v2764 = vsel %vm1728, %v2757, 0
      %v2767 = vsel %vm1728, %v2758, 0
      %v2770 = vsel %vm1728, %v2759, 0
      %v2773 = vsel %vm2170, %v2747, 0
      %2775 = vmatprep.subr.bf16.mxu0 0
      %2776 = vmatpush1.bf16.msra.mxu0 %v2773
      %2777 = vmatprep.subr.bf16.mxu0 0
      %2778 = vmatpush1.bf16.msra.mxu0 0
      %2779 = vmatprep.subr.bf16.mxu0 0
      %2780 = vmatpush1.bf16.msra.mxu0 0
      %2781 = vmatprep.subr.bf16.mxu0 0
      %2782 = vmatpush1.bf16.msra.mxu0 0
      %2783 = vmatprep.subr.bf16.mxu0 0
      %2784 = vmatpush1.bf16.msra.mxu0 0
      %2785 = vmatprep.subr.bf16.mxu0 0
      %2786 = vmatpush1.bf16.msra.mxu0 0
      %2787 = vmatprep.subr.bf16.mxu0 0
      %2788 = vmatpush1.bf16.msra.mxu0 0
      %2789 = vmatprep.subr.bf16.mxu0 0
      %2790 = vmatpush1.bf16.msra.mxu0 0
      %2791 = vmatprep.subr.bf16.mxu0 0
      %2792 = vmatpush1.bf16.msra.mxu0 0
      %2793 = vmatprep.subr.bf16.mxu0 0
      %2794 = vmatpush1.bf16.msra.mxu0 0
      %2795 = vmatprep.subr.bf16.mxu0 0
      %2796 = vmatpush1.bf16.msra.mxu0 0
      %2797 = vmatprep.subr.bf16.mxu0 0
      %2798 = vmatpush1.bf16.msra.mxu0 0
      %2799 = vmatprep.subr.bf16.mxu0 0
      %2800 = vmatpush1.bf16.msra.mxu0 0
      %2801 = vmatprep.subr.bf16.mxu0 0
      %2802 = vmatpush1.bf16.msra.mxu0 0
      %2803 = vmatprep.subr.bf16.mxu0 0
      %2804 = vmatpush1.bf16.msra.mxu0 0
      %2805 = vmatprep.subr.bf16.mxu0 0
      %2806 = vmatpush1.bf16.msra.mxu0 0
      %2807 = vmatprep.mubr.bf16.mxu0 0
      %2808 = vmatmul.mubr.bf16.gmra.mrb[0].mxu0 %v2761
      %v2809 = vpop.f32.mrb[0].mxu0
      %v2810 = vadd.f32 0.0, %v2809
      %v2811 = vpop.f32.mrb[0].mxu0
      %v2812 = vpop.f32.mrb[0].mxu0
      %v2813 = vadd.f32 0.0, %v2812
      %v2814 = vpop.f32.mrb[0].mxu0
      %2815 = vmatprep.mubr.bf16.mxu0 0
      %2816 = vmatmul.mubr.bf16.gmra.mrb[0].mxu0 %v2764
      %v2817 = vpop.f32.mrb[0].mxu0
      %v2818 = vadd.f32 0.0, %v2817
      %v2819 = vpop.f32.mrb[0].mxu0
      %v2820 = vpop.f32.mrb[0].mxu0
      %v2821 = vadd.f32 0.0, %v2820
      %v2822 = vpop.f32.mrb[0].mxu0
      %2823 = vmatprep.mubr.bf16.mxu0 0
      %2824 = vmatmul.mubr.bf16.gmra.mrb[0].mxu0 %v2767
      %v2825 = vpop.f32.mrb[0].mxu0
      %v2826 = vadd.f32 0.0, %v2825
      %v2827 = vpop.f32.mrb[0].mxu0
      %v2828 = vpop.f32.mrb[0].mxu0
      %v2829 = vadd.f32 0.0, %v2828
      %v2830 = vpop.f32.mrb[0].mxu0
      %2831 = vmatprep.mubr.bf16.mxu0 0
      %2832 = vmatmul.mubr.bf16.gmra.mrb[0].mxu0 %v2770
      %v2833 = vpop.f32.mrb[0].mxu0
      %v2834 = vadd.f32 0.0, %v2833
      %v2835 = vpop.f32.mrb[0].mxu0
      %v2836 = vpop.f32.mrb[0].mxu0
      %v2837 = vadd.f32 0.0, %v2836
      %v2838 = vpop.f32.mrb[0].mxu0
      %2839 = vdwg.mxu0
      %v2840 = vadd.f32 %v2610, %v2810
      %v2841 = vadd.f32 %v2611, %v2813
      %v2842 = vadd.f32 %v2612, %v2818
      %v2843 = vadd.f32 %v2613, %v2821
      %v2844 = vadd.f32 %v2614, %v2826
      %v2845 = vadd.f32 %v2615, %v2829
      %v2846 = vadd.f32 %v2616, %v2834
      %v2847 = vadd.f32 %v2617, %v2837
      %v2848 = vld [vmem:[%s1960] sm:$0xe]
      %v2849 = vld [vmem:[%s1960 + $0x8] sm:$0xe]
      %v2850 = vld [vmem:[%s1960 + $0x10] sm:$0xe]
      %v2851 = vld [vmem:[%s1960 + $0x18] sm:$0xe]
      %v2852 = vld [vmem:[%s1960 + $0x20] sm:$0xe]
      %v2853 = vld [vmem:[%s1960 + $0x28] sm:$0xe]
      %v2854 = vld [vmem:[%s1960 + $0x30] sm:$0xe]
      %v2855 = vld [vmem:[%s1960 + $0x38] sm:$0xe]
      %v2872 = vrot.slane %v2848, 5
      %v2873 = vrot.slane %v2872, 4
      %v2874 = vrot.slane %v2619, 5
      %v2875 = vsel %vm2365, %v2873, %v2874
      %v2876 = vrot.slane %v2849, 5
      %v2877 = vrot.slane %v2876, 4
      %v2878 = vrot.slane %v2621, 5
      %v2879 = vsel %vm2365, %v2877, %v2878
      %v2880 = vrot.slane %v2850, 5
      %v2881 = vrot.slane %v2880, 4
      %v2882 = vrot.slane %v2623, 5
      %v2883 = vsel %vm2365, %v2881, %v2882
      %v2884 = vrot.slane %v2851, 5
      %v2885 = vrot.slane %v2884, 4
      %v2886 = vrot.slane %v2625, 5
      %v2887 = vsel %vm2365, %v2885, %v2886
      %v2888 = vrot.slane %v2852, 5
      %v2889 = vrot.slane %v2888, 4
      %v2890 = vrot.slane %v2627, 5
      %v2891 = vsel %vm2365, %v2889, %v2890
      %v2892 = vrot.slane %v2853, 5
      %v2893 = vrot.slane %v2892, 4
      %v2894 = vrot.slane %v2629, 5
      %v2895 = vsel %vm2365, %v2893, %v2894
      %v2896 = vrot.slane %v2854, 5
      %v2897 = vrot.slane %v2896, 4
      %v2898 = vrot.slane %v2631, 5
      %v2899 = vsel %vm2365, %v2897, %v2898
      %v2900 = vrot.slane %v2855, 5
      %v2901 = vrot.slane %v2900, 4
      %v2902 = vrot.slane %v2633, 5
      %v2903 = vsel %vm2365, %v2901, %v2902
      %s2904 = scalar_lea.vmem %s5, 20
      %v2905 = vld [vmem:[%s2904] sm:$0xf]
      %v2906 = vunpack.c.l.b16 %v2875
      %v2907 = vunpack.c.l.b16 %v2879
      %v2908 = vunpack.c.l.b16 %v2883
      %v2909 = vunpack.c.l.b16 %v2887
      %v2910 = vunpack.c.l.b16 %v2891
      %v2911 = vunpack.c.l.b16 %v2895
      %v2912 = vunpack.c.l.b16 %v2899
      %v2913 = vunpack.c.l.b16 %v2903
      %v2914 = vpack.c.b16 %v2907, %v2906
      %v2915 = vpack.c.b16 %v2909, %v2908
      %v2916 = vpack.c.b16 %v2911, %v2910
      %v2917 = vpack.c.b16 %v2913, %v2912
      %v2919 = vsel %vm1728, %v2914, 0
      %v2922 = vsel %vm1728, %v2915, 0
      %v2925 = vsel %vm1728, %v2916, 0
      %v2928 = vsel %vm1728, %v2917, 0
      %v2931 = vsel %vm2170, %v2905, 0
      %2933 = vmatprep.subr.bf16.mxu0 0
      %2934 = vmatpush1.bf16.msra.mxu0 %v2931
      %2935 = vmatprep.subr.bf16.mxu0 0
      %2936 = vmatpush1.bf16.msra.mxu0 0
      %2937 = vmatprep.subr.bf16.mxu0 0
      %2938 = vmatpush1.bf16.msra.mxu0 0
      %2939 = vmatprep.subr.bf16.mxu0 0
      %2940 = vmatpush1.bf16.msra.mxu0 0
      %2941 = vmatprep.subr.bf16.mxu0 0
      %2942 = vmatpush1.bf16.msra.mxu0 0
      %2943 = vmatprep.subr.bf16.mxu0 0
      %2944 = vmatpush1.bf16.msra.mxu0 0
      %2945 = vmatprep.subr.bf16.mxu0 0
      %2946 = vmatpush1.bf16.msra.mxu0 0
      %2947 = vmatprep.subr.bf16.mxu0 0
      %2948 = vmatpush1.bf16.msra.mxu0 0
      %2949 = vmatprep.subr.bf16.mxu0 0
      %2950 = vmatpush1.bf16.msra.mxu0 0
      %2951 = vmatprep.subr.bf16.mxu0 0
      %2952 = vmatpush1.bf16.msra.mxu0 0
      %2953 = vmatprep.subr.bf16.mxu0 0
      %2954 = vmatpush1.bf16.msra.mxu0 0
      %2955 = vmatprep.subr.bf16.mxu0 0
      %2956 = vmatpush1.bf16.msra.mxu0 0
      %2957 = vmatprep.subr.bf16.mxu0 0
      %2958 = vmatpush1.bf16.msra.mxu0 0
      %2959 = vmatprep.subr.bf16.mxu0 0
      %2960 = vmatpush1.bf16.msra.mxu0 0
      %2961 = vmatprep.subr.bf16.mxu0 0
      %2962 = vmatpush1.bf16.msra.mxu0 0
      %2963 = vmatprep.subr.bf16.mxu0 0
      %2964 = vmatpush1.bf16.msra.mxu0 0
      %2965 = vmatprep.mubr.bf16.mxu0 0
      %2966 = vmatmul.mubr.bf16.gmra.mrb[0].mxu0 %v2919
      %v2967 = vpop.f32.mrb[0].mxu0
      %v2968 = vadd.f32 0.0, %v2967
      %v2969 = vpop.f32.mrb[0].mxu0
      %v2970 = vpop.f32.mrb[0].mxu0
      %v2971 = vadd.f32 0.0, %v2970
      %v2972 = vpop.f32.mrb[0].mxu0
      %2973 = vmatprep.mubr.bf16.mxu0 0
      %2974 = vmatmul.mubr.bf16.gmra.mrb[0].mxu0 %v2922
      %v2975 = vpop.f32.mrb[0].mxu0
      %v2976 = vadd.f32 0.0, %v2975
      %v2977 = vpop.f32.mrb[0].mxu0
      %v2978 = vpop.f32.mrb[0].mxu0
      %v2979 = vadd.f32 0.0, %v2978
      %v2980 = vpop.f32.mrb[0].mxu0
      %2981 = vmatprep.mubr.bf16.mxu0 0
      %2982 = vmatmul.mubr.bf16.gmra.mrb[0].mxu0 %v2925
      %v2983 = vpop.f32.mrb[0].mxu0
      %v2984 = vadd.f32 0.0, %v2983
      %v2985 = vpop.f32.mrb[0].mxu0
      %v2986 = vpop.f32.mrb[0].mxu0
      %v2987 = vadd.f32 0.0, %v2986
      %v2988 = vpop.f32.mrb[0].mxu0
      %2989 = vmatprep.mubr.bf16.mxu0 0
      %2990 = vmatmul.mubr.bf16.gmra.mrb[0].mxu0 %v2928
      %v2991 = vpop.f32.mrb[0].mxu0
      %v2992 = vadd.f32 0.0, %v2991
      %v2993 = vpop.f32.mrb[0].mxu0
      %v2994 = vpop.f32.mrb[0].mxu0
      %v2995 = vadd.f32 0.0, %v2994
      %v2996 = vpop.f32.mrb[0].mxu0
      %2997 = vdwg.mxu0
      %v2998 = vadd.f32 %v2840, %v2968
      %v2999 = vadd.f32 %v2841, %v2971
      %v3000 = vadd.f32 %v2842, %v2976
      %v3001 = vadd.f32 %v2843, %v2979
      %v3002 = vadd.f32 %v2844, %v2984
      %v3003 = vadd.f32 %v2845, %v2987
      %v3004 = vadd.f32 %v2846, %v2992
      %v3005 = vadd.f32 %v2847, %v2995
      %s3006 = scalar_lea.vmem [#allocation2], 16
      %v3007 = vld [vmem:[%s3006] sm:$0xf]
      %v3008 = vld [vmem:[%s3006 + $0x8] sm:$0xf]
      %v3009 = vld [vmem:[%s3006 + $0x10] sm:$0xf]
      %v3010 = vld [vmem:[%s3006 + $0x18] sm:$0xf]
      %v3011 = vld [vmem:[%s3006 + $0x20] sm:$0xf]
      %v3012 = vld [vmem:[%s3006 + $0x28] sm:$0xf]
      %v3013 = vld [vmem:[%s3006 + $0x30] sm:$0xf]
      %v3014 = vld [vmem:[%s3006 + $0x38] sm:$0xf]
      %s3015 = scalar_lea.vmem %s5, 24
      %v3016 = vld [vmem:[%s3015] sm:$0xf]
      %v3025 = vunpack.c.l.b16 %v3007
      %v3026 = vunpack.c.l.b16 %v3008
      %v3027 = vunpack.c.l.b16 %v3009
      %v3028 = vunpack.c.l.b16 %v3010
      %v3029 = vunpack.c.l.b16 %v3011
      %v3030 = vunpack.c.l.b16 %v3012
      %v3031 = vunpack.c.l.b16 %v3013
      %v3032 = vunpack.c.l.b16 %v3014
      %v3033 = vpack.c.b16 %v3026, %v3025
      %v3034 = vpack.c.b16 %v3028, %v3027
      %v3035 = vpack.c.b16 %v3030, %v3029
      %v3036 = vpack.c.b16 %v3032, %v3031
      %v3038 = vsel %vm1728, %v3033, 0
      %v3041 = vsel %vm1728, %v3034, 0
      %v3044 = vsel %vm1728, %v3035, 0
      %v3047 = vsel %vm1728, %v3036, 0
      %v3050 = vsel %vm2170, %v3016, 0
      %3052 = vmatprep.subr.bf16.mxu0 0
      %3053 = vmatpush1.bf16.msra.mxu0 %v3050
      %3054 = vmatprep.subr.bf16.mxu0 0
      %3055 = vmatpush1.bf16.msra.mxu0 0
      %3056 = vmatprep.subr.bf16.mxu0 0
      %3057 = vmatpush1.bf16.msra.mxu0 0
      %3058 = vmatprep.subr.bf16.mxu0 0
      %3059 = vmatpush1.bf16.msra.mxu0 0
      %3060 = vmatprep.subr.bf16.mxu0 0
      %3061 = vmatpush1.bf16.msra.mxu0 0
      %3062 = vmatprep.subr.bf16.mxu0 0
      %3063 = vmatpush1.bf16.msra.mxu0 0
      %3064 = vmatprep.subr.bf16.mxu0 0
      %3065 = vmatpush1.bf16.msra.mxu0 0
      %3066 = vmatprep.subr.bf16.mxu0 0
      %3067 = vmatpush1.bf16.msra.mxu0 0
      %3068 = vmatprep.subr.bf16.mxu0 0
      %3069 = vmatpush1.bf16.msra.mxu0 0
      %3070 = vmatprep.subr.bf16.mxu0 0
      %3071 = vmatpush1.bf16.msra.mxu0 0
      %3072 = vmatprep.subr.bf16.mxu0 0
      %3073 = vmatpush1.bf16.msra.mxu0 0
      %3074 = vmatprep.subr.bf16.mxu0 0
      %3075 = vmatpush1.bf16.msra.mxu0 0
      %3076 = vmatprep.subr.bf16.mxu0 0
      %3077 = vmatpush1.bf16.msra.mxu0 0
      %3078 = vmatprep.subr.bf16.mxu0 0
      %3079 = vmatpush1.bf16.msra.mxu0 0
      %3080 = vmatprep.subr.bf16.mxu0 0
      %3081 = vmatpush1.bf16.msra.mxu0 0
      %3082 = vmatprep.subr.bf16.mxu0 0
      %3083 = vmatpush1.bf16.msra.mxu0 0
      %3084 = vmatprep.mubr.bf16.mxu0 0
      %3085 = vmatmul.mubr.bf16.gmra.mrb[0].mxu0 %v3038
      %v3086 = vpop.f32.mrb[0].mxu0
      %v3087 = vadd.f32 0.0, %v3086
      %v3088 = vpop.f32.mrb[0].mxu0
      %v3089 = vpop.f32.mrb[0].mxu0
      %v3090 = vadd.f32 0.0, %v3089
      %v3091 = vpop.f32.mrb[0].mxu0
      %3092 = vmatprep.mubr.bf16.mxu0 0
      %3093 = vmatmul.mubr.bf16.gmra.mrb[0].mxu0 %v3041
      %v3094 = vpop.f32.mrb[0].mxu0
      %v3095 = vadd.f32 0.0, %v3094
      %v3096 = vpop.f32.mrb[0].mxu0
      %v3097 = vpop.f32.mrb[0].mxu0
      %v3098 = vadd.f32 0.0, %v3097
      %v3099 = vpop.f32.mrb[0].mxu0
      %3100 = vmatprep.mubr.bf16.mxu0 0
      %3101 = vmatmul.mubr.bf16.gmra.mrb[0].mxu0 %v3044
      %v3102 = vpop.f32.mrb[0].mxu0
      %v3103 = vadd.f32 0.0, %v3102
      %v3104 = vpop.f32.mrb[0].mxu0
      %v3105 = vpop.f32.mrb[0].mxu0
      %v3106 = vadd.f32 0.0, %v3105
      %v3107 = vpop.f32.mrb[0].mxu0
      %3108 = vmatprep.mubr.bf16.mxu0 0
      %3109 = vmatmul.mubr.bf16.gmra.mrb[0].mxu0 %v3047
      %v3110 = vpop.f32.mrb[0].mxu0
      %v3111 = vadd.f32 0.0, %v3110
      %v3112 = vpop.f32.mrb[0].mxu0
      %v3113 = vpop.f32.mrb[0].mxu0
      %v3114 = vadd.f32 0.0, %v3113
      %v3115 = vpop.f32.mrb[0].mxu0
      %3116 = vdwg.mxu0
      %v3117 = vadd.f32 %v2998, %v3087
      %v3118 = vadd.f32 %v2999, %v3090
      %v3119 = vadd.f32 %v3000, %v3095
      %v3120 = vadd.f32 %v3001, %v3098
      %v3121 = vadd.f32 %v3002, %v3103
      %v3122 = vadd.f32 %v3003, %v3106
      %v3123 = vadd.f32 %v3004, %v3111
      %v3124 = vadd.f32 %v3005, %v3114
      %v3125 = vld [vmem:[%s3006] sm:$0xf]
      %v3126 = vld [vmem:[%s3006 + $0x4] sm:$0x1]
      %v3127 = vld [vmem:[%s3006 + $0x8] sm:$0xf]
      %v3128 = vld [vmem:[%s3006 + $0xc] sm:$0x1]
      %v3129 = vld [vmem:[%s3006 + $0x10] sm:$0xf]
      %v3130 = vld [vmem:[%s3006 + $0x14] sm:$0x1]
      %v3131 = vld [vmem:[%s3006 + $0x18] sm:$0xf]
      %v3132 = vld [vmem:[%s3006 + $0x1c] sm:$0x1]
      %v3133 = vld [vmem:[%s3006 + $0x20] sm:$0xf]
      %v3134 = vld [vmem:[%s3006 + $0x24] sm:$0x1]
      %v3135 = vld [vmem:[%s3006 + $0x28] sm:$0xf]
      %v3136 = vld [vmem:[%s3006 + $0x2c] sm:$0x1]
      %v3137 = vld [vmem:[%s3006 + $0x30] sm:$0xf]
      %v3138 = vld [vmem:[%s3006 + $0x34] sm:$0x1]
      %v3139 = vld [vmem:[%s3006 + $0x38] sm:$0xf]
      %v3140 = vld [vmem:[%s3006 + $0x3c] sm:$0x1]
      %v3142 = vshrl.u32 %v3125, 16
      %v3144 = vrot.slane %v3142, 4
      %v3145 = vshll.u32 %v3125, 16
      %v3147 = vrot.slane %v3145, 5
      %v3148 = vor.u32 %v3144, %v3147
      %v3149 = vrot.slane %v3148, 4
      %v3151 = vshll.u32 %v3126, 16
      %v3153 = vrot.slane %v3151, 5
      %v3154 = vsel %vm579, %v3149, %v3153
      %v3156 = vshrl.u32 %v3127, 16
      %v3158 = vrot.slane %v3156, 4
      %v3159 = vshll.u32 %v3127, 16
      %v3161 = vrot.slane %v3159, 5
      %v3162 = vor.u32 %v3158, %v3161
      %v3163 = vrot.slane %v3162, 4
      %v3165 = vshll.u32 %v3128, 16
      %v3167 = vrot.slane %v3165, 5
      %v3168 = vsel %vm579, %v3163, %v3167
      %v3170 = vshrl.u32 %v3129, 16
      %v3172 = vrot.slane %v3170, 4
      %v3173 = vshll.u32 %v3129, 16
      %v3175 = vrot.slane %v3173, 5
      %v3176 = vor.u32 %v3172, %v3175
      %v3177 = vrot.slane %v3176, 4
      %v3179 = vshll.u32 %v3130, 16
      %v3181 = vrot.slane %v3179, 5
      %v3182 = vsel %vm579, %v3177, %v3181
      %v3184 = vshrl.u32 %v3131, 16
      %v3186 = vrot.slane %v3184, 4
      %v3187 = vshll.u32 %v3131, 16
      %v3189 = vrot.slane %v3187, 5
      %v3190 = vor.u32 %v3186, %v3189
      %v3191 = vrot.slane %v3190, 4
      %v3193 = vshll.u32 %v3132, 16
      %v3195 = vrot.slane %v3193, 5
      %v3196 = vsel %vm579, %v3191, %v3195
      %v3198 = vshrl.u32 %v3133, 16
      %v3200 = vrot.slane %v3198, 4
      %v3201 = vshll.u32 %v3133, 16
      %v3203 = vrot.slane %v3201, 5
      %v3204 = vor.u32 %v3200, %v3203
      %v3205 = vrot.slane %v3204, 4
      %v3207 = vshll.u32 %v3134, 16
      %v3209 = vrot.slane %v3207, 5
      %v3210 = vsel %vm579, %v3205, %v3209
      %v3212 = vshrl.u32 %v3135, 16
      %v3214 = vrot.slane %v3212, 4
      %v3215 = vshll.u32 %v3135, 16
      %v3217 = vrot.slane %v3215, 5
      %v3218 = vor.u32 %v3214, %v3217
      %v3219 = vrot.slane %v3218, 4
      %v3221 = vshll.u32 %v3136, 16
      %v3223 = vrot.slane %v3221, 5
      %v3224 = vsel %vm579, %v3219, %v3223
      %v3226 = vshrl.u32 %v3137, 16
      %v3228 = vrot.slane %v3226, 4
      %v3229 = vshll.u32 %v3137, 16
      %v3231 = vrot.slane %v3229, 5
      %v3232 = vor.u32 %v3228, %v3231
      %v3233 = vrot.slane %v3232, 4
      %v3235 = vshll.u32 %v3138, 16
      %v3237 = vrot.slane %v3235, 5
      %v3238 = vsel %vm579, %v3233, %v3237
      %v3240 = vshrl.u32 %v3139, 16
      %v3242 = vrot.slane %v3240, 4
      %v3243 = vshll.u32 %v3139, 16
      %v3245 = vrot.slane %v3243, 5
      %v3246 = vor.u32 %v3242, %v3245
      %v3247 = vrot.slane %v3246, 4
      %v3249 = vshll.u32 %v3140, 16
      %v3251 = vrot.slane %v3249, 5
      %v3252 = vsel %vm579, %v3247, %v3251
      %s3253 = scalar_lea.vmem %s5, 28
      %v3254 = vld [vmem:[%s3253] sm:$0xf]
      %v3255 = vunpack.c.l.b16 %v3154
      %v3256 = vunpack.c.l.b16 %v3168
      %v3257 = vunpack.c.l.b16 %v3182
      %v3258 = vunpack.c.l.b16 %v3196
      %v3259 = vunpack.c.l.b16 %v3210
      %v3260 = vunpack.c.l.b16 %v3224
      %v3261 = vunpack.c.l.b16 %v3238
      %v3262 = vunpack.c.l.b16 %v3252
      %v3263 = vpack.c.b16 %v3256, %v3255
      %v3264 = vpack.c.b16 %v3258, %v3257
      %v3265 = vpack.c.b16 %v3260, %v3259
      %v3266 = vpack.c.b16 %v3262, %v3261
      %v3268 = vsel %vm1728, %v3263, 0
      %v3271 = vsel %vm1728, %v3264, 0
      %v3274 = vsel %vm1728, %v3265, 0
      %v3277 = vsel %vm1728, %v3266, 0
      %v3280 = vsel %vm2170, %v3254, 0
      %3282 = vmatprep.subr.bf16.mxu0 0
      %3283 = vmatpush1.bf16.msra.mxu0 %v3280
      %3284 = vmatprep.subr.bf16.mxu0 0
      %3285 = vmatpush1.bf16.msra.mxu0 0
      %3286 = vmatprep.subr.bf16.mxu0 0
      %3287 = vmatpush1.bf16.msra.mxu0 0
      %3288 = vmatprep.subr.bf16.mxu0 0
      %3289 = vmatpush1.bf16.msra.mxu0 0
      %3290 = vmatprep.subr.bf16.mxu0 0
      %3291 = vmatpush1.bf16.msra.mxu0 0
      %3292 = vmatprep.subr.bf16.mxu0 0
      %3293 = vmatpush1.bf16.msra.mxu0 0
      %3294 = vmatprep.subr.bf16.mxu0 0
      %3295 = vmatpush1.bf16.msra.mxu0 0
      %3296 = vmatprep.subr.bf16.mxu0 0
      %3297 = vmatpush1.bf16.msra.mxu0 0
      %3298 = vmatprep.subr.bf16.mxu0 0
      %3299 = vmatpush1.bf16.msra.mxu0 0
      %3300 = vmatprep.subr.bf16.mxu0 0
      %3301 = vmatpush1.bf16.msra.mxu0 0
      %3302 = vmatprep.subr.bf16.mxu0 0
      %3303 = vmatpush1.bf16.msra.mxu0 0
      %3304 = vmatprep.subr.bf16.mxu0 0
      %3305 = vmatpush1.bf16.msra.mxu0 0
      %3306 = vmatprep.subr.bf16.mxu0 0
      %3307 = vmatpush1.bf16.msra.mxu0 0
      %3308 = vmatprep.subr.bf16.mxu0 0
      %3309 = vmatpush1.bf16.msra.mxu0 0
      %3310 = vmatprep.subr.bf16.mxu0 0
      %3311 = vmatpush1.bf16.msra.mxu0 0
      %3312 = vmatprep.subr.bf16.mxu0 0
      %3313 = vmatpush1.bf16.msra.mxu0 0
      %3314 = vmatprep.mubr.bf16.mxu0 0
      %3315 = vmatmul.mubr.bf16.gmra.mrb[0].mxu0 %v3268
      %v3316 = vpop.f32.mrb[0].mxu0
      %v3317 = vadd.f32 0.0, %v3316
      %v3318 = vpop.f32.mrb[0].mxu0
      %v3319 = vpop.f32.mrb[0].mxu0
      %v3320 = vadd.f32 0.0, %v3319
      %v3321 = vpop.f32.mrb[0].mxu0
      %3322 = vmatprep.mubr.bf16.mxu0 0
      %3323 = vmatmul.mubr.bf16.gmra.mrb[0].mxu0 %v3271
      %v3324 = vpop.f32.mrb[0].mxu0
      %v3325 = vadd.f32 0.0, %v3324
      %v3326 = vpop.f32.mrb[0].mxu0
      %v3327 = vpop.f32.mrb[0].mxu0
      %v3328 = vadd.f32 0.0, %v3327
      %v3329 = vpop.f32.mrb[0].mxu0
      %3330 = vmatprep.mubr.bf16.mxu0 0
      %3331 = vmatmul.mubr.bf16.gmra.mrb[0].mxu0 %v3274
      %v3332 = vpop.f32.mrb[0].mxu0
      %v3333 = vadd.f32 0.0, %v3332
      %v3334 = vpop.f32.mrb[0].mxu0
      %v3335 = vpop.f32.mrb[0].mxu0
      %v3336 = vadd.f32 0.0, %v3335
      %v3337 = vpop.f32.mrb[0].mxu0
      %3338 = vmatprep.mubr.bf16.mxu0 0
      %3339 = vmatmul.mubr.bf16.gmra.mrb[0].mxu0 %v3277
      %v3340 = vpop.f32.mrb[0].mxu0
      %v3341 = vadd.f32 0.0, %v3340
      %v3342 = vpop.f32.mrb[0].mxu0
      %v3343 = vpop.f32.mrb[0].mxu0
      %v3344 = vadd.f32 0.0, %v3343
      %v3345 = vpop.f32.mrb[0].mxu0
      %3346 = vdwg.mxu0
      %v3347 = vadd.f32 %v3117, %v3317
      %v3348 = vadd.f32 %v3118, %v3320
      %v3349 = vadd.f32 %v3119, %v3325
      %v3350 = vadd.f32 %v3120, %v3328
      %v3351 = vadd.f32 %v3121, %v3333
      %v3352 = vadd.f32 %v3122, %v3336
      %v3353 = vadd.f32 %v3123, %v3341
      %v3354 = vadd.f32 %v3124, %v3344
      %v3355 = vld [vmem:[%s3006] sm:$0xe]
      %v3356 = vld [vmem:[%s3006 + $0x8] sm:$0xe]
      %v3357 = vld [vmem:[%s3006 + $0x10] sm:$0xe]
      %v3358 = vld [vmem:[%s3006 + $0x18] sm:$0xe]
      %v3359 = vld [vmem:[%s3006 + $0x20] sm:$0xe]
      %v3360 = vld [vmem:[%s3006 + $0x28] sm:$0xe]
      %v3361 = vld [vmem:[%s3006 + $0x30] sm:$0xe]
      %v3362 = vld [vmem:[%s3006 + $0x38] sm:$0xe]
      %v3379 = vrot.slane %v3355, 5
      %v3380 = vrot.slane %v3379, 4
      %v3381 = vrot.slane %v3126, 5
      %v3382 = vsel %vm2365, %v3380, %v3381
      %v3383 = vrot.slane %v3356, 5
      %v3384 = vrot.slane %v3383, 4
      %v3385 = vrot.slane %v3128, 5
      %v3386 = vsel %vm2365, %v3384, %v3385
      %v3387 = vrot.slane %v3357, 5
      %v3388 = vrot.slane %v3387, 4
      %v3389 = vrot.slane %v3130, 5
      %v3390 = vsel %vm2365, %v3388, %v3389
      %v3391 = vrot.slane %v3358, 5
      %v3392 = vrot.slane %v3391, 4
      %v3393 = vrot.slane %v3132, 5
      %v3394 = vsel %vm2365, %v3392, %v3393
      %v3395 = vrot.slane %v3359, 5
      %v3396 = vrot.slane %v3395, 4
      %v3397 = vrot.slane %v3134, 5
      %v3398 = vsel %vm2365, %v3396, %v3397
      %v3399 = vrot.slane %v3360, 5
      %v3400 = vrot.slane %v3399, 4
      %v3401 = vrot.slane %v3136, 5
      %v3402 = vsel %vm2365, %v3400, %v3401
      %v3403 = vrot.slane %v3361, 5
      %v3404 = vrot.slane %v3403, 4
      %v3405 = vrot.slane %v3138, 5
      %v3406 = vsel %vm2365, %v3404, %v3405
      %v3407 = vrot.slane %v3362, 5
      %v3408 = vrot.slane %v3407, 4
      %v3409 = vrot.slane %v3140, 5
      %v3410 = vsel %vm2365, %v3408, %v3409
      %s3411 = scalar_lea.vmem %s5, 32
      %v3412 = vld [vmem:[%s3411] sm:$0xf]
      %v3413 = vunpack.c.l.b16 %v3382
      %v3414 = vunpack.c.l.b16 %v3386
      %v3415 = vunpack.c.l.b16 %v3390
      %v3416 = vunpack.c.l.b16 %v3394
      %v3417 = vunpack.c.l.b16 %v3398
      %v3418 = vunpack.c.l.b16 %v3402
      %v3419 = vunpack.c.l.b16 %v3406
      %v3420 = vunpack.c.l.b16 %v3410
      %v3421 = vpack.c.b16 %v3414, %v3413
      %v3422 = vpack.c.b16 %v3416, %v3415
      %v3423 = vpack.c.b16 %v3418, %v3417
      %v3424 = vpack.c.b16 %v3420, %v3419
      %v3426 = vsel %vm1728, %v3421, 0
      %v3429 = vsel %vm1728, %v3422, 0
      %v3432 = vsel %vm1728, %v3423, 0
      %v3435 = vsel %vm1728, %v3424, 0
      %v3438 = vsel %vm2170, %v3412, 0
      %3440 = vmatprep.subr.bf16.mxu0 0
      %3441 = vmatpush1.bf16.msra.mxu0 %v3438
      %3442 = vmatprep.subr.bf16.mxu0 0
      %3443 = vmatpush1.bf16.msra.mxu0 0
      %3444 = vmatprep.subr.bf16.mxu0 0
      %3445 = vmatpush1.bf16.msra.mxu0 0
      %3446 = vmatprep.subr.bf16.mxu0 0
      %3447 = vmatpush1.bf16.msra.mxu0 0
      %3448 = vmatprep.subr.bf16.mxu0 0
      %3449 = vmatpush1.bf16.msra.mxu0 0
      %3450 = vmatprep.subr.bf16.mxu0 0
      %3451 = vmatpush1.bf16.msra.mxu0 0
      %3452 = vmatprep.subr.bf16.mxu0 0
      %3453 = vmatpush1.bf16.msra.mxu0 0
      %3454 = vmatprep.subr.bf16.mxu0 0
      %3455 = vmatpush1.bf16.msra.mxu0 0
      %3456 = vmatprep.subr.bf16.mxu0 0
      %3457 = vmatpush1.bf16.msra.mxu0 0
      %3458 = vmatprep.subr.bf16.mxu0 0
      %3459 = vmatpush1.bf16.msra.mxu0 0
      %3460 = vmatprep.subr.bf16.mxu0 0
      %3461 = vmatpush1.bf16.msra.mxu0 0
      %3462 = vmatprep.subr.bf16.mxu0 0
      %3463 = vmatpush1.bf16.msra.mxu0 0
      %3464 = vmatprep.subr.bf16.mxu0 0
      %3465 = vmatpush1.bf16.msra.mxu0 0
      %3466 = vmatprep.subr.bf16.mxu0 0
      %3467 = vmatpush1.bf16.msra.mxu0 0
      %3468 = vmatprep.subr.bf16.mxu0 0
      %3469 = vmatpush1.bf16.msra.mxu0 0
      %3470 = vmatprep.subr.bf16.mxu0 0
      %3471 = vmatpush1.bf16.msra.mxu0 0
      %3472 = vmatprep.mubr.bf16.mxu0 0
      %3473 = vmatmul.mubr.bf16.gmra.mrb[0].mxu0 %v3426
      %v3474 = vpop.f32.mrb[0].mxu0
      %v3475 = vadd.f32 0.0, %v3474
      %v3476 = vpop.f32.mrb[0].mxu0
      %v3477 = vpop.f32.mrb[0].mxu0
      %v3478 = vadd.f32 0.0, %v3477
      %v3479 = vpop.f32.mrb[0].mxu0
      %3480 = vmatprep.mubr.bf16.mxu0 0
      %3481 = vmatmul.mubr.bf16.gmra.mrb[0].mxu0 %v3429
      %v3482 = vpop.f32.mrb[0].mxu0
      %v3483 = vadd.f32 0.0, %v3482
      %v3484 = vpop.f32.mrb[0].mxu0
      %v3485 = vpop.f32.mrb[0].mxu0
      %v3486 = vadd.f32 0.0, %v3485
      %v3487 = vpop.f32.mrb[0].mxu0
      %3488 = vmatprep.mubr.bf16.mxu0 0
      %3489 = vmatmul.mubr.bf16.gmra.mrb[0].mxu0 %v3432
      %v3490 = vpop.f32.mrb[0].mxu0
      %v3491 = vadd.f32 0.0, %v3490
      %v3492 = vpop.f32.mrb[0].mxu0
      %v3493 = vpop.f32.mrb[0].mxu0
      %v3494 = vadd.f32 0.0, %v3493
      %v3495 = vpop.f32.mrb[0].mxu0
      %3496 = vmatprep.mubr.bf16.mxu0 0
      %3497 = vmatmul.mubr.bf16.gmra.mrb[0].mxu0 %v3435
      %v3498 = vpop.f32.mrb[0].mxu0
      %v3499 = vadd.f32 0.0, %v3498
      %v3500 = vpop.f32.mrb[0].mxu0
      %v3501 = vpop.f32.mrb[0].mxu0
      %v3502 = vadd.f32 0.0, %v3501
      %v3503 = vpop.f32.mrb[0].mxu0
      %3504 = vdwg.mxu0
      %v3505 = vadd.f32 %v3347, %v3475
      %v3506 = vadd.f32 %v3348, %v3478
      %v3507 = vadd.f32 %v3349, %v3483
      %v3508 = vadd.f32 %v3350, %v3486
      %v3509 = vadd.f32 %v3351, %v3491
      %v3510 = vadd.f32 %v3352, %v3494
      %v3511 = vadd.f32 %v3353, %v3499
      %v3512 = vadd.f32 %v3354, %v3502
      %v3513 = vsel %vm1728, %v3505, 0.0
      %v3514 = vsel %vm1728, %v3506, 0.0
      %v3515 = vadd.f32 %v3513, %v3514
      %v3516 = vsel %vm1728, %v3507, 0.0
      %v3517 = vadd.f32 %v3515, %v3516
      %v3518 = vsel %vm1728, %v3508, 0.0
      %v3519 = vadd.f32 %v3517, %v3518
      %v3520 = vsel %vm1728, %v3509, 0.0
      %v3521 = vadd.f32 %v3519, %v3520
      %v3522 = vsel %vm1728, %v3510, 0.0
      %v3523 = vadd.f32 %v3521, %v3522
      %v3524 = vsel %vm1728, %v3511, 0.0
      %v3525 = vadd.f32 %v3523, %v3524
      %v3526 = vsel %vm1728, %v3512, 0.0
      %v3527 = vadd.f32 %v3525, %v3526
      %v3528 = vrot.slane %v3527, 4
      %v3529 = vadd.f32 %v3527, %v3528
      %v3530 = vrot.slane %v3529, 2
      %v3531 = vadd.f32 %v3529, %v3530
      %v3532 = vrot.slane %v3531, 1
      %v3533 = vadd.f32 %v3531, %v3532
      %v3534 = vmul.f32 %v3505, %v3505
      %v3535 = vmul.f32 %v3506, %v3506
      %v3536 = vmul.f32 %v3507, %v3507
      %v3537 = vmul.f32 %v3508, %v3508
      %v3538 = vmul.f32 %v3509, %v3509
      %v3539 = vmul.f32 %v3510, %v3510
      %v3540 = vmul.f32 %v3511, %v3511
      %v3541 = vmul.f32 %v3512, %v3512
      %v3542 = vsel %vm1728, %v3534, 0.0
      %v3543 = vsel %vm1728, %v3535, 0.0
      %v3544 = vadd.f32 %v3542, %v3543
      %v3545 = vsel %vm1728, %v3536, 0.0
      %v3546 = vadd.f32 %v3544, %v3545
      %v3547 = vsel %vm1728, %v3537, 0.0
      %v3548 = vadd.f32 %v3546, %v3547
      %v3549 = vsel %vm1728, %v3538, 0.0
      %v3550 = vadd.f32 %v3548, %v3549
      %v3551 = vsel %vm1728, %v3539, 0.0
      %v3552 = vadd.f32 %v3550, %v3551
      %v3553 = vsel %vm1728, %v3540, 0.0
      %v3554 = vadd.f32 %v3552, %v3553
      %v3555 = vsel %vm1728, %v3541, 0.0
      %v3556 = vadd.f32 %v3554, %v3555
      %v3557 = vrot.slane %v3556, 4
      %v3558 = vadd.f32 %v3556, %v3557
      %v3559 = vrot.slane %v3558, 2
      %v3560 = vadd.f32 %v3558, %v3559
      %v3561 = vrot.slane %v3560, 1
      %v3562 = vadd.f32 %v3560, %v3561
      %v3563 = vmul.f32 %v3533, 0.015625
      %v3564 = vmul.f32 %v3562, 0.015625
      %v3565 = vmul.f32 %v3563, %v3563
      %v3566 = vsub.f32 %v3564, %v3565
      %v3567 = vmax.f32 %v3566, 0.0
      %v3568 = vsub.f32 %v3505, %v3563
      %v3569 = vsub.f32 %v3506, %v3563
      %v3570 = vsub.f32 %v3507, %v3563
      %v3571 = vsub.f32 %v3508, %v3563
      %v3572 = vsub.f32 %v3509, %v3563
      %v3573 = vsub.f32 %v3510, %v3563
      %v3574 = vsub.f32 %v3511, %v3563
      %v3575 = vsub.f32 %v3512, %v3563
      %v3576 = vadd.f32 %v3567, 1e-05
      %v3577 = vrsqrt.pop %v3576
      %v3578 = vmul.f32 %v3568, %v3577
      %v3579 = vmul.f32 %v3569, %v3577
      %v3580 = vmul.f32 %v3570, %v3577
      %v3581 = vmul.f32 %v3571, %v3577
      %v3582 = vmul.f32 %v3572, %v3577
      %v3583 = vmul.f32 %v3573, %v3577
      %v3584 = vmul.f32 %v3574, %v3577
      %v3585 = vmul.f32 %v3575, %v3577
      %v3586 = vld [vmem:[%s333] sm:$0xf]
      %v3587 = vld [vmem:[%s333 + $0x8] sm:$0xf]
      %v3588 = vld [vmem:[%s333 + $0x10] sm:$0xf]
      %v3589 = vld [vmem:[%s333 + $0x18] sm:$0xf]
      %v3590 = vld [vmem:[%s333 + $0x20] sm:$0xf]
      %v3591 = vld [vmem:[%s333 + $0x28] sm:$0xf]
      %v3592 = vld [vmem:[%s333 + $0x30] sm:$0xf]
      %v3593 = vld [vmem:[%s333 + $0x38] sm:$0xf]
      %v3594 = vld [vmem:[%s6] sm:$0x3]
      %v3603 = vunpack.c.l.b16 %v3586
      %v3604 = vunpack.c.l.b16 %v3587
      %v3605 = vunpack.c.l.b16 %v3588
      %v3606 = vunpack.c.l.b16 %v3589
      %v3607 = vunpack.c.l.b16 %v3590
      %v3608 = vunpack.c.l.b16 %v3591
      %v3609 = vunpack.c.l.b16 %v3592
      %v3610 = vunpack.c.l.b16 %v3593
      %v3611 = vpack.c.b16 %v3604, %v3603
      %v3612 = vpack.c.b16 %v3606, %v3605
      %v3613 = vpack.c.b16 %v3608, %v3607
      %v3614 = vpack.c.b16 %v3610, %v3609
      %v3616 = vsel %vm379, %v3611, 0
      %v3619 = vsel %vm379, %v3612, 0
      %v3622 = vsel %vm379, %v3613, 0
      %v3625 = vsel %vm379, %v3614, 0
      %v3628 = vsel %vm392, %v3594, 0
      %3630 = vmatprep.subr.bf16.mxu0 0
      %3631 = vmatpush1.bf16.msra.mxu0 %v3628
      %3632 = vmatprep.subr.bf16.mxu0 0
      %3633 = vmatpush1.bf16.msra.mxu0 0
      %3634 = vmatprep.subr.bf16.mxu0 0
      %3635 = vmatpush1.bf16.msra.mxu0 0
      %3636 = vmatprep.subr.bf16.mxu0 0
      %3637 = vmatpush1.bf16.msra.mxu0 0
      %3638 = vmatprep.subr.bf16.mxu0 0
      %3639 = vmatpush1.bf16.msra.mxu0 0
      %3640 = vmatprep.subr.bf16.mxu0 0
      %3641 = vmatpush1.bf16.msra.mxu0 0
      %3642 = vmatprep.subr.bf16.mxu0 0
      %3643 = vmatpush1.bf16.msra.mxu0 0
      %3644 = vmatprep.subr.bf16.mxu0 0
      %3645 = vmatpush1.bf16.msra.mxu0 0
      %3646 = vmatprep.subr.bf16.mxu0 0
      %3647 = vmatpush1.bf16.msra.mxu0 0
      %3648 = vmatprep.subr.bf16.mxu0 0
      %3649 = vmatpush1.bf16.msra.mxu0 0
      %3650 = vmatprep.subr.bf16.mxu0 0
      %3651 = vmatpush1.bf16.msra.mxu0 0
      %3652 = vmatprep.subr.bf16.mxu0 0
      %3653 = vmatpush1.bf16.msra.mxu0 0
      %3654 = vmatprep.subr.bf16.mxu0 0
      %3655 = vmatpush1.bf16.msra.mxu0 0
      %3656 = vmatprep.subr.bf16.mxu0 0
      %3657 = vmatpush1.bf16.msra.mxu0 0
      %3658 = vmatprep.subr.bf16.mxu0 0
      %3659 = vmatpush1.bf16.msra.mxu0 0
      %3660 = vmatprep.subr.bf16.mxu0 0
      %3661 = vmatpush1.bf16.msra.mxu0 0
      %3662 = vmatprep.mubr.bf16.mxu0 0
      %3663 = vmatmul.mubr.bf16.gmra.mrb[0].mxu0 %v3616
      %v3664 = vpop.f32.mrb[0].mxu0
      %v3665 = vadd.f32 0.0, %v3664
      %v3666 = vpop.f32.mrb[0].mxu0
      %v3667 = vpop.f32.mrb[0].mxu0
      %v3668 = vadd.f32 0.0, %v3667
      %v3669 = vpop.f32.mrb[0].mxu0
      %3670 = vmatprep.mubr.bf16.mxu0 0
      %3671 = vmatmul.mubr.bf16.gmra.mrb[0].mxu0 %v3619
      %v3672 = vpop.f32.mrb[0].mxu0
      %v3673 = vadd.f32 0.0, %v3672
      %v3674 = vpop.f32.mrb[0].mxu0
      %v3675 = vpop.f32.mrb[0].mxu0
      %v3676 = vadd.f32 0.0, %v3675
      %v3677 = vpop.f32.mrb[0].mxu0
      %3678 = vmatprep.mubr.bf16.mxu0 0
      %3679 = vmatmul.mubr.bf16.gmra.mrb[0].mxu0 %v3622
      %v3680 = vpop.f32.mrb[0].mxu0
      %v3681 = vadd.f32 0.0, %v3680
      %v3682 = vpop.f32.mrb[0].mxu0
      %v3683 = vpop.f32.mrb[0].mxu0
      %v3684 = vadd.f32 0.0, %v3683
      %v3685 = vpop.f32.mrb[0].mxu0
      %3686 = vmatprep.mubr.bf16.mxu0 0
      %3687 = vmatmul.mubr.bf16.gmra.mrb[0].mxu0 %v3625
      %v3688 = vpop.f32.mrb[0].mxu0
      %v3689 = vadd.f32 0.0, %v3688
      %v3690 = vpop.f32.mrb[0].mxu0
      %v3691 = vpop.f32.mrb[0].mxu0
      %v3692 = vadd.f32 0.0, %v3691
      %v3693 = vpop.f32.mrb[0].mxu0
      %3694 = vdwg.mxu0
      %v3695 = vsel %vm1728, %v3665, 0.0
      %v3696 = vsel %vm1728, %v3668, 0.0
      %v3697 = vadd.f32 %v3695, %v3696
      %v3698 = vsel %vm1728, %v3673, 0.0
      %v3699 = vadd.f32 %v3697, %v3698
      %v3700 = vsel %vm1728, %v3676, 0.0
      %v3701 = vadd.f32 %v3699, %v3700
      %v3702 = vsel %vm1728, %v3681, 0.0
      %v3703 = vadd.f32 %v3701, %v3702
      %v3704 = vsel %vm1728, %v3684, 0.0
      %v3705 = vadd.f32 %v3703, %v3704
      %v3706 = vsel %vm1728, %v3689, 0.0
      %v3707 = vadd.f32 %v3705, %v3706
      %v3708 = vsel %vm1728, %v3692, 0.0
      %v3709 = vadd.f32 %v3707, %v3708
      %v3710 = vrot.slane %v3709, 4
      %v3711 = vadd.f32 %v3709, %v3710
      %v3712 = vrot.slane %v3711, 2
      %v3713 = vadd.f32 %v3711, %v3712
      %v3714 = vrot.slane %v3713, 1
      %v3715 = vadd.f32 %v3713, %v3714
      %v3716 = vmul.f32 %v3665, %v3665
      %v3717 = vmul.f32 %v3668, %v3668
      %v3718 = vmul.f32 %v3673, %v3673
      %v3719 = vmul.f32 %v3676, %v3676
      %v3720 = vmul.f32 %v3681, %v3681
      %v3721 = vmul.f32 %v3684, %v3684
      %v3722 = vmul.f32 %v3689, %v3689
      %v3723 = vmul.f32 %v3692, %v3692
      %v3724 = vsel %vm1728, %v3716, 0.0
      %v3725 = vsel %vm1728, %v3717, 0.0
      %v3726 = vadd.f32 %v3724, %v3725
      %v3727 = vsel %vm1728, %v3718, 0.0
      %v3728 = vadd.f32 %v3726, %v3727
      %v3729 = vsel %vm1728, %v3719, 0.0
      %v3730 = vadd.f32 %v3728, %v3729
      %v3731 = vsel %vm1728, %v3720, 0.0
      %v3732 = vadd.f32 %v3730, %v3731
      %v3733 = vsel %vm1728, %v3721, 0.0
      %v3734 = vadd.f32 %v3732, %v3733
      %v3735 = vsel %vm1728, %v3722, 0.0
      %v3736 = vadd.f32 %v3734, %v3735
      %v3737 = vsel %vm1728, %v3723, 0.0
      %v3738 = vadd.f32 %v3736, %v3737
      %v3739 = vrot.slane %v3738, 4
      %v3740 = vadd.f32 %v3738, %v3739
      %v3741 = vrot.slane %v3740, 2
      %v3742 = vadd.f32 %v3740, %v3741
      %v3743 = vrot.slane %v3742, 1
      %v3744 = vadd.f32 %v3742, %v3743
      %v3745 = vmul.f32 %v3715, 0.015625
      %v3746 = vmul.f32 %v3744, 0.015625
      %v3747 = vmul.f32 %v3745, %v3745
      %v3748 = vsub.f32 %v3746, %v3747
      %v3749 = vmax.f32 %v3748, 0.0
      %v3750 = vsub.f32 %v3665, %v3745
      %v3751 = vsub.f32 %v3668, %v3745
      %v3752 = vsub.f32 %v3673, %v3745
      %v3753 = vsub.f32 %v3676, %v3745
      %v3754 = vsub.f32 %v3681, %v3745
      %v3755 = vsub.f32 %v3684, %v3745
      %v3756 = vsub.f32 %v3689, %v3745
      %v3757 = vsub.f32 %v3692, %v3745
      %v3758 = vadd.f32 %v3749, 1e-05
      %v3759 = vrsqrt.pop %v3758
      %v3760 = vmul.f32 %v3750, %v3759
      %v3761 = vmul.f32 %v3751, %v3759
      %v3762 = vmul.f32 %v3752, %v3759
      %v3763 = vmul.f32 %v3753, %v3759
      %v3764 = vmul.f32 %v3754, %v3759
      %v3765 = vmul.f32 %v3755, %v3759
      %v3766 = vmul.f32 %v3756, %v3759
      %v3767 = vmul.f32 %v3757, %v3759
      %v3768 = vadd.f32 %v3578, %v3760
      %v3769 = vadd.f32 %v3579, %v3761
      %v3770 = vadd.f32 %v3580, %v3762
      %v3771 = vadd.f32 %v3581, %v3763
      %v3772 = vadd.f32 %v3582, %v3764
      %v3773 = vadd.f32 %v3583, %v3765
      %v3774 = vadd.f32 %v3584, %v3766
      %v3775 = vadd.f32 %v3585, %v3767
      %vm3776 = vcmp.ge.f32.partialorder %v3768, 0.0
      %vm3777 = vcmp.ge.f32.partialorder %v3769, 0.0
      %vm3778 = vcmp.ge.f32.partialorder %v3770, 0.0
      %vm3779 = vcmp.ge.f32.partialorder %v3771, 0.0
      %vm3780 = vcmp.ge.f32.partialorder %v3772, 0.0
      %vm3781 = vcmp.ge.f32.partialorder %v3773, 0.0
      %vm3782 = vcmp.ge.f32.partialorder %v3774, 0.0
      %vm3783 = vcmp.ge.f32.partialorder %v3775, 0.0
      %v3784 = vmul.f32 %v3768, 0.01
      %v3785 = vmul.f32 %v3769, 0.01
      %v3786 = vmul.f32 %v3770, 0.01
      %v3787 = vmul.f32 %v3771, 0.01
      %v3788 = vmul.f32 %v3772, 0.01
      %v3789 = vmul.f32 %v3773, 0.01
      %v3790 = vmul.f32 %v3774, 0.01
      %v3791 = vmul.f32 %v3775, 0.01
      %v3792 = vsel %vm3776, %v3768, %v3784
      %v3793 = vsel %vm3777, %v3769, %v3785
      %v3794 = vsel %vm3778, %v3770, %v3786
      %v3795 = vsel %vm3779, %v3771, %v3787
      %v3796 = vsel %vm3780, %v3772, %v3788
      %v3797 = vsel %vm3781, %v3773, %v3789
      %v3798 = vsel %vm3782, %v3774, %v3790
      %v3799 = vsel %vm3783, %v3775, %v3791
      %3800 = vst.msk [vmem:[%s338] sm:$0xff] %vm1728, %v3792
      %3801 = vst.msk [vmem:[%s338 + $0x8] sm:$0xff] %vm1728, %v3793
      %3802 = vst.msk [vmem:[%s338 + $0x10] sm:$0xff] %vm1728, %v3794
      %3803 = vst.msk [vmem:[%s338 + $0x18] sm:$0xff] %vm1728, %v3795
      %3804 = vst.msk [vmem:[%s338 + $0x20] sm:$0xff] %vm1728, %v3796
      %3805 = vst.msk [vmem:[%s338 + $0x28] sm:$0xff] %vm1728, %v3797
      %3806 = vst.msk [vmem:[%s338 + $0x30] sm:$0xff] %vm1728, %v3798
      %3807 = vst.msk [vmem:[%s338 + $0x38] sm:$0xff] %vm1728, %v3799
      %p3808 = scmp.lt.s32.totalorder %s18, 1
      %s3809 = scalar_select %p3808, %s18, 1
      %s3810 = smul.addr %s3809, 8
      %s3811 = smul.addr %s3810, 8
      %s3812 = scalar_lea.vmem %s7, %s3811
      // Predicated region
      $region49: #{encoder_residual_layer.1} parent=47 // pred_check
        %p3813 = pneg %p203
      $region50: #{encoder_residual_layer.1} parent=47 // pred_check_branch
        %3815 = sbr.rel (%p3813) target = $region52
      $region51: #{encoder_residual_layer.1} parent=47 // pred_region
        _
      $region52: #{encoder_residual_layer.1} parent=47 // pred_fallthru
        _
    $region48: #{encoder_residual_layer.1} parent=5 // pred_fallthru
      _
    %p3816 = scmp.le.s32.totalorder 2, %s13
    // Predicated region
    $region53: #{encoder_residual_layer.1} parent=5 // pred_check
      %p3817 = pneg %p3816
    $region54: #{encoder_residual_layer.1} parent=5 // pred_check_branch
      %3819 = sbr.rel (%p3817) target = $region56
    $region55: #{encoder_residual_layer.1} parent=5 // pred_region
      %s3820 = ssub.s32 %s13, 2
      // Predicated region
      $region57: #{encoder_residual_layer.1} parent=55 // pred_check
        %p3821 = pneg %p209
      $region58: #{encoder_residual_layer.1} parent=55 // pred_check_branch
        %3823 = sbr.rel (%p3821) target = $region60
      $region59: #{encoder_residual_layer.1} parent=55 // pred_region
        %p3824 = scmp.lt.s32.totalorder %s19, 1
        %s3825 = scalar_select %p3824, %s19, 1
        %s3826 = smul.addr %s3825, 8
        %s3827 = smul.addr %s3826, 8
        %s3828 = scalar_lea.vmem %s7, %s3827
      $region60: #{encoder_residual_layer.1} parent=55 // pred_fallthru
        _
    $region56: #{encoder_residual_layer.1} parent=5 // pred_fallthru
      _
  $region6: #{encoder_residual_layer.1} parent=0 // loop_footer
    %s17 = sadd.s32 1, %s13
  $region7: #{encoder_residual_layer.1} parent=0 // loop_footer_branch
    %12 = sbr.rel target = $region3
  $region8: #{encoder_residual_layer.1} parent=0 // loop_exit
    _

</llo_original>
